<compile_context>
chip_gen: v6e
topology: v6e:2x2x1
jax: 0.10.0
libtpu: 0.0.40
codegen_flags: <defaults>
</compile_context>

<pallas_src>
import functools

import jax
import jax.numpy as jnp
from jax import lax
from jax.experimental import pallas as pl
from jax.experimental.pallas import tpu as pltpu

VMEM = pltpu.MemorySpace.VMEM


def _round_up(x, m):
    return ((x + m - 1) // m) * m


# ----------------------------- fused network kernel -------------------------
def _bilstm_layer(x_flat, wih_ref, whh_ref, b_ref, *, t_len, batch, hidden):
    """One bidirectional LSTM layer; time loop statically unrolled.

    Gate-major packing (per gate block of width 2H, gate order i, f, g, o):
      columns [g*2H     : g*2H + H ]  -> forward direction
      columns [g*2H + H : (g+1)*2H]   -> backward direction

    x_flat : [T*B, Din] value, rows in time-major order (row = t*B + b)
    wih_ref: [Din, 8H]
    whh_ref: [2H, 8H]   rows 0:H feed the fw halves, rows H:2H the bw halves
    b_ref  : [1, 8H]    (b_ih + b_hh)
    returns: [T*B, 2H]  value, rows time-major, columns (h_fw | h_bw)
    """
    h2 = 2 * hidden

    # Hoisted input projection: one MXU matmul for all steps & both directions,
    # bias broadcast added once (not per iteration).
    gx = (jnp.dot(x_flat, wih_ref[...], preferred_element_type=jnp.float32)
          + b_ref[...])                                           # [T*B, 8H]
    whh = whh_ref[...]                                            # [2H, 8H]

    # Lane masks: True on forward-direction lanes.
    lane8 = lax.broadcasted_iota(jnp.int32, (batch, 8 * hidden), 1)
    fw_mask_gates = (lane8 % h2) < hidden                         # [B, 8H]
    lane2 = lax.broadcasted_iota(jnp.int32, (batch, h2), 1)
    fw_mask_h = lane2 < hidden                                    # [B, 2H]

    h = jnp.zeros((batch, h2), jnp.float32)                       # [h_fw | h_bw]
    c = jnp.zeros((batch, h2), jnp.float32)                       # [c_fw | c_bw]

    h_steps = []
    for t in range(t_len):                                        # static unroll
        rt = t_len - 1 - t
        # Single recurrent matmul for both directions.
        rec = jnp.dot(h, whh, preferred_element_type=jnp.float32)  # [B, 8H]
        gx_t = gx[t * batch:(t + 1) * batch, :]                    # fw rows (time t)
        gx_r = gx[rt * batch:(rt + 1) * batch, :]                  # bw rows (time rt)
        gates = jnp.where(fw_mask_gates, gx_t, gx_r) + rec         # [B, 8H]

        i_f = jax.nn.sigmoid(gates[:, 0:2 * h2])                   # i|f, [B, 4H]
        g = jnp.tanh(gates[:, 2 * h2:3 * h2])                      # [B, 2H]
        o = jax.nn.sigmoid(gates[:, 3 * h2:4 * h2])                # [B, 2H]

        c = i_f[:, h2:2 * h2] * c + i_f[:, 0:h2] * g
        h = o * jnp.tanh(c)                 # [B, 2H] = [h_fw(t) | h_bw(rt)]
        h_steps.append(h)

    # Layer output: row block for original time t is [h_fw(t) | h_bw(t)].
    # h_bw(t) was produced at loop step T-1-t; merge the halves with a
    # lane-select (no lane-shift concatenation, no scratch stores).
    rows = [jnp.where(fw_mask_h, h_steps[t], h_steps[t_len - 1 - t])
            for t in range(t_len)]
    return jnp.concatenate(rows, axis=0)                           # [T*B, 2H]


def net_kernel(*refs, t_len, batch, hidden, num_layers):
    n_in = 2 + 3 * num_layers + 2
    ids_ref, table_ref = refs[0], refs[1]
    layer_refs = refs[2:2 + 3 * num_layers]
    linw_ref = refs[2 + 3 * num_layers]
    linb_ref = refs[3 + 3 * num_layers]
    out_ref = refs[n_in]

    n = t_len * batch
    vpad = table_ref.shape[0]

    # ---- Embedding as a one-hot MXU matmul (no per-row gather) ----
    # Vocab padded to a multiple of 128 -> lane-dense one-hot / full MXU K tile.
    ids = ids_ref[...]                                             # [N, 1] int32
    iota = lax.broadcasted_iota(jnp.int32, (n, vpad), 1)
    onehot = (iota == ids).astype(jnp.float32)                     # [N, Vpad]
    x = jnp.dot(onehot, table_ref[...],
                preferred_element_type=jnp.float32)                # [N, E]

    # ---- Bi-LSTM layers (outputs stay register/value resident) ----
    for layer in range(num_layers):
        wih_ref, whh_ref, b_ref = layer_refs[3 * layer:3 * layer + 3]
        x = _bilstm_layer(x, wih_ref, whh_ref, b_ref,
                          t_len=t_len, batch=batch, hidden=hidden)
        # TODO(synk): nn.LSTM inter-layer dropout=0.5 only applies in training
        # mode; this inference forward omits it.

    # ---- Final linear, fused; output columns padded to 128 (lane-dense store) ----
    out_ref[...] = (jnp.dot(x, linw_ref[...],
                            preferred_element_type=jnp.float32) + linb_ref[...])


# ----------------------------- parameters ----------------------------------
def init_params(key, vocab, embed, hidden, num_layers, out_size):
    params = {}
    key, k_embed = jax.random.split(key)
    # args.use_embedding=False path: freshly initialized nn.Embedding(wordNum, EmbedSize)
    emb = 0.1 * jax.random.normal(k_embed, (vocab, embed), jnp.float32)
    params["embedding"] = emb

    scale = 1.0 / jnp.sqrt(hidden)
    layers = []
    for layer in range(num_layers):
        din = embed if layer == 0 else 2 * hidden
        dirs = []
        for _ in range(2):  # forward / backward direction
            key, k1, k2, k3, k4 = jax.random.split(key, 5)
            w_ih = jax.random.uniform(k1, (din, 4 * hidden), jnp.float32, -scale, scale)
            w_hh = jax.random.uniform(k2, (hidden, 4 * hidden), jnp.float32, -scale, scale)
            b_ih = jax.random.uniform(k3, (4 * hidden,), jnp.float32, -scale, scale)
            b_hh = jax.random.uniform(k4, (4 * hidden,), jnp.float32, -scale, scale)
            dirs.append((w_ih, w_hh, (b_ih + b_hh).reshape(1, 4 * hidden)))
        layers.append(tuple(dirs))
    params["lstm"] = layers

    lin_scale = 1.0 / jnp.sqrt(2 * hidden)
    key, kw, kb = jax.random.split(key, 3)
    lin_w = jax.random.uniform(kw, (2 * hidden, out_size), jnp.float32,
                               -lin_scale, lin_scale)
    lin_b = jax.random.uniform(kb, (1, out_size), jnp.float32,
                               -lin_scale, lin_scale)
    params["lin_w"] = lin_w
    params["lin_b"] = lin_b

    # ---- pack weights once for the fused kernel ----
    vpad = _round_up(vocab, 128)                      # lane-dense one-hot matmul
    table_pad = jnp.zeros((vpad, embed), jnp.float32).at[:vocab].set(emb)

    def pack_layer(fw, bw):
        """Gate-major packing: columns (i_f|i_b)(f_f|f_b)(g_f|g_b)(o_f|o_b)."""
        w_ih_f, w_hh_f, b_f = fw
        w_ih_b, w_hh_b, b_b = bw
        h = w_hh_f.shape[0]
        din = w_ih_f.shape[0]
        wih = jnp.zeros((din, 8 * h), jnp.float32)
        whh = jnp.zeros((2 * h, 8 * h), jnp.float32)
        b = jnp.zeros((1, 8 * h), jnp.float32)
        for g in range(4):
            src = slice(g * h, (g + 1) * h)
            fw_dst = slice(g * 2 * h, g * 2 * h + h)
            bw_dst = slice(g * 2 * h + h, (g + 1) * 2 * h)
            wih = wih.at[:, fw_dst].set(w_ih_f[:, src])
            wih = wih.at[:, bw_dst].set(w_ih_b[:, src])
            whh = whh.at[0:h, fw_dst].set(w_hh_f[:, src])       # fw half reads h_fw
            whh = whh.at[h:2 * h, bw_dst].set(w_hh_b[:, src])   # bw half reads h_bw
            b = b.at[:, fw_dst].set(b_f[:, src])
            b = b.at[:, bw_dst].set(b_b[:, src])
        return (wih, whh, b)

    out_pad = _round_up(out_size, 128)                # lane-dense output store
    lin_w_pad = jnp.zeros((2 * hidden, out_pad), jnp.float32).at[:, :out_size].set(lin_w)
    lin_b_pad = jnp.zeros((1, out_pad), jnp.float32).at[:, :out_size].set(lin_b)

    params["kernel"] = dict(
        hidden=hidden,
        out_size=out_size,
        table=table_pad,
        layers=[pack_layer(*layers[l]) for l in range(num_layers)],
        lin_w=lin_w_pad,
        lin_b=lin_b_pad,
    )
    return params


# ----------------------------- forward (single pallas_call) -----------------
def net_forward(params, ids):
    kp = params["kernel"]
    b, t = ids.shape
    hidden = kp["hidden"]
    num_layers = len(kp["layers"])
    out_size = kp["out_size"]
    out_pad = kp["lin_w"].shape[1]
    n = b * t

    ids_tm = ids.T.reshape(n, 1).astype(jnp.int32)     # time-major rows (t*B + b)
    flat_layer_params = [w for layer in kp["layers"] for w in layer]
    n_in = 2 + 3 * num_layers + 2

    kernel = functools.partial(net_kernel, t_len=t, batch=b, hidden=hidden,
                               num_layers=num_layers)
    y_tm = pl.pallas_call(
        kernel,
        out_shape=jax.ShapeDtypeStruct((n, out_pad), jnp.float32),
        in_specs=[pl.BlockSpec(memory_space=VMEM)] * n_in,
        out_specs=pl.BlockSpec(memory_space=VMEM),
    )(ids_tm, kp["table"], *flat_layer_params, kp["lin_w"], kp["lin_b"])

    # Drop output-column padding; PyTorch's batch_first .view(-1, 2H) means
    # rows in (b, t) order, so reorder from time-major.
    y = y_tm[:, :out_size]
    return y.reshape(t, b, out_size).transpose(1, 0, 2).reshape(n, out_size)


# ----------------------------- pure-JAX reference ---------------------------
def _lstm_ref(x_tbd, w_ih, w_hh, b):
    hidden = w_hh.shape[0]
    batch = x_tbd.shape[1]

    def step(carry, x_t):
        h, c = carry
        gates = x_t @ w_ih + h @ w_hh + b
        i = jax.nn.sigmoid(gates[:, :hidden])
        f = jax.nn.sigmoid(gates[:, hidden:2 * hidden])
        g = jnp.tanh(gates[:, 2 * hidden:3 * hidden])
        o = jax.nn.sigmoid(gates[:, 3 * hidden:])
        c = f * c + i * g
        h = o * jnp.tanh(c)
        return (h, c), h

    init = (jnp.zeros((batch, hidden), jnp.float32),
            jnp.zeros((batch, hidden), jnp.float32))
    _, ys = lax.scan(step, init, x_tbd)
    return ys


def net_ref(params, ids):
    b, t = ids.shape
    emb = params["embedding"][ids.reshape(-1)]
    x = emb.reshape(b, t, -1).transpose(1, 0, 2)
    for (fw, bw) in params["lstm"]:
        out_f = _lstm_ref(x, *fw)
        out_b = _lstm_ref(x[::-1], *bw)[::-1]
        x = jnp.concatenate([out_f, out_b], axis=-1)
    h2 = x.transpose(1, 0, 2).reshape(b * t, -1)
    return h2 @ params["lin_w"] + params["lin_b"]


if __name__ == "__main__":
    # Shapes consistent with the module: args.EmbedSize=32, hiddenSize=32,
    # hiddenNum=2 (num_layers), outSize=8, wordNum=50, batch=2, seq=8.
    B, T = 2, 8
    VOCAB, EMBED, HIDDEN, NUM_LAYERS, OUT = 50, 32, 32, 2, 8

    key = jax.random.PRNGKey(0)
    key, k_ids = jax.random.split(key)
    ids = jax.random.randint(k_ids, (B, T), 0, VOCAB, dtype=jnp.int32)
    params = init_params(key, VOCAB, EMBED, HIDDEN, NUM_LAYERS, OUT)

    out = jax.block_until_ready(net_forward(params, ids))
    ref = net_ref(params, ids)
    assert out.shape == (B * T, OUT), out.shape
    assert jnp.allclose(out, ref, atol=1e-3, rtol=1e-3), "mismatch vs pure-JAX reference"
    print("KERNEL_OK")
</pallas_src>

<mosaic_0001>
module attributes {stable_mosaic.version = 11 : i64} {
  func.func @net_kernel(%arg0: memref<16x1xi32, #tpu.memory_space<vmem>>, %arg1: memref<128x32xf32, #tpu.memory_space<vmem>>, %arg2: memref<32x256xf32, #tpu.memory_space<vmem>>, %arg3: memref<64x256xf32, #tpu.memory_space<vmem>>, %arg4: memref<1x256xf32, #tpu.memory_space<vmem>>, %arg5: memref<64x256xf32, #tpu.memory_space<vmem>>, %arg6: memref<64x256xf32, #tpu.memory_space<vmem>>, %arg7: memref<1x256xf32, #tpu.memory_space<vmem>>, %arg8: memref<64x128xf32, #tpu.memory_space<vmem>>, %arg9: memref<1x128xf32, #tpu.memory_space<vmem>>, %arg10: memref<16x128xf32, #tpu.memory_space<vmem>>) attributes {dimension_semantics = [], scalar_prefetch = 0 : i64, scratch_operands = 0 : i64, tpu.core_type = #tpu.core_type<tc>} {
    %c0 = arith.constant 0 : index
    %c0_0 = arith.constant 0 : index
    %0 = vector.load %arg0[%c0, %c0_0] : memref<16x1xi32, #tpu.memory_space<vmem>>, vector<16x1xi32>
    %1 = tpu.iota {dimensions = array<i32: 1>} : vector<16x128xi32>
    %2 = vector.broadcast %0 : vector<16x1xi32> to vector<16x128xi32>
    %3 = arith.cmpi eq, %1, %2 : vector<16x128xi32>
    %4 = arith.extui %3 : vector<16x128xi1> to vector<16x128xi32>
    %5 = arith.sitofp %4 : vector<16x128xi32> to vector<16x128xf32>
    %c0_1 = arith.constant 0 : index
    %c0_2 = arith.constant 0 : index
    %6 = vector.load %arg1[%c0_1, %c0_2] : memref<128x32xf32, #tpu.memory_space<vmem>>, vector<128x32xf32>
    %cst = arith.constant dense<0.000000e+00> : vector<16x32xf32>
    %7 = tpu.matmul %5, %6, %cst {dimension_numbers = #tpu.dot_dimension_numbers<[1], [0], [0], [1], [0, 0, 1, 1], [], []>} : vector<16x128xf32>, vector<128x32xf32>, vector<16x32xf32> -> vector<16x32xf32>
    %c0_3 = arith.constant 0 : index
    %c0_4 = arith.constant 0 : index
    %8 = vector.load %arg2[%c0_3, %c0_4] : memref<32x256xf32, #tpu.memory_space<vmem>>, vector<32x256xf32>
    %cst_5 = arith.constant dense<0.000000e+00> : vector<16x256xf32>
    %9 = tpu.matmul %7, %8, %cst_5 {dimension_numbers = #tpu.dot_dimension_numbers<[1], [0], [0], [1], [0, 0, 1, 1], [], []>} : vector<16x32xf32>, vector<32x256xf32>, vector<16x256xf32> -> vector<16x256xf32>
    %c0_6 = arith.constant 0 : index
    %c0_7 = arith.constant 0 : index
    %10 = vector.load %arg4[%c0_6, %c0_7] : memref<1x256xf32, #tpu.memory_space<vmem>>, vector<1x256xf32>
    %11 = vector.broadcast %10 : vector<1x256xf32> to vector<16x256xf32>
    %12 = arith.addf %9, %11 : vector<16x256xf32>
    %c0_8 = arith.constant 0 : index
    %c0_9 = arith.constant 0 : index
    %13 = vector.load %arg3[%c0_8, %c0_9] : memref<64x256xf32, #tpu.memory_space<vmem>>, vector<64x256xf32>
    %14 = tpu.iota {dimensions = array<i32: 1>} : vector<2x256xi32>
    %c64_i32 = arith.constant 64 : i32
    %c0_i32 = arith.constant 0 : i32
    %15 = arith.cmpi eq, %c64_i32, %c0_i32 : i32
    %c1_i32 = arith.constant 1 : i32
    %16 = arith.select %15, %c1_i32, %c64_i32 : i32
    %17 = vector.broadcast %16 : i32 to vector<2x256xi32>
    %18 = arith.remsi %14, %17 : vector<2x256xi32>
    %c0_i32_10 = arith.constant 0 : i32
    %19 = vector.broadcast %c0_i32_10 : i32 to vector<2x256xi32>
    %20 = arith.cmpi ne, %18, %19 : vector<2x256xi32>
    %c0_i32_11 = arith.constant 0 : i32
    %21 = vector.broadcast %c0_i32_11 : i32 to vector<2x256xi32>
    %22 = arith.cmpi slt, %18, %21 : vector<2x256xi32>
    %c0_i32_12 = arith.constant 0 : i32
    %23 = arith.cmpi slt, %16, %c0_i32_12 : i32
    %24 = vector.broadcast %23 : i1 to vector<2x256xi1>
    %25 = vector.broadcast %24 : vector<2x256xi1> to vector<2x256xi1>
    %26 = arith.xori %22, %25 : vector<2x256xi1>
    %27 = arith.andi %26, %20 : vector<2x256xi1>
    %28 = vector.broadcast %16 : i32 to vector<2x256xi32>
    %29 = arith.addi %18, %28 : vector<2x256xi32>
    %30 = arith.select %27, %29, %18 : vector<2x256xi1>, vector<2x256xi32>
    %c32_i32 = arith.constant 32 : i32
    %31 = vector.broadcast %c32_i32 : i32 to vector<2x256xi32>
    %32 = arith.cmpi slt, %30, %31 : vector<2x256xi32>
    %33 = tpu.iota {dimensions = array<i32: 1>} : vector<2x64xi32>
    %c32_i32_13 = arith.constant 32 : i32
    %34 = vector.broadcast %c32_i32_13 : i32 to vector<2x64xi32>
    %35 = arith.cmpi slt, %33, %34 : vector<2x64xi32>
    %cst_14 = arith.constant 0.000000e+00 : f32
    %36 = vector.broadcast %cst_14 : f32 to vector<2x64xf32>
    %cst_15 = arith.constant 0.000000e+00 : f32
    %37 = vector.broadcast %cst_15 : f32 to vector<2x64xf32>
    %cst_16 = arith.constant dense<0.000000e+00> : vector<2x256xf32>
    %38 = tpu.matmul %36, %13, %cst_16 {dimension_numbers = #tpu.dot_dimension_numbers<[1], [0], [0], [1], [0, 0, 1, 1], [], []>} : vector<2x64xf32>, vector<64x256xf32>, vector<2x256xf32> -> vector<2x256xf32>
    %39 = vector.extract_strided_slice %12 {offsets = [0, 0], sizes = [2, 256], strides = [1, 1]} : vector<16x256xf32> to vector<2x256xf32>
    %40 = vector.extract_strided_slice %12 {offsets = [14, 0], sizes = [2, 256], strides = [1, 1]} : vector<16x256xf32> to vector<2x256xf32>
    %41 = arith.select %32, %39, %40 : vector<2x256xi1>, vector<2x256xf32>
    %42 = arith.addf %41, %38 : vector<2x256xf32>
    %43 = vector.extract_strided_slice %42 {offsets = [0, 0], sizes = [2, 128], strides = [1, 1]} : vector<2x256xf32> to vector<2x128xf32>
    %44 = arith.negf %43 : vector<2x128xf32>
    %45 = math.exp %44 : vector<2x128xf32>
    %cst_17 = arith.constant 1.000000e+00 : f32
    %46 = vector.broadcast %cst_17 : f32 to vector<2x128xf32>
    %47 = arith.addf %46, %45 : vector<2x128xf32>
    %48 = arith.divf %46, %47 : vector<2x128xf32>
    %49 = vector.extract_strided_slice %42 {offsets = [0, 128], sizes = [2, 64], strides = [1, 1]} : vector<2x256xf32> to vector<2x64xf32>
    %50 = math.tanh %49 : vector<2x64xf32>
    %51 = vector.extract_strided_slice %42 {offsets = [0, 192], sizes = [2, 64], strides = [1, 1]} : vector<2x256xf32> to vector<2x64xf32>
    %52 = arith.negf %51 : vector<2x64xf32>
    %53 = math.exp %52 : vector<2x64xf32>
    %cst_18 = arith.constant 1.000000e+00 : f32
    %54 = vector.broadcast %cst_18 : f32 to vector<2x64xf32>
    %55 = arith.addf %54, %53 : vector<2x64xf32>
    %56 = arith.divf %54, %55 : vector<2x64xf32>
    %57 = vector.extract_strided_slice %48 {offsets = [0, 64], sizes = [2, 64], strides = [1, 1]} : vector<2x128xf32> to vector<2x64xf32>
    %58 = arith.mulf %57, %37 : vector<2x64xf32>
    %59 = vector.extract_strided_slice %48 {offsets = [0, 0], sizes = [2, 64], strides = [1, 1]} : vector<2x128xf32> to vector<2x64xf32>
    %60 = arith.mulf %59, %50 : vector<2x64xf32>
    %61 = arith.addf %58, %60 : vector<2x64xf32>
    %62 = math.tanh %61 : vector<2x64xf32>
    %63 = arith.mulf %56, %62 : vector<2x64xf32>
    %cst_19 = arith.constant dense<0.000000e+00> : vector<2x256xf32>
    %64 = tpu.matmul %63, %13, %cst_19 {dimension_numbers = #tpu.dot_dimension_numbers<[1], [0], [0], [1], [0, 0, 1, 1], [], []>} : vector<2x64xf32>, vector<64x256xf32>, vector<2x256xf32> -> vector<2x256xf32>
    %65 = vector.extract_strided_slice %12 {offsets = [2, 0], sizes = [2, 256], strides = [1, 1]} : vector<16x256xf32> to vector<2x256xf32>
    %66 = vector.extract_strided_slice %12 {offsets = [12, 0], sizes = [2, 256], strides = [1, 1]} : vector<16x256xf32> to vector<2x256xf32>
    %67 = arith.select %32, %65, %66 : vector<2x256xi1>, vector<2x256xf32>
    %68 = arith.addf %67, %64 : vector<2x256xf32>
    %69 = vector.extract_strided_slice %68 {offsets = [0, 0], sizes = [2, 128], strides = [1, 1]} : vector<2x256xf32> to vector<2x128xf32>
    %70 = arith.negf %69 : vector<2x128xf32>
    %71 = math.exp %70 : vector<2x128xf32>
    %cst_20 = arith.constant 1.000000e+00 : f32
    %72 = vector.broadcast %cst_20 : f32 to vector<2x128xf32>
    %73 = arith.addf %72, %71 : vector<2x128xf32>
    %74 = arith.divf %72, %73 : vector<2x128xf32>
    %75 = vector.extract_strided_slice %68 {offsets = [0, 128], sizes = [2, 64], strides = [1, 1]} : vector<2x256xf32> to vector<2x64xf32>
    %76 = math.tanh %75 : vector<2x64xf32>
    %77 = vector.extract_strided_slice %68 {offsets = [0, 192], sizes = [2, 64], strides = [1, 1]} : vector<2x256xf32> to vector<2x64xf32>
    %78 = arith.negf %77 : vector<2x64xf32>
    %79 = math.exp %78 : vector<2x64xf32>
    %cst_21 = arith.constant 1.000000e+00 : f32
    %80 = vector.broadcast %cst_21 : f32 to vector<2x64xf32>
    %81 = arith.addf %80, %79 : vector<2x64xf32>
    %82 = arith.divf %80, %81 : vector<2x64xf32>
    %83 = vector.extract_strided_slice %74 {offsets = [0, 64], sizes = [2, 64], strides = [1, 1]} : vector<2x128xf32> to vector<2x64xf32>
    %84 = arith.mulf %83, %61 : vector<2x64xf32>
    %85 = vector.extract_strided_slice %74 {offsets = [0, 0], sizes = [2, 64], strides = [1, 1]} : vector<2x128xf32> to vector<2x64xf32>
    %86 = arith.mulf %85, %76 : vector<2x64xf32>
    %87 = arith.addf %84, %86 : vector<2x64xf32>
    %88 = math.tanh %87 : vector<2x64xf32>
    %89 = arith.mulf %82, %88 : vector<2x64xf32>
    %cst_22 = arith.constant dense<0.000000e+00> : vector<2x256xf32>
    %90 = tpu.matmul %89, %13, %cst_22 {dimension_numbers = #tpu.dot_dimension_numbers<[1], [0], [0], [1], [0, 0, 1, 1], [], []>} : vector<2x64xf32>, vector<64x256xf32>, vector<2x256xf32> -> vector<2x256xf32>
    %91 = vector.extract_strided_slice %12 {offsets = [4, 0], sizes = [2, 256], strides = [1, 1]} : vector<16x256xf32> to vector<2x256xf32>
    %92 = vector.extract_strided_slice %12 {offsets = [10, 0], sizes = [2, 256], strides = [1, 1]} : vector<16x256xf32> to vector<2x256xf32>
    %93 = arith.select %32, %91, %92 : vector<2x256xi1>, vector<2x256xf32>
    %94 = arith.addf %93, %90 : vector<2x256xf32>
    %95 = vector.extract_strided_slice %94 {offsets = [0, 0], sizes = [2, 128], strides = [1, 1]} : vector<2x256xf32> to vector<2x128xf32>
    %96 = arith.negf %95 : vector<2x128xf32>
    %97 = math.exp %96 : vector<2x128xf32>
    %cst_23 = arith.constant 1.000000e+00 : f32
    %98 = vector.broadcast %cst_23 : f32 to vector<2x128xf32>
    %99 = arith.addf %98, %97 : vector<2x128xf32>
    %100 = arith.divf %98, %99 : vector<2x128xf32>
    %101 = vector.extract_strided_slice %94 {offsets = [0, 128], sizes = [2, 64], strides = [1, 1]} : vector<2x256xf32> to vector<2x64xf32>
    %102 = math.tanh %101 : vector<2x64xf32>
    %103 = vector.extract_strided_slice %94 {offsets = [0, 192], sizes = [2, 64], strides = [1, 1]} : vector<2x256xf32> to vector<2x64xf32>
    %104 = arith.negf %103 : vector<2x64xf32>
    %105 = math.exp %104 : vector<2x64xf32>
    %cst_24 = arith.constant 1.000000e+00 : f32
    %106 = vector.broadcast %cst_24 : f32 to vector<2x64xf32>
    %107 = arith.addf %106, %105 : vector<2x64xf32>
    %108 = arith.divf %106, %107 : vector<2x64xf32>
    %109 = vector.extract_strided_slice %100 {offsets = [0, 64], sizes = [2, 64], strides = [1, 1]} : vector<2x128xf32> to vector<2x64xf32>
    %110 = arith.mulf %109, %87 : vector<2x64xf32>
    %111 = vector.extract_strided_slice %100 {offsets = [0, 0], sizes = [2, 64], strides = [1, 1]} : vector<2x128xf32> to vector<2x64xf32>
    %112 = arith.mulf %111, %102 : vector<2x64xf32>
    %113 = arith.addf %110, %112 : vector<2x64xf32>
    %114 = math.tanh %113 : vector<2x64xf32>
    %115 = arith.mulf %108, %114 : vector<2x64xf32>
    %cst_25 = arith.constant dense<0.000000e+00> : vector<2x256xf32>
    %116 = tpu.matmul %115, %13, %cst_25 {dimension_numbers = #tpu.dot_dimension_numbers<[1], [0], [0], [1], [0, 0, 1, 1], [], []>} : vector<2x64xf32>, vector<64x256xf32>, vector<2x256xf32> -> vector<2x256xf32>
    %117 = vector.extract_strided_slice %12 {offsets = [6, 0], sizes = [2, 256], strides = [1, 1]} : vector<16x256xf32> to vector<2x256xf32>
    %118 = vector.extract_strided_slice %12 {offsets = [8, 0], sizes = [2, 256], strides = [1, 1]} : vector<16x256xf32> to vector<2x256xf32>
    %119 = arith.select %32, %117, %118 : vector<2x256xi1>, vector<2x256xf32>
    %120 = arith.addf %119, %116 : vector<2x256xf32>
    %121 = vector.extract_strided_slice %120 {offsets = [0, 0], sizes = [2, 128], strides = [1, 1]} : vector<2x256xf32> to vector<2x128xf32>
    %122 = arith.negf %121 : vector<2x128xf32>
    %123 = math.exp %122 : vector<2x128xf32>
    %cst_26 = arith.constant 1.000000e+00 : f32
    %124 = vector.broadcast %cst_26 : f32 to vector<2x128xf32>
    %125 = arith.addf %124, %123 : vector<2x128xf32>
    %126 = arith.divf %124, %125 : vector<2x128xf32>
    %127 = vector.extract_strided_slice %120 {offsets = [0, 128], sizes = [2, 64], strides = [1, 1]} : vector<2x256xf32> to vector<2x64xf32>
    %128 = math.tanh %127 : vector<2x64xf32>
    %129 = vector.extract_strided_slice %120 {offsets = [0, 192], sizes = [2, 64], strides = [1, 1]} : vector<2x256xf32> to vector<2x64xf32>
    %130 = arith.negf %129 : vector<2x64xf32>
    %131 = math.exp %130 : vector<2x64xf32>
    %cst_27 = arith.constant 1.000000e+00 : f32
    %132 = vector.broadcast %cst_27 : f32 to vector<2x64xf32>
    %133 = arith.addf %132, %131 : vector<2x64xf32>
    %134 = arith.divf %132, %133 : vector<2x64xf32>
    %135 = vector.extract_strided_slice %126 {offsets = [0, 64], sizes = [2, 64], strides = [1, 1]} : vector<2x128xf32> to vector<2x64xf32>
    %136 = arith.mulf %135, %113 : vector<2x64xf32>
    %137 = vector.extract_strided_slice %126 {offsets = [0, 0], sizes = [2, 64], strides = [1, 1]} : vector<2x128xf32> to vector<2x64xf32>
    %138 = arith.mulf %137, %128 : vector<2x64xf32>
    %139 = arith.addf %136, %138 : vector<2x64xf32>
    %140 = math.tanh %139 : vector<2x64xf32>
    %141 = arith.mulf %134, %140 : vector<2x64xf32>
    %cst_28 = arith.constant dense<0.000000e+00> : vector<2x256xf32>
    %142 = tpu.matmul %141, %13, %cst_28 {dimension_numbers = #tpu.dot_dimension_numbers<[1], [0], [0], [1], [0, 0, 1, 1], [], []>} : vector<2x64xf32>, vector<64x256xf32>, vector<2x256xf32> -> vector<2x256xf32>
    %143 = vector.extract_strided_slice %12 {offsets = [8, 0], sizes = [2, 256], strides = [1, 1]} : vector<16x256xf32> to vector<2x256xf32>
    %144 = vector.extract_strided_slice %12 {offsets = [6, 0], sizes = [2, 256], strides = [1, 1]} : vector<16x256xf32> to vector<2x256xf32>
    %145 = arith.select %32, %143, %144 : vector<2x256xi1>, vector<2x256xf32>
    %146 = arith.addf %145, %142 : vector<2x256xf32>
    %147 = vector.extract_strided_slice %146 {offsets = [0, 0], sizes = [2, 128], strides = [1, 1]} : vector<2x256xf32> to vector<2x128xf32>
    %148 = arith.negf %147 : vector<2x128xf32>
    %149 = math.exp %148 : vector<2x128xf32>
    %cst_29 = arith.constant 1.000000e+00 : f32
    %150 = vector.broadcast %cst_29 : f32 to vector<2x128xf32>
    %151 = arith.addf %150, %149 : vector<2x128xf32>
    %152 = arith.divf %150, %151 : vector<2x128xf32>
    %153 = vector.extract_strided_slice %146 {offsets = [0, 128], sizes = [2, 64], strides = [1, 1]} : vector<2x256xf32> to vector<2x64xf32>
    %154 = math.tanh %153 : vector<2x64xf32>
    %155 = vector.extract_strided_slice %146 {offsets = [0, 192], sizes = [2, 64], strides = [1, 1]} : vector<2x256xf32> to vector<2x64xf32>
    %156 = arith.negf %155 : vector<2x64xf32>
    %157 = math.exp %156 : vector<2x64xf32>
    %cst_30 = arith.constant 1.000000e+00 : f32
    %158 = vector.broadcast %cst_30 : f32 to vector<2x64xf32>
    %159 = arith.addf %158, %157 : vector<2x64xf32>
    %160 = arith.divf %158, %159 : vector<2x64xf32>
    %161 = vector.extract_strided_slice %152 {offsets = [0, 64], sizes = [2, 64], strides = [1, 1]} : vector<2x128xf32> to vector<2x64xf32>
    %162 = arith.mulf %161, %139 : vector<2x64xf32>
    %163 = vector.extract_strided_slice %152 {offsets = [0, 0], sizes = [2, 64], strides = [1, 1]} : vector<2x128xf32> to vector<2x64xf32>
    %164 = arith.mulf %163, %154 : vector<2x64xf32>
    %165 = arith.addf %162, %164 : vector<2x64xf32>
    %166 = math.tanh %165 : vector<2x64xf32>
    %167 = arith.mulf %160, %166 : vector<2x64xf32>
    %cst_31 = arith.constant dense<0.000000e+00> : vector<2x256xf32>
    %168 = tpu.matmul %167, %13, %cst_31 {dimension_numbers = #tpu.dot_dimension_numbers<[1], [0], [0], [1], [0, 0, 1, 1], [], []>} : vector<2x64xf32>, vector<64x256xf32>, vector<2x256xf32> -> vector<2x256xf32>
    %169 = vector.extract_strided_slice %12 {offsets = [10, 0], sizes = [2, 256], strides = [1, 1]} : vector<16x256xf32> to vector<2x256xf32>
    %170 = vector.extract_strided_slice %12 {offsets = [4, 0], sizes = [2, 256], strides = [1, 1]} : vector<16x256xf32> to vector<2x256xf32>
    %171 = arith.select %32, %169, %170 : vector<2x256xi1>, vector<2x256xf32>
    %172 = arith.addf %171, %168 : vector<2x256xf32>
    %173 = vector.extract_strided_slice %172 {offsets = [0, 0], sizes = [2, 128], strides = [1, 1]} : vector<2x256xf32> to vector<2x128xf32>
    %174 = arith.negf %173 : vector<2x128xf32>
    %175 = math.exp %174 : vector<2x128xf32>
    %cst_32 = arith.constant 1.000000e+00 : f32
    %176 = vector.broadcast %cst_32 : f32 to vector<2x128xf32>
    %177 = arith.addf %176, %175 : vector<2x128xf32>
    %178 = arith.divf %176, %177 : vector<2x128xf32>
    %179 = vector.extract_strided_slice %172 {offsets = [0, 128], sizes = [2, 64], strides = [1, 1]} : vector<2x256xf32> to vector<2x64xf32>
    %180 = math.tanh %179 : vector<2x64xf32>
    %181 = vector.extract_strided_slice %172 {offsets = [0, 192], sizes = [2, 64], strides = [1, 1]} : vector<2x256xf32> to vector<2x64xf32>
    %182 = arith.negf %181 : vector<2x64xf32>
    %183 = math.exp %182 : vector<2x64xf32>
    %cst_33 = arith.constant 1.000000e+00 : f32
    %184 = vector.broadcast %cst_33 : f32 to vector<2x64xf32>
    %185 = arith.addf %184, %183 : vector<2x64xf32>
    %186 = arith.divf %184, %185 : vector<2x64xf32>
    %187 = vector.extract_strided_slice %178 {offsets = [0, 64], sizes = [2, 64], strides = [1, 1]} : vector<2x128xf32> to vector<2x64xf32>
    %188 = arith.mulf %187, %165 : vector<2x64xf32>
    %189 = vector.extract_strided_slice %178 {offsets = [0, 0], sizes = [2, 64], strides = [1, 1]} : vector<2x128xf32> to vector<2x64xf32>
    %190 = arith.mulf %189, %180 : vector<2x64xf32>
    %191 = arith.addf %188, %190 : vector<2x64xf32>
    %192 = math.tanh %191 : vector<2x64xf32>
    %193 = arith.mulf %186, %192 : vector<2x64xf32>
    %cst_34 = arith.constant dense<0.000000e+00> : vector<2x256xf32>
    %194 = tpu.matmul %193, %13, %cst_34 {dimension_numbers = #tpu.dot_dimension_numbers<[1], [0], [0], [1], [0, 0, 1, 1], [], []>} : vector<2x64xf32>, vector<64x256xf32>, vector<2x256xf32> -> vector<2x256xf32>
    %195 = vector.extract_strided_slice %12 {offsets = [12, 0], sizes = [2, 256], strides = [1, 1]} : vector<16x256xf32> to vector<2x256xf32>
    %196 = vector.extract_strided_slice %12 {offsets = [2, 0], sizes = [2, 256], strides = [1, 1]} : vector<16x256xf32> to vector<2x256xf32>
    %197 = arith.select %32, %195, %196 : vector<2x256xi1>, vector<2x256xf32>
    %198 = arith.addf %197, %194 : vector<2x256xf32>
    %199 = vector.extract_strided_slice %198 {offsets = [0, 0], sizes = [2, 128], strides = [1, 1]} : vector<2x256xf32> to vector<2x128xf32>
    %200 = arith.negf %199 : vector<2x128xf32>
    %201 = math.exp %200 : vector<2x128xf32>
    %cst_35 = arith.constant 1.000000e+00 : f32
    %202 = vector.broadcast %cst_35 : f32 to vector<2x128xf32>
    %203 = arith.addf %202, %201 : vector<2x128xf32>
    %204 = arith.divf %202, %203 : vector<2x128xf32>
    %205 = vector.extract_strided_slice %198 {offsets = [0, 128], sizes = [2, 64], strides = [1, 1]} : vector<2x256xf32> to vector<2x64xf32>
    %206 = math.tanh %205 : vector<2x64xf32>
    %207 = vector.extract_strided_slice %198 {offsets = [0, 192], sizes = [2, 64], strides = [1, 1]} : vector<2x256xf32> to vector<2x64xf32>
    %208 = arith.negf %207 : vector<2x64xf32>
    %209 = math.exp %208 : vector<2x64xf32>
    %cst_36 = arith.constant 1.000000e+00 : f32
    %210 = vector.broadcast %cst_36 : f32 to vector<2x64xf32>
    %211 = arith.addf %210, %209 : vector<2x64xf32>
    %212 = arith.divf %210, %211 : vector<2x64xf32>
    %213 = vector.extract_strided_slice %204 {offsets = [0, 64], sizes = [2, 64], strides = [1, 1]} : vector<2x128xf32> to vector<2x64xf32>
    %214 = arith.mulf %213, %191 : vector<2x64xf32>
    %215 = vector.extract_strided_slice %204 {offsets = [0, 0], sizes = [2, 64], strides = [1, 1]} : vector<2x128xf32> to vector<2x64xf32>
    %216 = arith.mulf %215, %206 : vector<2x64xf32>
    %217 = arith.addf %214, %216 : vector<2x64xf32>
    %218 = math.tanh %217 : vector<2x64xf32>
    %219 = arith.mulf %212, %218 : vector<2x64xf32>
    %cst_37 = arith.constant dense<0.000000e+00> : vector<2x256xf32>
    %220 = tpu.matmul %219, %13, %cst_37 {dimension_numbers = #tpu.dot_dimension_numbers<[1], [0], [0], [1], [0, 0, 1, 1], [], []>} : vector<2x64xf32>, vector<64x256xf32>, vector<2x256xf32> -> vector<2x256xf32>
    %221 = vector.extract_strided_slice %12 {offsets = [14, 0], sizes = [2, 256], strides = [1, 1]} : vector<16x256xf32> to vector<2x256xf32>
    %222 = vector.extract_strided_slice %12 {offsets = [0, 0], sizes = [2, 256], strides = [1, 1]} : vector<16x256xf32> to vector<2x256xf32>
    %223 = arith.select %32, %221, %222 : vector<2x256xi1>, vector<2x256xf32>
    %224 = arith.addf %223, %220 : vector<2x256xf32>
    %225 = vector.extract_strided_slice %224 {offsets = [0, 0], sizes = [2, 128], strides = [1, 1]} : vector<2x256xf32> to vector<2x128xf32>
    %226 = arith.negf %225 : vector<2x128xf32>
    %227 = math.exp %226 : vector<2x128xf32>
    %cst_38 = arith.constant 1.000000e+00 : f32
    %228 = vector.broadcast %cst_38 : f32 to vector<2x128xf32>
    %229 = arith.addf %228, %227 : vector<2x128xf32>
    %230 = arith.divf %228, %229 : vector<2x128xf32>
    %231 = vector.extract_strided_slice %224 {offsets = [0, 128], sizes = [2, 64], strides = [1, 1]} : vector<2x256xf32> to vector<2x64xf32>
    %232 = math.tanh %231 : vector<2x64xf32>
    %233 = vector.extract_strided_slice %224 {offsets = [0, 192], sizes = [2, 64], strides = [1, 1]} : vector<2x256xf32> to vector<2x64xf32>
    %234 = arith.negf %233 : vector<2x64xf32>
    %235 = math.exp %234 : vector<2x64xf32>
    %cst_39 = arith.constant 1.000000e+00 : f32
    %236 = vector.broadcast %cst_39 : f32 to vector<2x64xf32>
    %237 = arith.addf %236, %235 : vector<2x64xf32>
    %238 = arith.divf %236, %237 : vector<2x64xf32>
    %239 = vector.extract_strided_slice %230 {offsets = [0, 64], sizes = [2, 64], strides = [1, 1]} : vector<2x128xf32> to vector<2x64xf32>
    %240 = arith.mulf %239, %217 : vector<2x64xf32>
    %241 = vector.extract_strided_slice %230 {offsets = [0, 0], sizes = [2, 64], strides = [1, 1]} : vector<2x128xf32> to vector<2x64xf32>
    %242 = arith.mulf %241, %232 : vector<2x64xf32>
    %243 = arith.addf %240, %242 : vector<2x64xf32>
    %244 = math.tanh %243 : vector<2x64xf32>
    %245 = arith.mulf %238, %244 : vector<2x64xf32>
    %246 = arith.select %35, %63, %245 : vector<2x64xi1>, vector<2x64xf32>
    %247 = arith.select %35, %89, %219 : vector<2x64xi1>, vector<2x64xf32>
    %248 = arith.select %35, %115, %193 : vector<2x64xi1>, vector<2x64xf32>
    %249 = arith.select %35, %141, %167 : vector<2x64xi1>, vector<2x64xf32>
    %250 = arith.select %35, %167, %141 : vector<2x64xi1>, vector<2x64xf32>
    %251 = arith.select %35, %193, %115 : vector<2x64xi1>, vector<2x64xf32>
    %252 = arith.select %35, %219, %89 : vector<2x64xi1>, vector<2x64xf32>
    %253 = arith.select %35, %245, %63 : vector<2x64xi1>, vector<2x64xf32>
    %254 = tpu.concatenate %246, %247, %248, %249, %250, %251, %252, %253 in 0 : vector<2x64xf32>, vector<2x64xf32>, vector<2x64xf32>, vector<2x64xf32>, vector<2x64xf32>, vector<2x64xf32>, vector<2x64xf32>, vector<2x64xf32> -> vector<16x64xf32>
    %c0_40 = arith.constant 0 : index
    %c0_41 = arith.constant 0 : index
    %255 = vector.load %arg5[%c0_40, %c0_41] : memref<64x256xf32, #tpu.memory_space<vmem>>, vector<64x256xf32>
    %cst_42 = arith.constant dense<0.000000e+00> : vector<16x256xf32>
    %256 = tpu.matmul %254, %255, %cst_42 {dimension_numbers = #tpu.dot_dimension_numbers<[1], [0], [0], [1], [0, 0, 1, 1], [], []>} : vector<16x64xf32>, vector<64x256xf32>, vector<16x256xf32> -> vector<16x256xf32>
    %c0_43 = arith.constant 0 : index
    %c0_44 = arith.constant 0 : index
    %257 = vector.load %arg7[%c0_43, %c0_44] : memref<1x256xf32, #tpu.memory_space<vmem>>, vector<1x256xf32>
    %258 = vector.broadcast %257 : vector<1x256xf32> to vector<16x256xf32>
    %259 = arith.addf %256, %258 : vector<16x256xf32>
    %c0_45 = arith.constant 0 : index
    %c0_46 = arith.constant 0 : index
    %260 = vector.load %arg6[%c0_45, %c0_46] : memref<64x256xf32, #tpu.memory_space<vmem>>, vector<64x256xf32>
    %261 = tpu.iota {dimensions = array<i32: 1>} : vector<2x256xi32>
    %c64_i32_47 = arith.constant 64 : i32
    %c0_i32_48 = arith.constant 0 : i32
    %262 = arith.cmpi eq, %c64_i32_47, %c0_i32_48 : i32
    %c1_i32_49 = arith.constant 1 : i32
    %263 = arith.select %262, %c1_i32_49, %c64_i32_47 : i32
    %264 = vector.broadcast %263 : i32 to vector<2x256xi32>
    %265 = arith.remsi %261, %264 : vector<2x256xi32>
    %c0_i32_50 = arith.constant 0 : i32
    %266 = vector.broadcast %c0_i32_50 : i32 to vector<2x256xi32>
    %267 = arith.cmpi ne, %265, %266 : vector<2x256xi32>
    %c0_i32_51 = arith.constant 0 : i32
    %268 = vector.broadcast %c0_i32_51 : i32 to vector<2x256xi32>
    %269 = arith.cmpi slt, %265, %268 : vector<2x256xi32>
    %c0_i32_52 = arith.constant 0 : i32
    %270 = arith.cmpi slt, %263, %c0_i32_52 : i32
    %271 = vector.broadcast %270 : i1 to vector<2x256xi1>
    %272 = vector.broadcast %271 : vector<2x256xi1> to vector<2x256xi1>
    %273 = arith.xori %269, %272 : vector<2x256xi1>
    %274 = arith.andi %273, %267 : vector<2x256xi1>
    %275 = vector.broadcast %263 : i32 to vector<2x256xi32>
    %276 = arith.addi %265, %275 : vector<2x256xi32>
    %277 = arith.select %274, %276, %265 : vector<2x256xi1>, vector<2x256xi32>
    %c32_i32_53 = arith.constant 32 : i32
    %278 = vector.broadcast %c32_i32_53 : i32 to vector<2x256xi32>
    %279 = arith.cmpi slt, %277, %278 : vector<2x256xi32>
    %280 = tpu.iota {dimensions = array<i32: 1>} : vector<2x64xi32>
    %c32_i32_54 = arith.constant 32 : i32
    %281 = vector.broadcast %c32_i32_54 : i32 to vector<2x64xi32>
    %282 = arith.cmpi slt, %280, %281 : vector<2x64xi32>
    %cst_55 = arith.constant 0.000000e+00 : f32
    %283 = vector.broadcast %cst_55 : f32 to vector<2x64xf32>
    %cst_56 = arith.constant 0.000000e+00 : f32
    %284 = vector.broadcast %cst_56 : f32 to vector<2x64xf32>
    %cst_57 = arith.constant dense<0.000000e+00> : vector<2x256xf32>
    %285 = tpu.matmul %283, %260, %cst_57 {dimension_numbers = #tpu.dot_dimension_numbers<[1], [0], [0], [1], [0, 0, 1, 1], [], []>} : vector<2x64xf32>, vector<64x256xf32>, vector<2x256xf32> -> vector<2x256xf32>
    %286 = vector.extract_strided_slice %259 {offsets = [0, 0], sizes = [2, 256], strides = [1, 1]} : vector<16x256xf32> to vector<2x256xf32>
    %287 = vector.extract_strided_slice %259 {offsets = [14, 0], sizes = [2, 256], strides = [1, 1]} : vector<16x256xf32> to vector<2x256xf32>
    %288 = arith.select %279, %286, %287 : vector<2x256xi1>, vector<2x256xf32>
    %289 = arith.addf %288, %285 : vector<2x256xf32>
    %290 = vector.extract_strided_slice %289 {offsets = [0, 0], sizes = [2, 128], strides = [1, 1]} : vector<2x256xf32> to vector<2x128xf32>
    %291 = arith.negf %290 : vector<2x128xf32>
    %292 = math.exp %291 : vector<2x128xf32>
    %cst_58 = arith.constant 1.000000e+00 : f32
    %293 = vector.broadcast %cst_58 : f32 to vector<2x128xf32>
    %294 = arith.addf %293, %292 : vector<2x128xf32>
    %295 = arith.divf %293, %294 : vector<2x128xf32>
    %296 = vector.extract_strided_slice %289 {offsets = [0, 128], sizes = [2, 64], strides = [1, 1]} : vector<2x256xf32> to vector<2x64xf32>
    %297 = math.tanh %296 : vector<2x64xf32>
    %298 = vector.extract_strided_slice %289 {offsets = [0, 192], sizes = [2, 64], strides = [1, 1]} : vector<2x256xf32> to vector<2x64xf32>
    %299 = arith.negf %298 : vector<2x64xf32>
    %300 = math.exp %299 : vector<2x64xf32>
    %cst_59 = arith.constant 1.000000e+00 : f32
    %301 = vector.broadcast %cst_59 : f32 to vector<2x64xf32>
    %302 = arith.addf %301, %300 : vector<2x64xf32>
    %303 = arith.divf %301, %302 : vector<2x64xf32>
    %304 = vector.extract_strided_slice %295 {offsets = [0, 64], sizes = [2, 64], strides = [1, 1]} : vector<2x128xf32> to vector<2x64xf32>
    %305 = arith.mulf %304, %284 : vector<2x64xf32>
    %306 = vector.extract_strided_slice %295 {offsets = [0, 0], sizes = [2, 64], strides = [1, 1]} : vector<2x128xf32> to vector<2x64xf32>
    %307 = arith.mulf %306, %297 : vector<2x64xf32>
    %308 = arith.addf %305, %307 : vector<2x64xf32>
    %309 = math.tanh %308 : vector<2x64xf32>
    %310 = arith.mulf %303, %309 : vector<2x64xf32>
    %cst_60 = arith.constant dense<0.000000e+00> : vector<2x256xf32>
    %311 = tpu.matmul %310, %260, %cst_60 {dimension_numbers = #tpu.dot_dimension_numbers<[1], [0], [0], [1], [0, 0, 1, 1], [], []>} : vector<2x64xf32>, vector<64x256xf32>, vector<2x256xf32> -> vector<2x256xf32>
    %312 = vector.extract_strided_slice %259 {offsets = [2, 0], sizes = [2, 256], strides = [1, 1]} : vector<16x256xf32> to vector<2x256xf32>
    %313 = vector.extract_strided_slice %259 {offsets = [12, 0], sizes = [2, 256], strides = [1, 1]} : vector<16x256xf32> to vector<2x256xf32>
    %314 = arith.select %279, %312, %313 : vector<2x256xi1>, vector<2x256xf32>
    %315 = arith.addf %314, %311 : vector<2x256xf32>
    %316 = vector.extract_strided_slice %315 {offsets = [0, 0], sizes = [2, 128], strides = [1, 1]} : vector<2x256xf32> to vector<2x128xf32>
    %317 = arith.negf %316 : vector<2x128xf32>
    %318 = math.exp %317 : vector<2x128xf32>
    %cst_61 = arith.constant 1.000000e+00 : f32
    %319 = vector.broadcast %cst_61 : f32 to vector<2x128xf32>
    %320 = arith.addf %319, %318 : vector<2x128xf32>
    %321 = arith.divf %319, %320 : vector<2x128xf32>
    %322 = vector.extract_strided_slice %315 {offsets = [0, 128], sizes = [2, 64], strides = [1, 1]} : vector<2x256xf32> to vector<2x64xf32>
    %323 = math.tanh %322 : vector<2x64xf32>
    %324 = vector.extract_strided_slice %315 {offsets = [0, 192], sizes = [2, 64], strides = [1, 1]} : vector<2x256xf32> to vector<2x64xf32>
    %325 = arith.negf %324 : vector<2x64xf32>
    %326 = math.exp %325 : vector<2x64xf32>
    %cst_62 = arith.constant 1.000000e+00 : f32
    %327 = vector.broadcast %cst_62 : f32 to vector<2x64xf32>
    %328 = arith.addf %327, %326 : vector<2x64xf32>
    %329 = arith.divf %327, %328 : vector<2x64xf32>
    %330 = vector.extract_strided_slice %321 {offsets = [0, 64], sizes = [2, 64], strides = [1, 1]} : vector<2x128xf32> to vector<2x64xf32>
    %331 = arith.mulf %330, %308 : vector<2x64xf32>
    %332 = vector.extract_strided_slice %321 {offsets = [0, 0], sizes = [2, 64], strides = [1, 1]} : vector<2x128xf32> to vector<2x64xf32>
    %333 = arith.mulf %332, %323 : vector<2x64xf32>
    %334 = arith.addf %331, %333 : vector<2x64xf32>
    %335 = math.tanh %334 : vector<2x64xf32>
    %336 = arith.mulf %329, %335 : vector<2x64xf32>
    %cst_63 = arith.constant dense<0.000000e+00> : vector<2x256xf32>
    %337 = tpu.matmul %336, %260, %cst_63 {dimension_numbers = #tpu.dot_dimension_numbers<[1], [0], [0], [1], [0, 0, 1, 1], [], []>} : vector<2x64xf32>, vector<64x256xf32>, vector<2x256xf32> -> vector<2x256xf32>
    %338 = vector.extract_strided_slice %259 {offsets = [4, 0], sizes = [2, 256], strides = [1, 1]} : vector<16x256xf32> to vector<2x256xf32>
    %339 = vector.extract_strided_slice %259 {offsets = [10, 0], sizes = [2, 256], strides = [1, 1]} : vector<16x256xf32> to vector<2x256xf32>
    %340 = arith.select %279, %338, %339 : vector<2x256xi1>, vector<2x256xf32>
    %341 = arith.addf %340, %337 : vector<2x256xf32>
    %342 = vector.extract_strided_slice %341 {offsets = [0, 0], sizes = [2, 128], strides = [1, 1]} : vector<2x256xf32> to vector<2x128xf32>
    %343 = arith.negf %342 : vector<2x128xf32>
    %344 = math.exp %343 : vector<2x128xf32>
    %cst_64 = arith.constant 1.000000e+00 : f32
    %345 = vector.broadcast %cst_64 : f32 to vector<2x128xf32>
    %346 = arith.addf %345, %344 : vector<2x128xf32>
    %347 = arith.divf %345, %346 : vector<2x128xf32>
    %348 = vector.extract_strided_slice %341 {offsets = [0, 128], sizes = [2, 64], strides = [1, 1]} : vector<2x256xf32> to vector<2x64xf32>
    %349 = math.tanh %348 : vector<2x64xf32>
    %350 = vector.extract_strided_slice %341 {offsets = [0, 192], sizes = [2, 64], strides = [1, 1]} : vector<2x256xf32> to vector<2x64xf32>
    %351 = arith.negf %350 : vector<2x64xf32>
    %352 = math.exp %351 : vector<2x64xf32>
    %cst_65 = arith.constant 1.000000e+00 : f32
    %353 = vector.broadcast %cst_65 : f32 to vector<2x64xf32>
    %354 = arith.addf %353, %352 : vector<2x64xf32>
    %355 = arith.divf %353, %354 : vector<2x64xf32>
    %356 = vector.extract_strided_slice %347 {offsets = [0, 64], sizes = [2, 64], strides = [1, 1]} : vector<2x128xf32> to vector<2x64xf32>
    %357 = arith.mulf %356, %334 : vector<2x64xf32>
    %358 = vector.extract_strided_slice %347 {offsets = [0, 0], sizes = [2, 64], strides = [1, 1]} : vector<2x128xf32> to vector<2x64xf32>
    %359 = arith.mulf %358, %349 : vector<2x64xf32>
    %360 = arith.addf %357, %359 : vector<2x64xf32>
    %361 = math.tanh %360 : vector<2x64xf32>
    %362 = arith.mulf %355, %361 : vector<2x64xf32>
    %cst_66 = arith.constant dense<0.000000e+00> : vector<2x256xf32>
    %363 = tpu.matmul %362, %260, %cst_66 {dimension_numbers = #tpu.dot_dimension_numbers<[1], [0], [0], [1], [0, 0, 1, 1], [], []>} : vector<2x64xf32>, vector<64x256xf32>, vector<2x256xf32> -> vector<2x256xf32>
    %364 = vector.extract_strided_slice %259 {offsets = [6, 0], sizes = [2, 256], strides = [1, 1]} : vector<16x256xf32> to vector<2x256xf32>
    %365 = vector.extract_strided_slice %259 {offsets = [8, 0], sizes = [2, 256], strides = [1, 1]} : vector<16x256xf32> to vector<2x256xf32>
    %366 = arith.select %279, %364, %365 : vector<2x256xi1>, vector<2x256xf32>
    %367 = arith.addf %366, %363 : vector<2x256xf32>
    %368 = vector.extract_strided_slice %367 {offsets = [0, 0], sizes = [2, 128], strides = [1, 1]} : vector<2x256xf32> to vector<2x128xf32>
    %369 = arith.negf %368 : vector<2x128xf32>
    %370 = math.exp %369 : vector<2x128xf32>
    %cst_67 = arith.constant 1.000000e+00 : f32
    %371 = vector.broadcast %cst_67 : f32 to vector<2x128xf32>
    %372 = arith.addf %371, %370 : vector<2x128xf32>
    %373 = arith.divf %371, %372 : vector<2x128xf32>
    %374 = vector.extract_strided_slice %367 {offsets = [0, 128], sizes = [2, 64], strides = [1, 1]} : vector<2x256xf32> to vector<2x64xf32>
    %375 = math.tanh %374 : vector<2x64xf32>
    %376 = vector.extract_strided_slice %367 {offsets = [0, 192], sizes = [2, 64], strides = [1, 1]} : vector<2x256xf32> to vector<2x64xf32>
    %377 = arith.negf %376 : vector<2x64xf32>
    %378 = math.exp %377 : vector<2x64xf32>
    %cst_68 = arith.constant 1.000000e+00 : f32
    %379 = vector.broadcast %cst_68 : f32 to vector<2x64xf32>
    %380 = arith.addf %379, %378 : vector<2x64xf32>
    %381 = arith.divf %379, %380 : vector<2x64xf32>
    %382 = vector.extract_strided_slice %373 {offsets = [0, 64], sizes = [2, 64], strides = [1, 1]} : vector<2x128xf32> to vector<2x64xf32>
    %383 = arith.mulf %382, %360 : vector<2x64xf32>
    %384 = vector.extract_strided_slice %373 {offsets = [0, 0], sizes = [2, 64], strides = [1, 1]} : vector<2x128xf32> to vector<2x64xf32>
    %385 = arith.mulf %384, %375 : vector<2x64xf32>
    %386 = arith.addf %383, %385 : vector<2x64xf32>
    %387 = math.tanh %386 : vector<2x64xf32>
    %388 = arith.mulf %381, %387 : vector<2x64xf32>
    %cst_69 = arith.constant dense<0.000000e+00> : vector<2x256xf32>
    %389 = tpu.matmul %388, %260, %cst_69 {dimension_numbers = #tpu.dot_dimension_numbers<[1], [0], [0], [1], [0, 0, 1, 1], [], []>} : vector<2x64xf32>, vector<64x256xf32>, vector<2x256xf32> -> vector<2x256xf32>
    %390 = vector.extract_strided_slice %259 {offsets = [8, 0], sizes = [2, 256], strides = [1, 1]} : vector<16x256xf32> to vector<2x256xf32>
    %391 = vector.extract_strided_slice %259 {offsets = [6, 0], sizes = [2, 256], strides = [1, 1]} : vector<16x256xf32> to vector<2x256xf32>
    %392 = arith.select %279, %390, %391 : vector<2x256xi1>, vector<2x256xf32>
    %393 = arith.addf %392, %389 : vector<2x256xf32>
    %394 = vector.extract_strided_slice %393 {offsets = [0, 0], sizes = [2, 128], strides = [1, 1]} : vector<2x256xf32> to vector<2x128xf32>
    %395 = arith.negf %394 : vector<2x128xf32>
    %396 = math.exp %395 : vector<2x128xf32>
    %cst_70 = arith.constant 1.000000e+00 : f32
    %397 = vector.broadcast %cst_70 : f32 to vector<2x128xf32>
    %398 = arith.addf %397, %396 : vector<2x128xf32>
    %399 = arith.divf %397, %398 : vector<2x128xf32>
    %400 = vector.extract_strided_slice %393 {offsets = [0, 128], sizes = [2, 64], strides = [1, 1]} : vector<2x256xf32> to vector<2x64xf32>
    %401 = math.tanh %400 : vector<2x64xf32>
    %402 = vector.extract_strided_slice %393 {offsets = [0, 192], sizes = [2, 64], strides = [1, 1]} : vector<2x256xf32> to vector<2x64xf32>
    %403 = arith.negf %402 : vector<2x64xf32>
    %404 = math.exp %403 : vector<2x64xf32>
    %cst_71 = arith.constant 1.000000e+00 : f32
    %405 = vector.broadcast %cst_71 : f32 to vector<2x64xf32>
    %406 = arith.addf %405, %404 : vector<2x64xf32>
    %407 = arith.divf %405, %406 : vector<2x64xf32>
    %408 = vector.extract_strided_slice %399 {offsets = [0, 64], sizes = [2, 64], strides = [1, 1]} : vector<2x128xf32> to vector<2x64xf32>
    %409 = arith.mulf %408, %386 : vector<2x64xf32>
    %410 = vector.extract_strided_slice %399 {offsets = [0, 0], sizes = [2, 64], strides = [1, 1]} : vector<2x128xf32> to vector<2x64xf32>
    %411 = arith.mulf %410, %401 : vector<2x64xf32>
    %412 = arith.addf %409, %411 : vector<2x64xf32>
    %413 = math.tanh %412 : vector<2x64xf32>
    %414 = arith.mulf %407, %413 : vector<2x64xf32>
    %cst_72 = arith.constant dense<0.000000e+00> : vector<2x256xf32>
    %415 = tpu.matmul %414, %260, %cst_72 {dimension_numbers = #tpu.dot_dimension_numbers<[1], [0], [0], [1], [0, 0, 1, 1], [], []>} : vector<2x64xf32>, vector<64x256xf32>, vector<2x256xf32> -> vector<2x256xf32>
    %416 = vector.extract_strided_slice %259 {offsets = [10, 0], sizes = [2, 256], strides = [1, 1]} : vector<16x256xf32> to vector<2x256xf32>
    %417 = vector.extract_strided_slice %259 {offsets = [4, 0], sizes = [2, 256], strides = [1, 1]} : vector<16x256xf32> to vector<2x256xf32>
    %418 = arith.select %279, %416, %417 : vector<2x256xi1>, vector<2x256xf32>
    %419 = arith.addf %418, %415 : vector<2x256xf32>
    %420 = vector.extract_strided_slice %419 {offsets = [0, 0], sizes = [2, 128], strides = [1, 1]} : vector<2x256xf32> to vector<2x128xf32>
    %421 = arith.negf %420 : vector<2x128xf32>
    %422 = math.exp %421 : vector<2x128xf32>
    %cst_73 = arith.constant 1.000000e+00 : f32
    %423 = vector.broadcast %cst_73 : f32 to vector<2x128xf32>
    %424 = arith.addf %423, %422 : vector<2x128xf32>
    %425 = arith.divf %423, %424 : vector<2x128xf32>
    %426 = vector.extract_strided_slice %419 {offsets = [0, 128], sizes = [2, 64], strides = [1, 1]} : vector<2x256xf32> to vector<2x64xf32>
    %427 = math.tanh %426 : vector<2x64xf32>
    %428 = vector.extract_strided_slice %419 {offsets = [0, 192], sizes = [2, 64], strides = [1, 1]} : vector<2x256xf32> to vector<2x64xf32>
    %429 = arith.negf %428 : vector<2x64xf32>
    %430 = math.exp %429 : vector<2x64xf32>
    %cst_74 = arith.constant 1.000000e+00 : f32
    %431 = vector.broadcast %cst_74 : f32 to vector<2x64xf32>
    %432 = arith.addf %431, %430 : vector<2x64xf32>
    %433 = arith.divf %431, %432 : vector<2x64xf32>
    %434 = vector.extract_strided_slice %425 {offsets = [0, 64], sizes = [2, 64], strides = [1, 1]} : vector<2x128xf32> to vector<2x64xf32>
    %435 = arith.mulf %434, %412 : vector<2x64xf32>
    %436 = vector.extract_strided_slice %425 {offsets = [0, 0], sizes = [2, 64], strides = [1, 1]} : vector<2x128xf32> to vector<2x64xf32>
    %437 = arith.mulf %436, %427 : vector<2x64xf32>
    %438 = arith.addf %435, %437 : vector<2x64xf32>
    %439 = math.tanh %438 : vector<2x64xf32>
    %440 = arith.mulf %433, %439 : vector<2x64xf32>
    %cst_75 = arith.constant dense<0.000000e+00> : vector<2x256xf32>
    %441 = tpu.matmul %440, %260, %cst_75 {dimension_numbers = #tpu.dot_dimension_numbers<[1], [0], [0], [1], [0, 0, 1, 1], [], []>} : vector<2x64xf32>, vector<64x256xf32>, vector<2x256xf32> -> vector<2x256xf32>
    %442 = vector.extract_strided_slice %259 {offsets = [12, 0], sizes = [2, 256], strides = [1, 1]} : vector<16x256xf32> to vector<2x256xf32>
    %443 = vector.extract_strided_slice %259 {offsets = [2, 0], sizes = [2, 256], strides = [1, 1]} : vector<16x256xf32> to vector<2x256xf32>
    %444 = arith.select %279, %442, %443 : vector<2x256xi1>, vector<2x256xf32>
    %445 = arith.addf %444, %441 : vector<2x256xf32>
    %446 = vector.extract_strided_slice %445 {offsets = [0, 0], sizes = [2, 128], strides = [1, 1]} : vector<2x256xf32> to vector<2x128xf32>
    %447 = arith.negf %446 : vector<2x128xf32>
    %448 = math.exp %447 : vector<2x128xf32>
    %cst_76 = arith.constant 1.000000e+00 : f32
    %449 = vector.broadcast %cst_76 : f32 to vector<2x128xf32>
    %450 = arith.addf %449, %448 : vector<2x128xf32>
    %451 = arith.divf %449, %450 : vector<2x128xf32>
    %452 = vector.extract_strided_slice %445 {offsets = [0, 128], sizes = [2, 64], strides = [1, 1]} : vector<2x256xf32> to vector<2x64xf32>
    %453 = math.tanh %452 : vector<2x64xf32>
    %454 = vector.extract_strided_slice %445 {offsets = [0, 192], sizes = [2, 64], strides = [1, 1]} : vector<2x256xf32> to vector<2x64xf32>
    %455 = arith.negf %454 : vector<2x64xf32>
    %456 = math.exp %455 : vector<2x64xf32>
    %cst_77 = arith.constant 1.000000e+00 : f32
    %457 = vector.broadcast %cst_77 : f32 to vector<2x64xf32>
    %458 = arith.addf %457, %456 : vector<2x64xf32>
    %459 = arith.divf %457, %458 : vector<2x64xf32>
    %460 = vector.extract_strided_slice %451 {offsets = [0, 64], sizes = [2, 64], strides = [1, 1]} : vector<2x128xf32> to vector<2x64xf32>
    %461 = arith.mulf %460, %438 : vector<2x64xf32>
    %462 = vector.extract_strided_slice %451 {offsets = [0, 0], sizes = [2, 64], strides = [1, 1]} : vector<2x128xf32> to vector<2x64xf32>
    %463 = arith.mulf %462, %453 : vector<2x64xf32>
    %464 = arith.addf %461, %463 : vector<2x64xf32>
    %465 = math.tanh %464 : vector<2x64xf32>
    %466 = arith.mulf %459, %465 : vector<2x64xf32>
    %cst_78 = arith.constant dense<0.000000e+00> : vector<2x256xf32>
    %467 = tpu.matmul %466, %260, %cst_78 {dimension_numbers = #tpu.dot_dimension_numbers<[1], [0], [0], [1], [0, 0, 1, 1], [], []>} : vector<2x64xf32>, vector<64x256xf32>, vector<2x256xf32> -> vector<2x256xf32>
    %468 = vector.extract_strided_slice %259 {offsets = [14, 0], sizes = [2, 256], strides = [1, 1]} : vector<16x256xf32> to vector<2x256xf32>
    %469 = vector.extract_strided_slice %259 {offsets = [0, 0], sizes = [2, 256], strides = [1, 1]} : vector<16x256xf32> to vector<2x256xf32>
    %470 = arith.select %279, %468, %469 : vector<2x256xi1>, vector<2x256xf32>
    %471 = arith.addf %470, %467 : vector<2x256xf32>
    %472 = vector.extract_strided_slice %471 {offsets = [0, 0], sizes = [2, 128], strides = [1, 1]} : vector<2x256xf32> to vector<2x128xf32>
    %473 = arith.negf %472 : vector<2x128xf32>
    %474 = math.exp %473 : vector<2x128xf32>
    %cst_79 = arith.constant 1.000000e+00 : f32
    %475 = vector.broadcast %cst_79 : f32 to vector<2x128xf32>
    %476 = arith.addf %475, %474 : vector<2x128xf32>
    %477 = arith.divf %475, %476 : vector<2x128xf32>
    %478 = vector.extract_strided_slice %471 {offsets = [0, 128], sizes = [2, 64], strides = [1, 1]} : vector<2x256xf32> to vector<2x64xf32>
    %479 = math.tanh %478 : vector<2x64xf32>
    %480 = vector.extract_strided_slice %471 {offsets = [0, 192], sizes = [2, 64], strides = [1, 1]} : vector<2x256xf32> to vector<2x64xf32>
    %481 = arith.negf %480 : vector<2x64xf32>
    %482 = math.exp %481 : vector<2x64xf32>
    %cst_80 = arith.constant 1.000000e+00 : f32
    %483 = vector.broadcast %cst_80 : f32 to vector<2x64xf32>
    %484 = arith.addf %483, %482 : vector<2x64xf32>
    %485 = arith.divf %483, %484 : vector<2x64xf32>
    %486 = vector.extract_strided_slice %477 {offsets = [0, 64], sizes = [2, 64], strides = [1, 1]} : vector<2x128xf32> to vector<2x64xf32>
    %487 = arith.mulf %486, %464 : vector<2x64xf32>
    %488 = vector.extract_strided_slice %477 {offsets = [0, 0], sizes = [2, 64], strides = [1, 1]} : vector<2x128xf32> to vector<2x64xf32>
    %489 = arith.mulf %488, %479 : vector<2x64xf32>
    %490 = arith.addf %487, %489 : vector<2x64xf32>
    %491 = math.tanh %490 : vector<2x64xf32>
    %492 = arith.mulf %485, %491 : vector<2x64xf32>
    %493 = arith.select %282, %310, %492 : vector<2x64xi1>, vector<2x64xf32>
    %494 = arith.select %282, %336, %466 : vector<2x64xi1>, vector<2x64xf32>
    %495 = arith.select %282, %362, %440 : vector<2x64xi1>, vector<2x64xf32>
    %496 = arith.select %282, %388, %414 : vector<2x64xi1>, vector<2x64xf32>
    %497 = arith.select %282, %414, %388 : vector<2x64xi1>, vector<2x64xf32>
    %498 = arith.select %282, %440, %362 : vector<2x64xi1>, vector<2x64xf32>
    %499 = arith.select %282, %466, %336 : vector<2x64xi1>, vector<2x64xf32>
    %500 = arith.select %282, %492, %310 : vector<2x64xi1>, vector<2x64xf32>
    %501 = tpu.concatenate %493, %494, %495, %496, %497, %498, %499, %500 in 0 : vector<2x64xf32>, vector<2x64xf32>, vector<2x64xf32>, vector<2x64xf32>, vector<2x64xf32>, vector<2x64xf32>, vector<2x64xf32>, vector<2x64xf32> -> vector<16x64xf32>
    %c0_81 = arith.constant 0 : index
    %c0_82 = arith.constant 0 : index
    %502 = vector.load %arg8[%c0_81, %c0_82] : memref<64x128xf32, #tpu.memory_space<vmem>>, vector<64x128xf32>
    %cst_83 = arith.constant dense<0.000000e+00> : vector<16x128xf32>
    %503 = tpu.matmul %501, %502, %cst_83 {dimension_numbers = #tpu.dot_dimension_numbers<[1], [0], [0], [1], [0, 0, 1, 1], [], []>} : vector<16x64xf32>, vector<64x128xf32>, vector<16x128xf32> -> vector<16x128xf32>
    %c0_84 = arith.constant 0 : index
    %c0_85 = arith.constant 0 : index
    %504 = vector.load %arg9[%c0_84, %c0_85] : memref<1x128xf32, #tpu.memory_space<vmem>>, vector<1x128xf32>
    %505 = vector.broadcast %504 : vector<1x128xf32> to vector<16x128xf32>
    %506 = arith.addf %503, %505 : vector<16x128xf32>
    %c0_86 = arith.constant 0 : index
    %c0_87 = arith.constant 0 : index
    %507 = vector.load %arg10[%c0_86, %c0_87] : memref<16x128xf32, #tpu.memory_space<vmem>>, vector<16x128xf32>
    tpu.vector_store %arg10[%c0_86, %c0_87], %506 {strides = array<i32>} : memref<16x128xf32, #tpu.memory_space<vmem>>, vector<16x128xf32>,
    return
  }
}

</mosaic_0001>

<llo_original>
// kernel: tpu_custom_call.1
$region0: #{tpu_custom_call.1}
  #allocation0 [shape = 'u32[]', space=smem, size = 0x4, offset = 0x4, fixed_abs, tag = 'smem constant byte address 0x4 - core index']
  #allocation1 [shape = 'u32[144,128]{1,0:T(1,128)}', space=vmem, size = 0x12000, scoped, tag = 'internal scratch']
  %s0 = inlined_call_operand.vmem [shape: s32[16,1], index: 0, kind: input, shape index: {}]
  %s1 = inlined_call_operand.vmem [shape: f32[128,32], index: 1, kind: input, shape index: {}]
  %s2 = inlined_call_operand.hbm [shape: f32[32,256], index: 2, kind: input, shape index: {}]
  %s3 = inlined_call_operand.vmem [shape: f32[64,256], index: 3, kind: input, shape index: {}]
  %s4 = inlined_call_operand.vmem [shape: f32[1,256], index: 4, kind: input, shape index: {}]
  %s5 = inlined_call_operand.hbm [shape: f32[64,256], index: 5, kind: input, shape index: {}]
  %s6 = inlined_call_operand.hbm [shape: f32[64,256], index: 6, kind: input, shape index: {}]
  %s7 = inlined_call_operand.vmem [shape: f32[1,256], index: 7, kind: input, shape index: {}]
  %s8 = inlined_call_operand.hbm [shape: f32[64,128], index: 8, kind: input, shape index: {}]
  %s9 = inlined_call_operand.vmem [shape: f32[1,128], index: 9, kind: input, shape index: {}]
  %s10 = inlined_call_operand.hbm [shape: f32[16,128], index: 10, kind: output, shape index: {}]
  %s11 = sld [smem:[#allocation0]]
  $region66: #{tpu_custom_call.1} parent=0
    _
  %s13 = ssub.s32 1, %s11
  %s14 = scalar_select 0, %s13, %s11
  $region1: #{tpu_custom_call.1} parent=0
    #allocation2 [shape = 'u8[32768]{0}', space=vmem, size = 0x8000, scoped, tag = 'input window, operand 2, single buffered']
    #allocation3 [shape = 's32[1]{0}', space=sflag, size = 0x4, scoped, tag = 'scoped memory for tpu_custom_call.1']
    #allocation4 [shape = 's32[1]{0}', space=sflag, size = 0x4, scoped, tag = 'scoped memory for tpu_custom_call.1']
    #allocation5 [shape = 'u8[65536]{0}', space=vmem, size = 0x10000, scoped, tag = 'input window, operand 5, single buffered']
    #allocation6 [shape = 's32[1]{0}', space=sflag, size = 0x4, scoped, tag = 'scoped memory for tpu_custom_call.1']
    #allocation7 [shape = 'u8[65536]{0}', space=vmem, size = 0x10000, scoped, tag = 'input window, operand 6, single buffered']
    #allocation8 [shape = 'u8[32768]{0}', space=vmem, size = 0x8000, scoped, tag = 'input window, operand 8, single buffered']
    #allocation9 [shape = 's32[1]{0}', space=sflag, size = 0x4, scoped, tag = 'scoped memory for tpu_custom_call.1']
    #allocation10 [shape = 'u8[8192]{0}', space=vmem, size = 0x2000, scoped, tag = 'output window, operand 0, single buffered']
    %15 = vsyncpa [#allocation3], 0
    %16 = vsyncpa [#allocation6], 0
    %17 = vsyncpa [#allocation9], 0
    %18 = vsyncpa [#allocation4], 0
    // Predicated region
    $region2: #{tpu_custom_call.1} parent=1 // pred_check
      _
    $region3: #{tpu_custom_call.1} parent=1 // pred_check_branch
      %20 = sbr.rel (0) target = $region5
    $region4: #{tpu_custom_call.1} parent=1 // pred_region
      _
    $region5: #{tpu_custom_call.1} parent=1 // pred_fallthru
      _
    // Predicated region
    $region6: #{tpu_custom_call.1} parent=1 // pred_check
      _
    $region7: #{tpu_custom_call.1} parent=1 // pred_check_branch
      %22 = sbr.rel (0) target = $region9
    $region8: #{tpu_custom_call.1} parent=1 // pred_region
      _
    $region9: #{tpu_custom_call.1} parent=1 // pred_fallthru
      _
    // Predicated region
    $region10: #{tpu_custom_call.1} parent=1 // pred_check
      _
    $region11: #{tpu_custom_call.1} parent=1 // pred_check_branch
      %24 = sbr.rel (0) target = $region13
    $region12: #{tpu_custom_call.1} parent=1 // pred_region
      %s26 = ssub.s32 1024, 1024
      %27 = vsyncadd [#allocation3], %s26
      %s28 = sshll.u32 [#allocation2], 4
      %s29 = int_to_ptr.vmem [resolvable:$true] %s28
      %34 = dma.hbm_to_vmem [thread:$0]  %s2, 1024, %s29, [#allocation3], 256, 256, 16
    $region13: #{tpu_custom_call.1} parent=1 // pred_fallthru
      _
    // Predicated region
    $region14: #{tpu_custom_call.1} parent=1 // pred_check
      _
    $region15: #{tpu_custom_call.1} parent=1 // pred_check_branch
      %36 = sbr.rel (0) target = $region17
    $region16: #{tpu_custom_call.1} parent=1 // pred_region
      _
    $region17: #{tpu_custom_call.1} parent=1 // pred_fallthru
      _
    // Predicated region
    $region18: #{tpu_custom_call.1} parent=1 // pred_check
      _
    $region19: #{tpu_custom_call.1} parent=1 // pred_check_branch
      %38 = sbr.rel (0) target = $region21
    $region20: #{tpu_custom_call.1} parent=1 // pred_region
      _
    $region21: #{tpu_custom_call.1} parent=1 // pred_fallthru
      _
    // Predicated region
    $region22: #{tpu_custom_call.1} parent=1 // pred_check
      _
    $region23: #{tpu_custom_call.1} parent=1 // pred_check_branch
      %40 = sbr.rel (0) target = $region25
    $region24: #{tpu_custom_call.1} parent=1 // pred_region
      %s42 = ssub.s32 2048, 2048
      %43 = vsyncadd [#allocation6], %s42
      %s44 = sshll.u32 [#allocation5], 4
      %s45 = int_to_ptr.vmem [resolvable:$true] %s44
      %50 = dma.hbm_to_vmem [thread:$0]  %s5, 2048, %s45, [#allocation6], 256, 256, 16
    $region25: #{tpu_custom_call.1} parent=1 // pred_fallthru
      _
    // Predicated region
    $region26: #{tpu_custom_call.1} parent=1 // pred_check
      _
    $region27: #{tpu_custom_call.1} parent=1 // pred_check_branch
      %52 = sbr.rel (0) target = $region29
    $region28: #{tpu_custom_call.1} parent=1 // pred_region
      %s54 = ssub.s32 2048, 2048
      %55 = vsyncadd [#allocation6], %s54
      %s56 = sshll.u32 [#allocation7], 4
      %s57 = int_to_ptr.vmem [resolvable:$true] %s56
      %62 = dma.hbm_to_vmem [thread:$0]  %s6, 2048, %s57, [#allocation6], 256, 256, 16
    $region29: #{tpu_custom_call.1} parent=1 // pred_fallthru
      _
    // Predicated region
    $region30: #{tpu_custom_call.1} parent=1 // pred_check
      _
    $region31: #{tpu_custom_call.1} parent=1 // pred_check_branch
      %64 = sbr.rel (0) target = $region33
    $region32: #{tpu_custom_call.1} parent=1 // pred_region
      _
    $region33: #{tpu_custom_call.1} parent=1 // pred_fallthru
      _
    // Predicated region
    $region34: #{tpu_custom_call.1} parent=1 // pred_check
      _
    $region35: #{tpu_custom_call.1} parent=1 // pred_check_branch
      %66 = sbr.rel (0) target = $region37
    $region36: #{tpu_custom_call.1} parent=1 // pred_region
      %s68 = ssub.s32 1024, 1024
      %69 = vsyncadd [#allocation9], %s68
      %s70 = sshll.u32 [#allocation8], 4
      %s71 = int_to_ptr.vmem [resolvable:$true] %s70
      %76 = dma.hbm_to_vmem [thread:$0]  %s8, 1024, %s71, [#allocation9], 128, 128, 8
    $region37: #{tpu_custom_call.1} parent=1 // pred_fallthru
      _
    // Predicated region
    $region38: #{tpu_custom_call.1} parent=1 // pred_check
      _
    $region39: #{tpu_custom_call.1} parent=1 // pred_check_branch
      %78 = sbr.rel (0) target = $region41
    $region40: #{tpu_custom_call.1} parent=1 // pred_region
      _
    $region41: #{tpu_custom_call.1} parent=1 // pred_fallthru
      _
    // Predicated region
    $region42: #{tpu_custom_call.1} parent=1 // pred_check
      _
    $region43: #{tpu_custom_call.1} parent=1 // pred_check_branch
      %80 = sbr.rel (0) target = $region45
    $region44: #{tpu_custom_call.1} parent=1 // pred_region
      %81 = dma.done [#allocation3], 1024
    $region45: #{tpu_custom_call.1} parent=1 // pred_fallthru
      _
    // Predicated region
    $region46: #{tpu_custom_call.1} parent=1 // pred_check
      _
    $region47: #{tpu_custom_call.1} parent=1 // pred_check_branch
      %83 = sbr.rel (0) target = $region49
    $region48: #{tpu_custom_call.1} parent=1 // pred_region
      %84 = dma.done [#allocation6], 2048
    $region49: #{tpu_custom_call.1} parent=1 // pred_fallthru
      _
    // Predicated region
    $region50: #{tpu_custom_call.1} parent=1 // pred_check
      _
    $region51: #{tpu_custom_call.1} parent=1 // pred_check_branch
      %86 = sbr.rel (0) target = $region53
    $region52: #{tpu_custom_call.1} parent=1 // pred_region
      %87 = dma.done [#allocation6], 2048
    $region53: #{tpu_custom_call.1} parent=1 // pred_fallthru
      _
    // Predicated region
    $region54: #{tpu_custom_call.1} parent=1 // pred_check
      _
    $region55: #{tpu_custom_call.1} parent=1 // pred_check_branch
      %89 = sbr.rel (0) target = $region57
    $region56: #{tpu_custom_call.1} parent=1 // pred_region
      %90 = dma.done [#allocation9], 1024
    $region57: #{tpu_custom_call.1} parent=1 // pred_fallthru
      _
    %v91 = vld [vmem:[%s0] sm:$0xff]
    %v92 = vld [vmem:[%s0 + $0x8] sm:$0xff]
    %v93 = vlaneseq
    %v94 = vand.u32 %v93, 127
    %95 = vset.pattern.permute.xlu0 0
    %96 = vperm.xlu0 %95, %v91
    %v97 = vpop.permute.xlu0 %96
    %98 = vset.pattern.permute.xlu0 0
    %99 = vperm.xlu0 %98, %v92
    %v100 = vpop.permute.xlu0 %99
    %vm101 = vcmp.eq.s32.totalorder %v94, %v97
    %vm102 = vcmp.eq.s32.totalorder %v94, %v100
    %v103 = vsel %vm101, 1, 0
    %v104 = vsel %vm102, 1, 0
    %v105 = vcvt.s32.f32 %v103
    %v106 = vcvt.s32.f32 %v104
    %v107 = vld [vmem:[%s1] sm:$0xff]
    %v108 = vld [vmem:[%s1 + $0x8] sm:$0xff]
    %v109 = vld [vmem:[%s1 + $0x10] sm:$0xff]
    %v110 = vld [vmem:[%s1 + $0x18] sm:$0xff]
    %v111 = vld [vmem:[%s1 + $0x20] sm:$0xff]
    %v112 = vld [vmem:[%s1 + $0x28] sm:$0xff]
    %v113 = vld [vmem:[%s1 + $0x30] sm:$0xff]
    %v114 = vld [vmem:[%s1 + $0x38] sm:$0xff]
    %v115 = vld [vmem:[%s1 + $0x40] sm:$0xff]
    %v116 = vld [vmem:[%s1 + $0x48] sm:$0xff]
    %v117 = vld [vmem:[%s1 + $0x50] sm:$0xff]
    %v118 = vld [vmem:[%s1 + $0x58] sm:$0xff]
    %v119 = vld [vmem:[%s1 + $0x60] sm:$0xff]
    %v120 = vld [vmem:[%s1 + $0x68] sm:$0xff]
    %v121 = vld [vmem:[%s1 + $0x70] sm:$0xff]
    %v122 = vld [vmem:[%s1 + $0x78] sm:$0xff]
    %123 = vmatprep.subr.mxu0 0.0
    %124 = vmatpush1.msra.mxu0 %v122
    %125 = vmatprep.subr.mxu0 0.0
    %126 = vmatpush1.msra.mxu0 %v121
    %127 = vmatprep.subr.mxu0 0.0
    %128 = vmatpush1.msra.mxu0 %v120
    %129 = vmatprep.subr.mxu0 0.0
    %130 = vmatpush1.msra.mxu0 %v119
    %131 = vmatprep.subr.mxu0 0.0
    %132 = vmatpush1.msra.mxu0 %v118
    %133 = vmatprep.subr.mxu0 0.0
    %134 = vmatpush1.msra.mxu0 %v117
    %135 = vmatprep.subr.mxu0 0.0
    %136 = vmatpush1.msra.mxu0 %v116
    %137 = vmatprep.subr.mxu0 0.0
    %138 = vmatpush1.msra.mxu0 %v115
    %139 = vmatprep.subr.mxu0 0.0
    %140 = vmatpush1.msra.mxu0 %v114
    %141 = vmatprep.subr.mxu0 0.0
    %142 = vmatpush1.msra.mxu0 %v113
    %143 = vmatprep.subr.mxu0 0.0
    %144 = vmatpush1.msra.mxu0 %v112
    %145 = vmatprep.subr.mxu0 0.0
    %146 = vmatpush1.msra.mxu0 %v111
    %147 = vmatprep.subr.mxu0 0.0
    %148 = vmatpush1.msra.mxu0 %v110
    %149 = vmatprep.subr.mxu0 0.0
    %150 = vmatpush1.msra.mxu0 %v109
    %151 = vmatprep.subr.mxu0 0.0
    %152 = vmatpush1.msra.mxu0 %v108
    %153 = vmatprep.subr.mxu0 0.0
    %154 = vmatpush1.msra.mxu0 %v107
    %155 = vmatprep.subr.mxu0 0.0
    %156 = vmatpush2.msra.mxu0 0.0
    %157 = vmatprep.subr.mxu0 0.0
    %158 = vmatpush2.msra.mxu0 0.0
    %159 = vmatprep.subr.mxu0 0.0
    %160 = vmatpush2.msra.mxu0 0.0
    %161 = vmatprep.subr.mxu0 0.0
    %162 = vmatpush2.msra.mxu0 0.0
    %163 = vmatprep.subr.mxu0 0.0
    %164 = vmatpush2.msra.mxu0 0.0
    %165 = vmatprep.subr.mxu0 0.0
    %166 = vmatpush2.msra.mxu0 0.0
    %167 = vmatprep.subr.mxu0 0.0
    %168 = vmatpush2.msra.mxu0 0.0
    %169 = vmatprep.subr.mxu0 0.0
    %170 = vmatpush2.msra.mxu0 0.0
    %171 = vmatprep.subr.mxu0 0.0
    %172 = vmatpush2.msra.mxu0 0.0
    %173 = vmatprep.subr.mxu0 0.0
    %174 = vmatpush2.msra.mxu0 0.0
    %175 = vmatprep.subr.mxu0 0.0
    %176 = vmatpush2.msra.mxu0 0.0
    %177 = vmatprep.subr.mxu0 0.0
    %178 = vmatpush2.msra.mxu0 0.0
    %179 = vmatprep.subr.mxu0 0.0
    %180 = vmatpush2.msra.mxu0 0.0
    %181 = vmatprep.subr.mxu0 0.0
    %182 = vmatpush2.msra.mxu0 0.0
    %183 = vmatprep.subr.mxu0 0.0
    %184 = vmatpush2.msra.mxu0 0.0
    %185 = vmatprep.subr.mxu0 0.0
    %186 = vmatpush2.msra.mxu0 0.0
    %187 = vmatprep.mubr.f32.mxu0 0.0
    %188 = vmatmul.mubr.f32.gmra.mxu0 %v105
    %v189 = vpop.f32.mrf.mxu0
    %v190 = vadd.f32 0.0, %v189
    %v191 = vpop.f32.mrf.mxu0
    %192 = vmatprep.mubr.f32.mxu0 0.0
    %193 = vmatmul.mubr.f32.gmra.mxu0 %v106
    %v194 = vpop.f32.mrf.mxu0
    %v195 = vadd.f32 0.0, %v194
    %v196 = vpop.f32.mrf.mxu0
    %197 = vdwg.mxu0
    %v198 = vld [vmem:[#allocation2] sm:$0xff]
    %v199 = vld [vmem:[#allocation2 + $0x8] sm:$0xff]
    %v200 = vld [vmem:[#allocation2 + $0x10] sm:$0xff]
    %v201 = vld [vmem:[#allocation2 + $0x18] sm:$0xff]
    %v202 = vld [vmem:[#allocation2 + $0x20] sm:$0xff]
    %v203 = vld [vmem:[#allocation2 + $0x28] sm:$0xff]
    %v204 = vld [vmem:[#allocation2 + $0x30] sm:$0xff]
    %v205 = vld [vmem:[#allocation2 + $0x38] sm:$0xff]
    %v206 = vld [vmem:[%s4] sm:$0x3]
    %v208 = vlaneseq
    %v209 = vshrl.u32 %v208, 7
    %v210 = vsub.s32 0, %v209
    %v211 = vrot.slane %v206, %v210
    %v212 = vlaneseq
    %v213 = vshrl.u32 %v212, 7
    %v214 = vsub.s32 1, %v213
    %v215 = vrot.slane %v206, %v214
    %vm218 = vcmask 261120
    %v220 = vsel %vm218, %v190, 0
    %v223 = vsel %vm218, %v195, 0
    %225 = vmatprep.subr.mxu0 0.0
    %226 = vmatpush1.msra.mxu0 0.0
    %227 = vmatprep.subr.mxu0 0.0
    %228 = vmatpush1.msra.mxu0 0.0
    %229 = vmatprep.subr.mxu0 0.0
    %230 = vmatpush1.msra.mxu0 0.0
    %231 = vmatprep.subr.mxu0 0.0
    %232 = vmatpush1.msra.mxu0 0.0
    %233 = vmatprep.subr.mxu0 0.0
    %234 = vmatpush1.msra.mxu0 0.0
    %235 = vmatprep.subr.mxu0 0.0
    %236 = vmatpush1.msra.mxu0 0.0
    %237 = vmatprep.subr.mxu0 0.0
    %238 = vmatpush1.msra.mxu0 0.0
    %239 = vmatprep.subr.mxu0 0.0
    %240 = vmatpush1.msra.mxu0 0.0
    %241 = vmatprep.subr.mxu0 0.0
    %242 = vmatpush1.msra.mxu0 0.0
    %243 = vmatprep.subr.mxu0 0.0
    %244 = vmatpush1.msra.mxu0 0.0
    %245 = vmatprep.subr.mxu0 0.0
    %246 = vmatpush1.msra.mxu0 0.0
    %247 = vmatprep.subr.mxu0 0.0
    %248 = vmatpush1.msra.mxu0 0.0
    %249 = vmatprep.subr.mxu0 %v205
    %250 = vmatpush1.msra.mxu0 %v204
    %251 = vmatprep.subr.mxu0 %v203
    %252 = vmatpush1.msra.mxu0 %v202
    %253 = vmatprep.subr.mxu0 %v201
    %254 = vmatpush1.msra.mxu0 %v200
    %255 = vmatprep.subr.mxu0 %v199
    %256 = vmatpush1.msra.mxu0 %v198
    %257 = vmatprep.subr.mxu0 0.0
    %258 = vmatpush2.msra.mxu0 0.0
    %259 = vmatprep.subr.mxu0 0.0
    %260 = vmatpush2.msra.mxu0 0.0
    %261 = vmatprep.subr.mxu0 0.0
    %262 = vmatpush2.msra.mxu0 0.0
    %263 = vmatprep.subr.mxu0 0.0
    %264 = vmatpush2.msra.mxu0 0.0
    %265 = vmatprep.subr.mxu0 0.0
    %266 = vmatpush2.msra.mxu0 0.0
    %267 = vmatprep.subr.mxu0 0.0
    %268 = vmatpush2.msra.mxu0 0.0
    %269 = vmatprep.subr.mxu0 0.0
    %270 = vmatpush2.msra.mxu0 0.0
    %271 = vmatprep.subr.mxu0 0.0
    %272 = vmatpush2.msra.mxu0 0.0
    %273 = vmatprep.subr.mxu0 0.0
    %274 = vmatpush2.msra.mxu0 0.0
    %275 = vmatprep.subr.mxu0 0.0
    %276 = vmatpush2.msra.mxu0 0.0
    %277 = vmatprep.subr.mxu0 0.0
    %278 = vmatpush2.msra.mxu0 0.0
    %279 = vmatprep.subr.mxu0 0.0
    %280 = vmatpush2.msra.mxu0 0.0
    %281 = vmatprep.subr.mxu0 0.0
    %282 = vmatpush2.msra.mxu0 0.0
    %283 = vmatprep.subr.mxu0 0.0
    %284 = vmatpush2.msra.mxu0 0.0
    %285 = vmatprep.subr.mxu0 0.0
    %286 = vmatpush2.msra.mxu0 0.0
    %287 = vmatprep.subr.mxu0 0.0
    %288 = vmatpush2.msra.mxu0 0.0
    %289 = vmatprep.mubr.f32.mxu0 0.0
    %290 = vmatmul.mubr.f32.gmra.mxu0 %v220
    %v291 = vpop.f32.mrf.mxu0
    %v292 = vadd.f32 %v211, %v291
    %v293 = vpop.f32.mrf.mxu0
    %v294 = vadd.f32 %v215, %v293
    %295 = vmatprep.mubr.f32.mxu0 0.0
    %296 = vmatmul.mubr.f32.gmra.mxu0 %v223
    %v297 = vpop.f32.mrf.mxu0
    %v298 = vadd.f32 %v211, %v297
    %v299 = vpop.f32.mrf.mxu0
    %v300 = vadd.f32 %v215, %v299
    %301 = vdwg.mxu0
    %v302 = vld [vmem:[%s3] sm:$0xff]
    %v303 = vld [vmem:[%s3 + $0x8] sm:$0xff]
    %v304 = vld [vmem:[%s3 + $0x10] sm:$0xff]
    %v305 = vld [vmem:[%s3 + $0x18] sm:$0xff]
    %v306 = vld [vmem:[%s3 + $0x20] sm:$0xff]
    %v307 = vld [vmem:[%s3 + $0x28] sm:$0xff]
    %v308 = vld [vmem:[%s3 + $0x30] sm:$0xff]
    %v309 = vld [vmem:[%s3 + $0x38] sm:$0xff]
    %v310 = vld [vmem:[%s3 + $0x40] sm:$0xff]
    %v311 = vld [vmem:[%s3 + $0x48] sm:$0xff]
    %v312 = vld [vmem:[%s3 + $0x50] sm:$0xff]
    %v313 = vld [vmem:[%s3 + $0x58] sm:$0xff]
    %v314 = vld [vmem:[%s3 + $0x60] sm:$0xff]
    %v315 = vld [vmem:[%s3 + $0x68] sm:$0xff]
    %v316 = vld [vmem:[%s3 + $0x70] sm:$0xff]
    %v317 = vld [vmem:[%s3 + $0x78] sm:$0xff]
    %v318 = vadd.s32 %v94, 128
    %vm319 = vcmp.lt.s32.totalorder %v94, 0
    %v320 = vsub.s32 0, %v94
    %v321 = vsel %vm319, %v320, %v94
    %v322 = vshrl.u32 %v321, 6
    %v323 = vand.u32 %v321, 63
    %v324 = vsub.s32 0, %v323
    %v325 = vsel %vm319, %v324, %v323
    %vm326 = vcmp.lt.s32.totalorder %v318, 0
    %v327 = vsub.s32 0, %v318
    %v328 = vsel %vm326, %v327, %v318
    %v329 = vshrl.u32 %v328, 6
    %v330 = vand.u32 %v328, 63
    %v331 = vsub.s32 0, %v330
    %v332 = vsel %vm326, %v331, %v330
    %vm333 = vcmp.ne.s32.totalorder %v325, 0
    %vm334 = vcmp.ne.s32.totalorder %v332, 0
    %vm335 = vcmp.lt.s32.totalorder %v325, 0
    %vm336 = vcmp.lt.s32.totalorder %v332, 0
    %vm337 = vmand %vm335, %vm333
    %vm338 = vmand %vm336, %vm334
    %v339 = vadd.s32 %v325, 64
    %v340 = vadd.s32 %v332, 64
    %v341 = vsel %vm337, %v339, %v325
    %v342 = vsel %vm338, %v340, %v332
    %vm343 = vcmp.lt.s32.totalorder %v341, 32
    %vm344 = vcmp.lt.s32.totalorder %v342, 32
    %vm345 = vcmp.lt.s32.totalorder %v94, 32
    %vm346 = vcmask 523264
    %v348 = vsel %vm346, 0.0, 0
    %350 = vmatprep.subr.mxu0 0.0
    %351 = vmatpush1.msra.mxu0 0.0
    %352 = vmatprep.subr.mxu0 0.0
    %353 = vmatpush1.msra.mxu0 0.0
    %354 = vmatprep.subr.mxu0 0.0
    %355 = vmatpush1.msra.mxu0 0.0
    %356 = vmatprep.subr.mxu0 0.0
    %357 = vmatpush1.msra.mxu0 0.0
    %358 = vmatprep.subr.mxu0 0.0
    %359 = vmatpush1.msra.mxu0 0.0
    %360 = vmatprep.subr.mxu0 0.0
    %361 = vmatpush1.msra.mxu0 0.0
    %362 = vmatprep.subr.mxu0 0.0
    %363 = vmatpush1.msra.mxu0 0.0
    %364 = vmatprep.subr.mxu0 0.0
    %365 = vmatpush1.msra.mxu0 0.0
    %366 = vmatprep.subr.mxu0 %v317
    %367 = vmatpush1.msra.mxu0 %v316
    %368 = vmatprep.subr.mxu0 %v315
    %369 = vmatpush1.msra.mxu0 %v314
    %370 = vmatprep.subr.mxu0 %v313
    %371 = vmatpush1.msra.mxu0 %v312
    %372 = vmatprep.subr.mxu0 %v311
    %373 = vmatpush1.msra.mxu0 %v310
    %374 = vmatprep.subr.mxu0 %v309
    %375 = vmatpush1.msra.mxu0 %v308
    %376 = vmatprep.subr.mxu0 %v307
    %377 = vmatpush1.msra.mxu0 %v306
    %378 = vmatprep.subr.mxu0 %v305
    %379 = vmatpush1.msra.mxu0 %v304
    %380 = vmatprep.subr.mxu0 %v303
    %381 = vmatpush1.msra.mxu0 %v302
    %382 = vmatprep.subr.mxu0 0.0
    %383 = vmatpush2.msra.mxu0 0.0
    %384 = vmatprep.subr.mxu0 0.0
    %385 = vmatpush2.msra.mxu0 0.0
    %386 = vmatprep.subr.mxu0 0.0
    %387 = vmatpush2.msra.mxu0 0.0
    %388 = vmatprep.subr.mxu0 0.0
    %389 = vmatpush2.msra.mxu0 0.0
    %390 = vmatprep.subr.mxu0 0.0
    %391 = vmatpush2.msra.mxu0 0.0
    %392 = vmatprep.subr.mxu0 0.0
    %393 = vmatpush2.msra.mxu0 0.0
    %394 = vmatprep.subr.mxu0 0.0
    %395 = vmatpush2.msra.mxu0 0.0
    %396 = vmatprep.subr.mxu0 0.0
    %397 = vmatpush2.msra.mxu0 0.0
    %398 = vmatprep.subr.mxu0 0.0
    %399 = vmatpush2.msra.mxu0 0.0
    %400 = vmatprep.subr.mxu0 0.0
    %401 = vmatpush2.msra.mxu0 0.0
    %402 = vmatprep.subr.mxu0 0.0
    %403 = vmatpush2.msra.mxu0 0.0
    %404 = vmatprep.subr.mxu0 0.0
    %405 = vmatpush2.msra.mxu0 0.0
    %406 = vmatprep.subr.mxu0 0.0
    %407 = vmatpush2.msra.mxu0 0.0
    %408 = vmatprep.subr.mxu0 0.0
    %409 = vmatpush2.msra.mxu0 0.0
    %410 = vmatprep.subr.mxu0 0.0
    %411 = vmatpush2.msra.mxu0 0.0
    %412 = vmatprep.subr.mxu0 0.0
    %413 = vmatpush2.msra.mxu0 0.0
    %414 = vmatprep.mubr.f32.mxu0 0.0
    %415 = vmatmul.mubr.f32.gmra.mxu0 %v348
    %v416 = vpop.f32.mrf.mxu0
    %v417 = vadd.f32 0.0, %v416
    %v418 = vpop.f32.mrf.mxu0
    %v419 = vadd.f32 0.0, %v418
    %420 = vdwg.mxu0
    %v423 = vrot.slane %v298, 6
    %v424 = vrot.slane %v300, 6
    %v427 = vsel %vm343, %v292, %v423
    %v428 = vsel %vm344, %v294, %v424
    %v429 = vadd.f32 %v427, %v417
    %v430 = vadd.f32 %v428, %v419
    %v431 = vxor.u32 %v429, 2147483648
    %v432 = vmul.f32 %v431, 1.442695
    %v433 = vpow.pop %v432
    %v434 = vadd.f32 %v433, 1.0
    %v435 = vrcp.pop %v434
    %v436 = vmul.f32 1.0, %v435
    %v437 = vtanh.pop %v430
    %v438 = vxor.u32 %v430, 2147483648
    %v439 = vmul.f32 %v438, 1.442695
    %v440 = vpow.pop %v439
    %v441 = vadd.f32 %v440, 1.0
    %v442 = vrcp.pop %v441
    %v443 = vmul.f32 1.0, %v442
    %v444 = vmul.f32 %v436, 0.0
    %v445 = vmul.f32 %v436, %v437
    %447 = vrot.lane.b32.xlu0 %v445, 64
    %v448 = vpop.permute.xlu0 %447
    %v450 = vadd.f32 %v444, %v448
    %v451 = vtanh.pop %v450
    %v452 = vmul.f32 %v443, %v451
    %454 = vrot.lane.b32.xlu0 %v452, 64
    %v455 = vpop.permute.xlu0 %454
    %v456 = vsel %vm346, %v455, 0
    %458 = vmatprep.subr.mxu0 0.0
    %459 = vmatpush1.msra.mxu0 0.0
    %460 = vmatprep.subr.mxu0 0.0
    %461 = vmatpush1.msra.mxu0 0.0
    %462 = vmatprep.subr.mxu0 0.0
    %463 = vmatpush1.msra.mxu0 0.0
    %464 = vmatprep.subr.mxu0 0.0
    %465 = vmatpush1.msra.mxu0 0.0
    %466 = vmatprep.subr.mxu0 0.0
    %467 = vmatpush1.msra.mxu0 0.0
    %468 = vmatprep.subr.mxu0 0.0
    %469 = vmatpush1.msra.mxu0 0.0
    %470 = vmatprep.subr.mxu0 0.0
    %471 = vmatpush1.msra.mxu0 0.0
    %472 = vmatprep.subr.mxu0 0.0
    %473 = vmatpush1.msra.mxu0 0.0
    %474 = vmatprep.subr.mxu0 %v317
    %475 = vmatpush1.msra.mxu0 %v316
    %476 = vmatprep.subr.mxu0 %v315
    %477 = vmatpush1.msra.mxu0 %v314
    %478 = vmatprep.subr.mxu0 %v313
    %479 = vmatpush1.msra.mxu0 %v312
    %480 = vmatprep.subr.mxu0 %v311
    %481 = vmatpush1.msra.mxu0 %v310
    %482 = vmatprep.subr.mxu0 %v309
    %483 = vmatpush1.msra.mxu0 %v308
    %484 = vmatprep.subr.mxu0 %v307
    %485 = vmatpush1.msra.mxu0 %v306
    %486 = vmatprep.subr.mxu0 %v305
    %487 = vmatpush1.msra.mxu0 %v304
    %488 = vmatprep.subr.mxu0 %v303
    %489 = vmatpush1.msra.mxu0 %v302
    %490 = vmatprep.subr.mxu0 0.0
    %491 = vmatpush2.msra.mxu0 0.0
    %492 = vmatprep.subr.mxu0 0.0
    %493 = vmatpush2.msra.mxu0 0.0
    %494 = vmatprep.subr.mxu0 0.0
    %495 = vmatpush2.msra.mxu0 0.0
    %496 = vmatprep.subr.mxu0 0.0
    %497 = vmatpush2.msra.mxu0 0.0
    %498 = vmatprep.subr.mxu0 0.0
    %499 = vmatpush2.msra.mxu0 0.0
    %500 = vmatprep.subr.mxu0 0.0
    %501 = vmatpush2.msra.mxu0 0.0
    %502 = vmatprep.subr.mxu0 0.0
    %503 = vmatpush2.msra.mxu0 0.0
    %504 = vmatprep.subr.mxu0 0.0
    %505 = vmatpush2.msra.mxu0 0.0
    %506 = vmatprep.subr.mxu0 0.0
    %507 = vmatpush2.msra.mxu0 0.0
    %508 = vmatprep.subr.mxu0 0.0
    %509 = vmatpush2.msra.mxu0 0.0
    %510 = vmatprep.subr.mxu0 0.0
    %511 = vmatpush2.msra.mxu0 0.0
    %512 = vmatprep.subr.mxu0 0.0
    %513 = vmatpush2.msra.mxu0 0.0
    %514 = vmatprep.subr.mxu0 0.0
    %515 = vmatpush2.msra.mxu0 0.0
    %516 = vmatprep.subr.mxu0 0.0
    %517 = vmatpush2.msra.mxu0 0.0
    %518 = vmatprep.subr.mxu0 0.0
    %519 = vmatpush2.msra.mxu0 0.0
    %520 = vmatprep.subr.mxu0 0.0
    %521 = vmatpush2.msra.mxu0 0.0
    %522 = vmatprep.mubr.f32.mxu0 0.0
    %523 = vmatmul.mubr.f32.gmra.mxu0 %v456
    %v524 = vpop.f32.mrf.mxu0
    %v525 = vadd.f32 0.0, %v524
    %v526 = vpop.f32.mrf.mxu0
    %v527 = vadd.f32 0.0, %v526
    %528 = vdwg.mxu0
    %v529 = vrot.slane %v298, 2
    %v530 = vrot.slane %v300, 2
    %v533 = vsel %vm343, %v292, %v529
    %v534 = vsel %vm344, %v294, %v530
    %v537 = vrot.slane %v525, 6
    %v538 = vrot.slane %v527, 6
    %v541 = vadd.f32 %v533, %v537
    %v542 = vadd.f32 %v534, %v538
    %v543 = vxor.u32 %v541, 2147483648
    %v544 = vmul.f32 %v543, 1.442695
    %v545 = vpow.pop %v544
    %v546 = vadd.f32 %v545, 1.0
    %v547 = vrcp.pop %v546
    %v548 = vmul.f32 1.0, %v547
    %v549 = vtanh.pop %v542
    %v550 = vxor.u32 %v542, 2147483648
    %v551 = vmul.f32 %v550, 1.442695
    %v552 = vpow.pop %v551
    %v553 = vadd.f32 %v552, 1.0
    %v554 = vrcp.pop %v553
    %v555 = vmul.f32 1.0, %v554
    %v557 = vrot.slane %v450, 6
    %v559 = vmul.f32 %v548, %v557
    %v560 = vmul.f32 %v548, %v549
    %562 = vrot.lane.b32.xlu0 %v560, 64
    %v563 = vpop.permute.xlu0 %562
    %v565 = vadd.f32 %v559, %v563
    %v566 = vtanh.pop %v565
    %v567 = vmul.f32 %v555, %v566
    %v569 = vrot.slane %v567, 2
    %570 = vrot.lane.b32.xlu0 %v569, 64
    %v571 = vpop.permute.xlu0 %570
    %v572 = vsel %vm346, %v571, 0
    %574 = vmatprep.subr.mxu0 0.0
    %575 = vmatpush1.msra.mxu0 0.0
    %576 = vmatprep.subr.mxu0 0.0
    %577 = vmatpush1.msra.mxu0 0.0
    %578 = vmatprep.subr.mxu0 0.0
    %579 = vmatpush1.msra.mxu0 0.0
    %580 = vmatprep.subr.mxu0 0.0
    %581 = vmatpush1.msra.mxu0 0.0
    %582 = vmatprep.subr.mxu0 0.0
    %583 = vmatpush1.msra.mxu0 0.0
    %584 = vmatprep.subr.mxu0 0.0
    %585 = vmatpush1.msra.mxu0 0.0
    %586 = vmatprep.subr.mxu0 0.0
    %587 = vmatpush1.msra.mxu0 0.0
    %588 = vmatprep.subr.mxu0 0.0
    %589 = vmatpush1.msra.mxu0 0.0
    %590 = vmatprep.subr.mxu0 %v317
    %591 = vmatpush1.msra.mxu0 %v316
    %592 = vmatprep.subr.mxu0 %v315
    %593 = vmatpush1.msra.mxu0 %v314
    %594 = vmatprep.subr.mxu0 %v313
    %595 = vmatpush1.msra.mxu0 %v312
    %596 = vmatprep.subr.mxu0 %v311
    %597 = vmatpush1.msra.mxu0 %v310
    %598 = vmatprep.subr.mxu0 %v309
    %599 = vmatpush1.msra.mxu0 %v308
    %600 = vmatprep.subr.mxu0 %v307
    %601 = vmatpush1.msra.mxu0 %v306
    %602 = vmatprep.subr.mxu0 %v305
    %603 = vmatpush1.msra.mxu0 %v304
    %604 = vmatprep.subr.mxu0 %v303
    %605 = vmatpush1.msra.mxu0 %v302
    %606 = vmatprep.subr.mxu0 0.0
    %607 = vmatpush2.msra.mxu0 0.0
    %608 = vmatprep.subr.mxu0 0.0
    %609 = vmatpush2.msra.mxu0 0.0
    %610 = vmatprep.subr.mxu0 0.0
    %611 = vmatpush2.msra.mxu0 0.0
    %612 = vmatprep.subr.mxu0 0.0
    %613 = vmatpush2.msra.mxu0 0.0
    %614 = vmatprep.subr.mxu0 0.0
    %615 = vmatpush2.msra.mxu0 0.0
    %616 = vmatprep.subr.mxu0 0.0
    %617 = vmatpush2.msra.mxu0 0.0
    %618 = vmatprep.subr.mxu0 0.0
    %619 = vmatpush2.msra.mxu0 0.0
    %620 = vmatprep.subr.mxu0 0.0
    %621 = vmatpush2.msra.mxu0 0.0
    %622 = vmatprep.subr.mxu0 0.0
    %623 = vmatpush2.msra.mxu0 0.0
    %624 = vmatprep.subr.mxu0 0.0
    %625 = vmatpush2.msra.mxu0 0.0
    %626 = vmatprep.subr.mxu0 0.0
    %627 = vmatpush2.msra.mxu0 0.0
    %628 = vmatprep.subr.mxu0 0.0
    %629 = vmatpush2.msra.mxu0 0.0
    %630 = vmatprep.subr.mxu0 0.0
    %631 = vmatpush2.msra.mxu0 0.0
    %632 = vmatprep.subr.mxu0 0.0
    %633 = vmatpush2.msra.mxu0 0.0
    %634 = vmatprep.subr.mxu0 0.0
    %635 = vmatpush2.msra.mxu0 0.0
    %636 = vmatprep.subr.mxu0 0.0
    %637 = vmatpush2.msra.mxu0 0.0
    %638 = vmatprep.mubr.f32.mxu0 0.0
    %639 = vmatmul.mubr.f32.gmra.mxu0 %v572
    %v640 = vpop.f32.mrf.mxu0
    %v641 = vadd.f32 0.0, %v640
    %v642 = vpop.f32.mrf.mxu0
    %v643 = vadd.f32 0.0, %v642
    %644 = vdwg.mxu0
    %v647 = vrot.slane %v641, 4
    %v648 = vrot.slane %v643, 4
    %v651 = vadd.f32 %v427, %v647
    %v652 = vadd.f32 %v428, %v648
    %v653 = vxor.u32 %v651, 2147483648
    %v654 = vmul.f32 %v653, 1.442695
    %v655 = vpow.pop %v654
    %v656 = vadd.f32 %v655, 1.0
    %v657 = vrcp.pop %v656
    %v658 = vmul.f32 1.0, %v657
    %v659 = vtanh.pop %v652
    %v660 = vxor.u32 %v652, 2147483648
    %v661 = vmul.f32 %v660, 1.442695
    %v662 = vpow.pop %v661
    %v663 = vadd.f32 %v662, 1.0
    %v664 = vrcp.pop %v663
    %v665 = vmul.f32 1.0, %v664
    %v667 = vrot.slane %v565, 6
    %v669 = vmul.f32 %v658, %v667
    %v670 = vmul.f32 %v658, %v659
    %672 = vrot.lane.b32.xlu0 %v670, 64
    %v673 = vpop.permute.xlu0 %672
    %v675 = vadd.f32 %v669, %v673
    %v676 = vtanh.pop %v675
    %v677 = vmul.f32 %v665, %v676
    %v679 = vrot.slane %v677, 4
    %680 = vrot.lane.b32.xlu0 %v679, 64
    %v681 = vpop.permute.xlu0 %680
    %v682 = vsel %vm346, %v681, 0
    %684 = vmatprep.subr.mxu0 0.0
    %685 = vmatpush1.msra.mxu0 0.0
    %686 = vmatprep.subr.mxu0 0.0
    %687 = vmatpush1.msra.mxu0 0.0
    %688 = vmatprep.subr.mxu0 0.0
    %689 = vmatpush1.msra.mxu0 0.0
    %690 = vmatprep.subr.mxu0 0.0
    %691 = vmatpush1.msra.mxu0 0.0
    %692 = vmatprep.subr.mxu0 0.0
    %693 = vmatpush1.msra.mxu0 0.0
    %694 = vmatprep.subr.mxu0 0.0
    %695 = vmatpush1.msra.mxu0 0.0
    %696 = vmatprep.subr.mxu0 0.0
    %697 = vmatpush1.msra.mxu0 0.0
    %698 = vmatprep.subr.mxu0 0.0
    %699 = vmatpush1.msra.mxu0 0.0
    %700 = vmatprep.subr.mxu0 %v317
    %701 = vmatpush1.msra.mxu0 %v316
    %702 = vmatprep.subr.mxu0 %v315
    %703 = vmatpush1.msra.mxu0 %v314
    %704 = vmatprep.subr.mxu0 %v313
    %705 = vmatpush1.msra.mxu0 %v312
    %706 = vmatprep.subr.mxu0 %v311
    %707 = vmatpush1.msra.mxu0 %v310
    %708 = vmatprep.subr.mxu0 %v309
    %709 = vmatpush1.msra.mxu0 %v308
    %710 = vmatprep.subr.mxu0 %v307
    %711 = vmatpush1.msra.mxu0 %v306
    %712 = vmatprep.subr.mxu0 %v305
    %713 = vmatpush1.msra.mxu0 %v304
    %714 = vmatprep.subr.mxu0 %v303
    %715 = vmatpush1.msra.mxu0 %v302
    %716 = vmatprep.subr.mxu0 0.0
    %717 = vmatpush2.msra.mxu0 0.0
    %718 = vmatprep.subr.mxu0 0.0
    %719 = vmatpush2.msra.mxu0 0.0
    %720 = vmatprep.subr.mxu0 0.0
    %721 = vmatpush2.msra.mxu0 0.0
    %722 = vmatprep.subr.mxu0 0.0
    %723 = vmatpush2.msra.mxu0 0.0
    %724 = vmatprep.subr.mxu0 0.0
    %725 = vmatpush2.msra.mxu0 0.0
    %726 = vmatprep.subr.mxu0 0.0
    %727 = vmatpush2.msra.mxu0 0.0
    %728 = vmatprep.subr.mxu0 0.0
    %729 = vmatpush2.msra.mxu0 0.0
    %730 = vmatprep.subr.mxu0 0.0
    %731 = vmatpush2.msra.mxu0 0.0
    %732 = vmatprep.subr.mxu0 0.0
    %733 = vmatpush2.msra.mxu0 0.0
    %734 = vmatprep.subr.mxu0 0.0
    %735 = vmatpush2.msra.mxu0 0.0
    %736 = vmatprep.subr.mxu0 0.0
    %737 = vmatpush2.msra.mxu0 0.0
    %738 = vmatprep.subr.mxu0 0.0
    %739 = vmatpush2.msra.mxu0 0.0
    %740 = vmatprep.subr.mxu0 0.0
    %741 = vmatpush2.msra.mxu0 0.0
    %742 = vmatprep.subr.mxu0 0.0
    %743 = vmatpush2.msra.mxu0 0.0
    %744 = vmatprep.subr.mxu0 0.0
    %745 = vmatpush2.msra.mxu0 0.0
    %746 = vmatprep.subr.mxu0 0.0
    %747 = vmatpush2.msra.mxu0 0.0
    %748 = vmatprep.mubr.f32.mxu0 0.0
    %749 = vmatmul.mubr.f32.gmra.mxu0 %v682
    %v750 = vpop.f32.mrf.mxu0
    %v751 = vadd.f32 0.0, %v750
    %v752 = vpop.f32.mrf.mxu0
    %v753 = vadd.f32 0.0, %v752
    %754 = vdwg.mxu0
    %v757 = vrot.slane %v751, 2
    %v758 = vrot.slane %v753, 2
    %v761 = vadd.f32 %v533, %v757
    %v762 = vadd.f32 %v534, %v758
    %v763 = vxor.u32 %v761, 2147483648
    %v764 = vmul.f32 %v763, 1.442695
    %v765 = vpow.pop %v764
    %v766 = vadd.f32 %v765, 1.0
    %v767 = vrcp.pop %v766
    %v768 = vmul.f32 1.0, %v767
    %v769 = vtanh.pop %v762
    %v770 = vxor.u32 %v762, 2147483648
    %v771 = vmul.f32 %v770, 1.442695
    %v772 = vpow.pop %v771
    %v773 = vadd.f32 %v772, 1.0
    %v774 = vrcp.pop %v773
    %v775 = vmul.f32 1.0, %v774
    %v777 = vrot.slane %v675, 6
    %v779 = vmul.f32 %v768, %v777
    %v780 = vmul.f32 %v768, %v769
    %782 = vrot.lane.b32.xlu0 %v780, 64
    %v783 = vpop.permute.xlu0 %782
    %v785 = vadd.f32 %v779, %v783
    %v786 = vtanh.pop %v785
    %v787 = vmul.f32 %v775, %v786
    %v789 = vrot.slane %v787, 6
    %790 = vrot.lane.b32.xlu0 %v789, 64
    %v791 = vpop.permute.xlu0 %790
    %v792 = vsel %vm346, %v791, 0
    %794 = vmatprep.subr.mxu0 0.0
    %795 = vmatpush1.msra.mxu0 0.0
    %796 = vmatprep.subr.mxu0 0.0
    %797 = vmatpush1.msra.mxu0 0.0
    %798 = vmatprep.subr.mxu0 0.0
    %799 = vmatpush1.msra.mxu0 0.0
    %800 = vmatprep.subr.mxu0 0.0
    %801 = vmatpush1.msra.mxu0 0.0
    %802 = vmatprep.subr.mxu0 0.0
    %803 = vmatpush1.msra.mxu0 0.0
    %804 = vmatprep.subr.mxu0 0.0
    %805 = vmatpush1.msra.mxu0 0.0
    %806 = vmatprep.subr.mxu0 0.0
    %807 = vmatpush1.msra.mxu0 0.0
    %808 = vmatprep.subr.mxu0 0.0
    %809 = vmatpush1.msra.mxu0 0.0
    %810 = vmatprep.subr.mxu0 %v317
    %811 = vmatpush1.msra.mxu0 %v316
    %812 = vmatprep.subr.mxu0 %v315
    %813 = vmatpush1.msra.mxu0 %v314
    %814 = vmatprep.subr.mxu0 %v313
    %815 = vmatpush1.msra.mxu0 %v312
    %816 = vmatprep.subr.mxu0 %v311
    %817 = vmatpush1.msra.mxu0 %v310
    %818 = vmatprep.subr.mxu0 %v309
    %819 = vmatpush1.msra.mxu0 %v308
    %820 = vmatprep.subr.mxu0 %v307
    %821 = vmatpush1.msra.mxu0 %v306
    %822 = vmatprep.subr.mxu0 %v305
    %823 = vmatpush1.msra.mxu0 %v304
    %824 = vmatprep.subr.mxu0 %v303
    %825 = vmatpush1.msra.mxu0 %v302
    %826 = vmatprep.subr.mxu0 0.0
    %827 = vmatpush2.msra.mxu0 0.0
    %828 = vmatprep.subr.mxu0 0.0
    %829 = vmatpush2.msra.mxu0 0.0
    %830 = vmatprep.subr.mxu0 0.0
    %831 = vmatpush2.msra.mxu0 0.0
    %832 = vmatprep.subr.mxu0 0.0
    %833 = vmatpush2.msra.mxu0 0.0
    %834 = vmatprep.subr.mxu0 0.0
    %835 = vmatpush2.msra.mxu0 0.0
    %836 = vmatprep.subr.mxu0 0.0
    %837 = vmatpush2.msra.mxu0 0.0
    %838 = vmatprep.subr.mxu0 0.0
    %839 = vmatpush2.msra.mxu0 0.0
    %840 = vmatprep.subr.mxu0 0.0
    %841 = vmatpush2.msra.mxu0 0.0
    %842 = vmatprep.subr.mxu0 0.0
    %843 = vmatpush2.msra.mxu0 0.0
    %844 = vmatprep.subr.mxu0 0.0
    %845 = vmatpush2.msra.mxu0 0.0
    %846 = vmatprep.subr.mxu0 0.0
    %847 = vmatpush2.msra.mxu0 0.0
    %848 = vmatprep.subr.mxu0 0.0
    %849 = vmatpush2.msra.mxu0 0.0
    %850 = vmatprep.subr.mxu0 0.0
    %851 = vmatpush2.msra.mxu0 0.0
    %852 = vmatprep.subr.mxu0 0.0
    %853 = vmatpush2.msra.mxu0 0.0
    %854 = vmatprep.subr.mxu0 0.0
    %855 = vmatpush2.msra.mxu0 0.0
    %856 = vmatprep.subr.mxu0 0.0
    %857 = vmatpush2.msra.mxu0 0.0
    %858 = vmatprep.mubr.f32.mxu0 0.0
    %859 = vmatmul.mubr.f32.gmra.mxu0 %v792
    %v860 = vpop.f32.mrf.mxu0
    %v861 = vadd.f32 0.0, %v860
    %v862 = vpop.f32.mrf.mxu0
    %v863 = vadd.f32 0.0, %v862
    %864 = vdwg.mxu0
    %v867 = vrot.slane %v292, 6
    %v868 = vrot.slane %v294, 6
    %v871 = vsel %vm343, %v298, %v867
    %v872 = vsel %vm344, %v300, %v868
    %v873 = vadd.f32 %v871, %v861
    %v874 = vadd.f32 %v872, %v863
    %v875 = vxor.u32 %v873, 2147483648
    %v876 = vmul.f32 %v875, 1.442695
    %v877 = vpow.pop %v876
    %v878 = vadd.f32 %v877, 1.0
    %v879 = vrcp.pop %v878
    %v880 = vmul.f32 1.0, %v879
    %v881 = vtanh.pop %v874
    %v882 = vxor.u32 %v874, 2147483648
    %v883 = vmul.f32 %v882, 1.442695
    %v884 = vpow.pop %v883
    %v885 = vadd.f32 %v884, 1.0
    %v886 = vrcp.pop %v885
    %v887 = vmul.f32 1.0, %v886
    %v889 = vrot.slane %v785, 6
    %v891 = vmul.f32 %v880, %v889
    %v892 = vmul.f32 %v880, %v881
    %894 = vrot.lane.b32.xlu0 %v892, 64
    %v895 = vpop.permute.xlu0 %894
    %v897 = vadd.f32 %v891, %v895
    %v898 = vtanh.pop %v897
    %v899 = vmul.f32 %v887, %v898
    %901 = vrot.lane.b32.xlu0 %v899, 64
    %v902 = vpop.permute.xlu0 %901
    %v903 = vsel %vm346, %v902, 0
    %905 = vmatprep.subr.mxu0 0.0
    %906 = vmatpush1.msra.mxu0 0.0
    %907 = vmatprep.subr.mxu0 0.0
    %908 = vmatpush1.msra.mxu0 0.0
    %909 = vmatprep.subr.mxu0 0.0
    %910 = vmatpush1.msra.mxu0 0.0
    %911 = vmatprep.subr.mxu0 0.0
    %912 = vmatpush1.msra.mxu0 0.0
    %913 = vmatprep.subr.mxu0 0.0
    %914 = vmatpush1.msra.mxu0 0.0
    %915 = vmatprep.subr.mxu0 0.0
    %916 = vmatpush1.msra.mxu0 0.0
    %917 = vmatprep.subr.mxu0 0.0
    %918 = vmatpush1.msra.mxu0 0.0
    %919 = vmatprep.subr.mxu0 0.0
    %920 = vmatpush1.msra.mxu0 0.0
    %921 = vmatprep.subr.mxu0 %v317
    %922 = vmatpush1.msra.mxu0 %v316
    %923 = vmatprep.subr.mxu0 %v315
    %924 = vmatpush1.msra.mxu0 %v314
    %925 = vmatprep.subr.mxu0 %v313
    %926 = vmatpush1.msra.mxu0 %v312
    %927 = vmatprep.subr.mxu0 %v311
    %928 = vmatpush1.msra.mxu0 %v310
    %929 = vmatprep.subr.mxu0 %v309
    %930 = vmatpush1.msra.mxu0 %v308
    %931 = vmatprep.subr.mxu0 %v307
    %932 = vmatpush1.msra.mxu0 %v306
    %933 = vmatprep.subr.mxu0 %v305
    %934 = vmatpush1.msra.mxu0 %v304
    %935 = vmatprep.subr.mxu0 %v303
    %936 = vmatpush1.msra.mxu0 %v302
    %937 = vmatprep.subr.mxu0 0.0
    %938 = vmatpush2.msra.mxu0 0.0
    %939 = vmatprep.subr.mxu0 0.0
    %940 = vmatpush2.msra.mxu0 0.0
    %941 = vmatprep.subr.mxu0 0.0
    %942 = vmatpush2.msra.mxu0 0.0
    %943 = vmatprep.subr.mxu0 0.0
    %944 = vmatpush2.msra.mxu0 0.0
    %945 = vmatprep.subr.mxu0 0.0
    %946 = vmatpush2.msra.mxu0 0.0
    %947 = vmatprep.subr.mxu0 0.0
    %948 = vmatpush2.msra.mxu0 0.0
    %949 = vmatprep.subr.mxu0 0.0
    %950 = vmatpush2.msra.mxu0 0.0
    %951 = vmatprep.subr.mxu0 0.0
    %952 = vmatpush2.msra.mxu0 0.0
    %953 = vmatprep.subr.mxu0 0.0
    %954 = vmatpush2.msra.mxu0 0.0
    %955 = vmatprep.subr.mxu0 0.0
    %956 = vmatpush2.msra.mxu0 0.0
    %957 = vmatprep.subr.mxu0 0.0
    %958 = vmatpush2.msra.mxu0 0.0
    %959 = vmatprep.subr.mxu0 0.0
    %960 = vmatpush2.msra.mxu0 0.0
    %961 = vmatprep.subr.mxu0 0.0
    %962 = vmatpush2.msra.mxu0 0.0
    %963 = vmatprep.subr.mxu0 0.0
    %964 = vmatpush2.msra.mxu0 0.0
    %965 = vmatprep.subr.mxu0 0.0
    %966 = vmatpush2.msra.mxu0 0.0
    %967 = vmatprep.subr.mxu0 0.0
    %968 = vmatpush2.msra.mxu0 0.0
    %969 = vmatprep.mubr.f32.mxu0 0.0
    %970 = vmatmul.mubr.f32.gmra.mxu0 %v903
    %v971 = vpop.f32.mrf.mxu0
    %v972 = vadd.f32 0.0, %v971
    %v973 = vpop.f32.mrf.mxu0
    %v974 = vadd.f32 0.0, %v973
    %975 = vdwg.mxu0
    %v976 = vrot.slane %v292, 2
    %v977 = vrot.slane %v294, 2
    %v980 = vsel %vm343, %v298, %v976
    %v981 = vsel %vm344, %v300, %v977
    %v984 = vrot.slane %v972, 6
    %v985 = vrot.slane %v974, 6
    %v988 = vadd.f32 %v980, %v984
    %v989 = vadd.f32 %v981, %v985
    %v990 = vxor.u32 %v988, 2147483648
    %v991 = vmul.f32 %v990, 1.442695
    %v992 = vpow.pop %v991
    %v993 = vadd.f32 %v992, 1.0
    %v994 = vrcp.pop %v993
    %v995 = vmul.f32 1.0, %v994
    %v996 = vtanh.pop %v989
    %v997 = vxor.u32 %v989, 2147483648
    %v998 = vmul.f32 %v997, 1.442695
    %v999 = vpow.pop %v998
    %v1000 = vadd.f32 %v999, 1.0
    %v1001 = vrcp.pop %v1000
    %v1002 = vmul.f32 1.0, %v1001
    %v1004 = vrot.slane %v897, 6
    %v1006 = vmul.f32 %v995, %v1004
    %v1007 = vmul.f32 %v995, %v996
    %1009 = vrot.lane.b32.xlu0 %v1007, 64
    %v1010 = vpop.permute.xlu0 %1009
    %v1012 = vadd.f32 %v1006, %v1010
    %v1013 = vtanh.pop %v1012
    %v1014 = vmul.f32 %v1002, %v1013
    %v1016 = vrot.slane %v1014, 2
    %1017 = vrot.lane.b32.xlu0 %v1016, 64
    %v1018 = vpop.permute.xlu0 %1017
    %v1019 = vsel %vm346, %v1018, 0
    %1021 = vmatprep.subr.mxu0 0.0
    %1022 = vmatpush1.msra.mxu0 0.0
    %1023 = vmatprep.subr.mxu0 0.0
    %1024 = vmatpush1.msra.mxu0 0.0
    %1025 = vmatprep.subr.mxu0 0.0
    %1026 = vmatpush1.msra.mxu0 0.0
    %1027 = vmatprep.subr.mxu0 0.0
    %1028 = vmatpush1.msra.mxu0 0.0
    %1029 = vmatprep.subr.mxu0 0.0
    %1030 = vmatpush1.msra.mxu0 0.0
    %1031 = vmatprep.subr.mxu0 0.0
    %1032 = vmatpush1.msra.mxu0 0.0
    %1033 = vmatprep.subr.mxu0 0.0
    %1034 = vmatpush1.msra.mxu0 0.0
    %1035 = vmatprep.subr.mxu0 0.0
    %1036 = vmatpush1.msra.mxu0 0.0
    %1037 = vmatprep.subr.mxu0 %v317
    %1038 = vmatpush1.msra.mxu0 %v316
    %1039 = vmatprep.subr.mxu0 %v315
    %1040 = vmatpush1.msra.mxu0 %v314
    %1041 = vmatprep.subr.mxu0 %v313
    %1042 = vmatpush1.msra.mxu0 %v312
    %1043 = vmatprep.subr.mxu0 %v311
    %1044 = vmatpush1.msra.mxu0 %v310
    %1045 = vmatprep.subr.mxu0 %v309
    %1046 = vmatpush1.msra.mxu0 %v308
    %1047 = vmatprep.subr.mxu0 %v307
    %1048 = vmatpush1.msra.mxu0 %v306
    %1049 = vmatprep.subr.mxu0 %v305
    %1050 = vmatpush1.msra.mxu0 %v304
    %1051 = vmatprep.subr.mxu0 %v303
    %1052 = vmatpush1.msra.mxu0 %v302
    %1053 = vmatprep.subr.mxu0 0.0
    %1054 = vmatpush2.msra.mxu0 0.0
    %1055 = vmatprep.subr.mxu0 0.0
    %1056 = vmatpush2.msra.mxu0 0.0
    %1057 = vmatprep.subr.mxu0 0.0
    %1058 = vmatpush2.msra.mxu0 0.0
    %1059 = vmatprep.subr.mxu0 0.0
    %1060 = vmatpush2.msra.mxu0 0.0
    %1061 = vmatprep.subr.mxu0 0.0
    %1062 = vmatpush2.msra.mxu0 0.0
    %1063 = vmatprep.subr.mxu0 0.0
    %1064 = vmatpush2.msra.mxu0 0.0
    %1065 = vmatprep.subr.mxu0 0.0
    %1066 = vmatpush2.msra.mxu0 0.0
    %1067 = vmatprep.subr.mxu0 0.0
    %1068 = vmatpush2.msra.mxu0 0.0
    %1069 = vmatprep.subr.mxu0 0.0
    %1070 = vmatpush2.msra.mxu0 0.0
    %1071 = vmatprep.subr.mxu0 0.0
    %1072 = vmatpush2.msra.mxu0 0.0
    %1073 = vmatprep.subr.mxu0 0.0
    %1074 = vmatpush2.msra.mxu0 0.0
    %1075 = vmatprep.subr.mxu0 0.0
    %1076 = vmatpush2.msra.mxu0 0.0
    %1077 = vmatprep.subr.mxu0 0.0
    %1078 = vmatpush2.msra.mxu0 0.0
    %1079 = vmatprep.subr.mxu0 0.0
    %1080 = vmatpush2.msra.mxu0 0.0
    %1081 = vmatprep.subr.mxu0 0.0
    %1082 = vmatpush2.msra.mxu0 0.0
    %1083 = vmatprep.subr.mxu0 0.0
    %1084 = vmatpush2.msra.mxu0 0.0
    %1085 = vmatprep.mubr.f32.mxu0 0.0
    %1086 = vmatmul.mubr.f32.gmra.mxu0 %v1019
    %v1087 = vpop.f32.mrf.mxu0
    %v1088 = vadd.f32 0.0, %v1087
    %v1089 = vpop.f32.mrf.mxu0
    %v1090 = vadd.f32 0.0, %v1089
    %1091 = vdwg.mxu0
    %v1094 = vrot.slane %v1088, 4
    %v1095 = vrot.slane %v1090, 4
    %v1098 = vadd.f32 %v871, %v1094
    %v1099 = vadd.f32 %v872, %v1095
    %v1100 = vxor.u32 %v1098, 2147483648
    %v1101 = vmul.f32 %v1100, 1.442695
    %v1102 = vpow.pop %v1101
    %v1103 = vadd.f32 %v1102, 1.0
    %v1104 = vrcp.pop %v1103
    %v1105 = vmul.f32 1.0, %v1104
    %v1106 = vtanh.pop %v1099
    %v1107 = vxor.u32 %v1099, 2147483648
    %v1108 = vmul.f32 %v1107, 1.442695
    %v1109 = vpow.pop %v1108
    %v1110 = vadd.f32 %v1109, 1.0
    %v1111 = vrcp.pop %v1110
    %v1112 = vmul.f32 1.0, %v1111
    %v1114 = vrot.slane %v1012, 6
    %v1116 = vmul.f32 %v1105, %v1114
    %v1117 = vmul.f32 %v1105, %v1106
    %1119 = vrot.lane.b32.xlu0 %v1117, 64
    %v1120 = vpop.permute.xlu0 %1119
    %v1122 = vadd.f32 %v1116, %v1120
    %v1123 = vtanh.pop %v1122
    %v1124 = vmul.f32 %v1112, %v1123
    %v1126 = vrot.slane %v1124, 4
    %1127 = vrot.lane.b32.xlu0 %v1126, 64
    %v1128 = vpop.permute.xlu0 %1127
    %v1129 = vsel %vm346, %v1128, 0
    %1131 = vmatprep.subr.mxu0 0.0
    %1132 = vmatpush1.msra.mxu0 0.0
    %1133 = vmatprep.subr.mxu0 0.0
    %1134 = vmatpush1.msra.mxu0 0.0
    %1135 = vmatprep.subr.mxu0 0.0
    %1136 = vmatpush1.msra.mxu0 0.0
    %1137 = vmatprep.subr.mxu0 0.0
    %1138 = vmatpush1.msra.mxu0 0.0
    %1139 = vmatprep.subr.mxu0 0.0
    %1140 = vmatpush1.msra.mxu0 0.0
    %1141 = vmatprep.subr.mxu0 0.0
    %1142 = vmatpush1.msra.mxu0 0.0
    %1143 = vmatprep.subr.mxu0 0.0
    %1144 = vmatpush1.msra.mxu0 0.0
    %1145 = vmatprep.subr.mxu0 0.0
    %1146 = vmatpush1.msra.mxu0 0.0
    %1147 = vmatprep.subr.mxu0 %v317
    %1148 = vmatpush1.msra.mxu0 %v316
    %1149 = vmatprep.subr.mxu0 %v315
    %1150 = vmatpush1.msra.mxu0 %v314
    %1151 = vmatprep.subr.mxu0 %v313
    %1152 = vmatpush1.msra.mxu0 %v312
    %1153 = vmatprep.subr.mxu0 %v311
    %1154 = vmatpush1.msra.mxu0 %v310
    %1155 = vmatprep.subr.mxu0 %v309
    %1156 = vmatpush1.msra.mxu0 %v308
    %1157 = vmatprep.subr.mxu0 %v307
    %1158 = vmatpush1.msra.mxu0 %v306
    %1159 = vmatprep.subr.mxu0 %v305
    %1160 = vmatpush1.msra.mxu0 %v304
    %1161 = vmatprep.subr.mxu0 %v303
    %1162 = vmatpush1.msra.mxu0 %v302
    %1163 = vmatprep.subr.mxu0 0.0
    %1164 = vmatpush2.msra.mxu0 0.0
    %1165 = vmatprep.subr.mxu0 0.0
    %1166 = vmatpush2.msra.mxu0 0.0
    %1167 = vmatprep.subr.mxu0 0.0
    %1168 = vmatpush2.msra.mxu0 0.0
    %1169 = vmatprep.subr.mxu0 0.0
    %1170 = vmatpush2.msra.mxu0 0.0
    %1171 = vmatprep.subr.mxu0 0.0
    %1172 = vmatpush2.msra.mxu0 0.0
    %1173 = vmatprep.subr.mxu0 0.0
    %1174 = vmatpush2.msra.mxu0 0.0
    %1175 = vmatprep.subr.mxu0 0.0
    %1176 = vmatpush2.msra.mxu0 0.0
    %1177 = vmatprep.subr.mxu0 0.0
    %1178 = vmatpush2.msra.mxu0 0.0
    %1179 = vmatprep.subr.mxu0 0.0
    %1180 = vmatpush2.msra.mxu0 0.0
    %1181 = vmatprep.subr.mxu0 0.0
    %1182 = vmatpush2.msra.mxu0 0.0
    %1183 = vmatprep.subr.mxu0 0.0
    %1184 = vmatpush2.msra.mxu0 0.0
    %1185 = vmatprep.subr.mxu0 0.0
    %1186 = vmatpush2.msra.mxu0 0.0
    %1187 = vmatprep.subr.mxu0 0.0
    %1188 = vmatpush2.msra.mxu0 0.0
    %1189 = vmatprep.subr.mxu0 0.0
    %1190 = vmatpush2.msra.mxu0 0.0
    %1191 = vmatprep.subr.mxu0 0.0
    %1192 = vmatpush2.msra.mxu0 0.0
    %1193 = vmatprep.subr.mxu0 0.0
    %1194 = vmatpush2.msra.mxu0 0.0
    %1195 = vmatprep.mubr.f32.mxu0 0.0
    %1196 = vmatmul.mubr.f32.gmra.mxu0 %v1129
    %v1197 = vpop.f32.mrf.mxu0
    %v1198 = vadd.f32 0.0, %v1197
    %v1199 = vpop.f32.mrf.mxu0
    %v1200 = vadd.f32 0.0, %v1199
    %1201 = vdwg.mxu0
    %v1204 = vrot.slane %v1198, 2
    %v1205 = vrot.slane %v1200, 2
    %v1208 = vadd.f32 %v980, %v1204
    %v1209 = vadd.f32 %v981, %v1205
    %v1210 = vxor.u32 %v1208, 2147483648
    %v1211 = vmul.f32 %v1210, 1.442695
    %v1212 = vpow.pop %v1211
    %v1213 = vadd.f32 %v1212, 1.0
    %v1214 = vrcp.pop %v1213
    %v1215 = vmul.f32 1.0, %v1214
    %v1216 = vtanh.pop %v1209
    %v1217 = vxor.u32 %v1209, 2147483648
    %v1218 = vmul.f32 %v1217, 1.442695
    %v1219 = vpow.pop %v1218
    %v1220 = vadd.f32 %v1219, 1.0
    %v1221 = vrcp.pop %v1220
    %v1222 = vmul.f32 1.0, %v1221
    %v1224 = vrot.slane %v1122, 6
    %v1226 = vmul.f32 %v1215, %v1224
    %v1227 = vmul.f32 %v1215, %v1216
    %1229 = vrot.lane.b32.xlu0 %v1227, 64
    %v1230 = vpop.permute.xlu0 %1229
    %v1232 = vadd.f32 %v1226, %v1230
    %v1233 = vtanh.pop %v1232
    %v1234 = vmul.f32 %v1222, %v1233
    %v1237 = vrot.slane %v1234, 6
    %1238 = vrot.lane.b32.xlu0 %v1237, 64
    %v1239 = vpop.permute.xlu0 %1238
    %v1241 = vsel %vm345, %v455, %v1239
    %v1244 = vsel %vm345, %v571, %v1128
    %v1247 = vsel %vm345, %v681, %v1018
    %v1250 = vsel %vm345, %v791, %v902
    %v1251 = vsel %vm345, %v902, %v791
    %v1252 = vsel %vm345, %v1018, %v681
    %v1253 = vsel %vm345, %v1128, %v571
    %v1254 = vsel %vm345, %v1239, %v455
    %v1256 = vrot.slane %v1244, 6
    %v1259 = vrot.slane %v1247, 4
    %v1262 = vrot.slane %v1250, 2
    %v1265 = vrot.slane %v1252, 6
    %v1268 = vrot.slane %v1253, 4
    %v1271 = vrot.slane %v1254, 2
    %vm1273 = vcmask 1041408
    %v1274 = vsel %vm1273, %v1241, %v1256
    %vm1275 = vcmask 1043456
    %v1276 = vsel %vm1275, %v1274, %v1259
    %vm1277 = vcmask 1045504
    %v1278 = vsel %vm1277, %v1276, %v1262
    %v1279 = vsel %vm1273, %v1251, %v1265
    %v1280 = vsel %vm1275, %v1279, %v1268
    %v1281 = vsel %vm1277, %v1280, %v1271
    %v1282 = vld [vmem:[#allocation5] sm:$0xff]
    %v1283 = vld [vmem:[#allocation5 + $0x8] sm:$0xff]
    %v1284 = vld [vmem:[#allocation5 + $0x10] sm:$0xff]
    %v1285 = vld [vmem:[#allocation5 + $0x18] sm:$0xff]
    %v1286 = vld [vmem:[#allocation5 + $0x20] sm:$0xff]
    %v1287 = vld [vmem:[#allocation5 + $0x28] sm:$0xff]
    %v1288 = vld [vmem:[#allocation5 + $0x30] sm:$0xff]
    %v1289 = vld [vmem:[#allocation5 + $0x38] sm:$0xff]
    %v1290 = vld [vmem:[#allocation5 + $0x40] sm:$0xff]
    %v1291 = vld [vmem:[#allocation5 + $0x48] sm:$0xff]
    %v1292 = vld [vmem:[#allocation5 + $0x50] sm:$0xff]
    %v1293 = vld [vmem:[#allocation5 + $0x58] sm:$0xff]
    %v1294 = vld [vmem:[#allocation5 + $0x60] sm:$0xff]
    %v1295 = vld [vmem:[#allocation5 + $0x68] sm:$0xff]
    %v1296 = vld [vmem:[#allocation5 + $0x70] sm:$0xff]
    %v1297 = vld [vmem:[#allocation5 + $0x78] sm:$0xff]
    %v1298 = vld [vmem:[%s7] sm:$0x3]
    %v1300 = vlaneseq
    %v1301 = vshrl.u32 %v1300, 7
    %v1302 = vsub.s32 0, %v1301
    %v1303 = vrot.slane %v1298, %v1302
    %v1304 = vlaneseq
    %v1305 = vshrl.u32 %v1304, 7
    %v1306 = vsub.s32 1, %v1305
    %v1307 = vrot.slane %v1298, %v1306
    %v1311 = vsel %vm346, %v1278, 0
    %v1314 = vsel %vm346, %v1281, 0
    %1316 = vmatprep.subr.mxu0 0.0
    %1317 = vmatpush1.msra.mxu0 0.0
    %1318 = vmatprep.subr.mxu0 0.0
    %1319 = vmatpush1.msra.mxu0 0.0
    %1320 = vmatprep.subr.mxu0 0.0
    %1321 = vmatpush1.msra.mxu0 0.0
    %1322 = vmatprep.subr.mxu0 0.0
    %1323 = vmatpush1.msra.mxu0 0.0
    %1324 = vmatprep.subr.mxu0 0.0
    %1325 = vmatpush1.msra.mxu0 0.0
    %1326 = vmatprep.subr.mxu0 0.0
    %1327 = vmatpush1.msra.mxu0 0.0
    %1328 = vmatprep.subr.mxu0 0.0
    %1329 = vmatpush1.msra.mxu0 0.0
    %1330 = vmatprep.subr.mxu0 0.0
    %1331 = vmatpush1.msra.mxu0 0.0
    %1332 = vmatprep.subr.mxu0 %v1297
    %1333 = vmatpush1.msra.mxu0 %v1296
    %1334 = vmatprep.subr.mxu0 %v1295
    %1335 = vmatpush1.msra.mxu0 %v1294
    %1336 = vmatprep.subr.mxu0 %v1293
    %1337 = vmatpush1.msra.mxu0 %v1292
    %1338 = vmatprep.subr.mxu0 %v1291
    %1339 = vmatpush1.msra.mxu0 %v1290
    %1340 = vmatprep.subr.mxu0 %v1289
    %1341 = vmatpush1.msra.mxu0 %v1288
    %1342 = vmatprep.subr.mxu0 %v1287
    %1343 = vmatpush1.msra.mxu0 %v1286
    %1344 = vmatprep.subr.mxu0 %v1285
    %1345 = vmatpush1.msra.mxu0 %v1284
    %1346 = vmatprep.subr.mxu0 %v1283
    %1347 = vmatpush1.msra.mxu0 %v1282
    %1348 = vmatprep.subr.mxu0 0.0
    %1349 = vmatpush2.msra.mxu0 0.0
    %1350 = vmatprep.subr.mxu0 0.0
    %1351 = vmatpush2.msra.mxu0 0.0
    %1352 = vmatprep.subr.mxu0 0.0
    %1353 = vmatpush2.msra.mxu0 0.0
    %1354 = vmatprep.subr.mxu0 0.0
    %1355 = vmatpush2.msra.mxu0 0.0
    %1356 = vmatprep.subr.mxu0 0.0
    %1357 = vmatpush2.msra.mxu0 0.0
    %1358 = vmatprep.subr.mxu0 0.0
    %1359 = vmatpush2.msra.mxu0 0.0
    %1360 = vmatprep.subr.mxu0 0.0
    %1361 = vmatpush2.msra.mxu0 0.0
    %1362 = vmatprep.subr.mxu0 0.0
    %1363 = vmatpush2.msra.mxu0 0.0
    %1364 = vmatprep.subr.mxu0 0.0
    %1365 = vmatpush2.msra.mxu0 0.0
    %1366 = vmatprep.subr.mxu0 0.0
    %1367 = vmatpush2.msra.mxu0 0.0
    %1368 = vmatprep.subr.mxu0 0.0
    %1369 = vmatpush2.msra.mxu0 0.0
    %1370 = vmatprep.subr.mxu0 0.0
    %1371 = vmatpush2.msra.mxu0 0.0
    %1372 = vmatprep.subr.mxu0 0.0
    %1373 = vmatpush2.msra.mxu0 0.0
    %1374 = vmatprep.subr.mxu0 0.0
    %1375 = vmatpush2.msra.mxu0 0.0
    %1376 = vmatprep.subr.mxu0 0.0
    %1377 = vmatpush2.msra.mxu0 0.0
    %1378 = vmatprep.subr.mxu0 0.0
    %1379 = vmatpush2.msra.mxu0 0.0
    %1380 = vmatprep.mubr.f32.mxu0 0.0
    %1381 = vmatmul.mubr.f32.gmra.mxu0 %v1311
    %v1382 = vpop.f32.mrf.mxu0
    %v1383 = vadd.f32 %v1303, %v1382
    %v1384 = vpop.f32.mrf.mxu0
    %v1385 = vadd.f32 %v1307, %v1384
    %1386 = vmatprep.mubr.f32.mxu0 0.0
    %1387 = vmatmul.mubr.f32.gmra.mxu0 %v1314
    %v1388 = vpop.f32.mrf.mxu0
    %v1389 = vadd.f32 %v1303, %v1388
    %v1390 = vpop.f32.mrf.mxu0
    %v1391 = vadd.f32 %v1307, %v1390
    %1392 = vdwg.mxu0
    %v1393 = vld [vmem:[#allocation7] sm:$0xff]
    %v1394 = vld [vmem:[#allocation7 + $0x8] sm:$0xff]
    %v1395 = vld [vmem:[#allocation7 + $0x10] sm:$0xff]
    %v1396 = vld [vmem:[#allocation7 + $0x18] sm:$0xff]
    %v1397 = vld [vmem:[#allocation7 + $0x20] sm:$0xff]
    %v1398 = vld [vmem:[#allocation7 + $0x28] sm:$0xff]
    %v1399 = vld [vmem:[#allocation7 + $0x30] sm:$0xff]
    %v1400 = vld [vmem:[#allocation7 + $0x38] sm:$0xff]
    %v1401 = vld [vmem:[#allocation7 + $0x40] sm:$0xff]
    %v1402 = vld [vmem:[#allocation7 + $0x48] sm:$0xff]
    %v1403 = vld [vmem:[#allocation7 + $0x50] sm:$0xff]
    %v1404 = vld [vmem:[#allocation7 + $0x58] sm:$0xff]
    %v1405 = vld [vmem:[#allocation7 + $0x60] sm:$0xff]
    %v1406 = vld [vmem:[#allocation7 + $0x68] sm:$0xff]
    %v1407 = vld [vmem:[#allocation7 + $0x70] sm:$0xff]
    %v1408 = vld [vmem:[#allocation7 + $0x78] sm:$0xff]
    %1409 = vmatprep.subr.mxu0 0.0
    %1410 = vmatpush1.msra.mxu0 0.0
    %1411 = vmatprep.subr.mxu0 0.0
    %1412 = vmatpush1.msra.mxu0 0.0
    %1413 = vmatprep.subr.mxu0 0.0
    %1414 = vmatpush1.msra.mxu0 0.0
    %1415 = vmatprep.subr.mxu0 0.0
    %1416 = vmatpush1.msra.mxu0 0.0
    %1417 = vmatprep.subr.mxu0 0.0
    %1418 = vmatpush1.msra.mxu0 0.0
    %1419 = vmatprep.subr.mxu0 0.0
    %1420 = vmatpush1.msra.mxu0 0.0
    %1421 = vmatprep.subr.mxu0 0.0
    %1422 = vmatpush1.msra.mxu0 0.0
    %1423 = vmatprep.subr.mxu0 0.0
    %1424 = vmatpush1.msra.mxu0 0.0
    %1425 = vmatprep.subr.mxu0 %v1408
    %1426 = vmatpush1.msra.mxu0 %v1407
    %1427 = vmatprep.subr.mxu0 %v1406
    %1428 = vmatpush1.msra.mxu0 %v1405
    %1429 = vmatprep.subr.mxu0 %v1404
    %1430 = vmatpush1.msra.mxu0 %v1403
    %1431 = vmatprep.subr.mxu0 %v1402
    %1432 = vmatpush1.msra.mxu0 %v1401
    %1433 = vmatprep.subr.mxu0 %v1400
    %1434 = vmatpush1.msra.mxu0 %v1399
    %1435 = vmatprep.subr.mxu0 %v1398
    %1436 = vmatpush1.msra.mxu0 %v1397
    %1437 = vmatprep.subr.mxu0 %v1396
    %1438 = vmatpush1.msra.mxu0 %v1395
    %1439 = vmatprep.subr.mxu0 %v1394
    %1440 = vmatpush1.msra.mxu0 %v1393
    %1441 = vmatprep.subr.mxu0 0.0
    %1442 = vmatpush2.msra.mxu0 0.0
    %1443 = vmatprep.subr.mxu0 0.0
    %1444 = vmatpush2.msra.mxu0 0.0
    %1445 = vmatprep.subr.mxu0 0.0
    %1446 = vmatpush2.msra.mxu0 0.0
    %1447 = vmatprep.subr.mxu0 0.0
    %1448 = vmatpush2.msra.mxu0 0.0
    %1449 = vmatprep.subr.mxu0 0.0
    %1450 = vmatpush2.msra.mxu0 0.0
    %1451 = vmatprep.subr.mxu0 0.0
    %1452 = vmatpush2.msra.mxu0 0.0
    %1453 = vmatprep.subr.mxu0 0.0
    %1454 = vmatpush2.msra.mxu0 0.0
    %1455 = vmatprep.subr.mxu0 0.0
    %1456 = vmatpush2.msra.mxu0 0.0
    %1457 = vmatprep.subr.mxu0 0.0
    %1458 = vmatpush2.msra.mxu0 0.0
    %1459 = vmatprep.subr.mxu0 0.0
    %1460 = vmatpush2.msra.mxu0 0.0
    %1461 = vmatprep.subr.mxu0 0.0
    %1462 = vmatpush2.msra.mxu0 0.0
    %1463 = vmatprep.subr.mxu0 0.0
    %1464 = vmatpush2.msra.mxu0 0.0
    %1465 = vmatprep.subr.mxu0 0.0
    %1466 = vmatpush2.msra.mxu0 0.0
    %1467 = vmatprep.subr.mxu0 0.0
    %1468 = vmatpush2.msra.mxu0 0.0
    %1469 = vmatprep.subr.mxu0 0.0
    %1470 = vmatpush2.msra.mxu0 0.0
    %1471 = vmatprep.subr.mxu0 0.0
    %1472 = vmatpush2.msra.mxu0 0.0
    %1473 = vmatprep.mubr.f32.mxu0 0.0
    %1474 = vmatmul.mubr.f32.gmra.mxu0 %v348
    %v1475 = vpop.f32.mrf.mxu0
    %v1476 = vadd.f32 0.0, %v1475
    %v1477 = vpop.f32.mrf.mxu0
    %v1478 = vadd.f32 0.0, %v1477
    %1479 = vdwg.mxu0
    %v1482 = vrot.slane %v1389, 6
    %v1483 = vrot.slane %v1391, 6
    %v1486 = vsel %vm343, %v1383, %v1482
    %v1487 = vsel %vm344, %v1385, %v1483
    %v1488 = vadd.f32 %v1486, %v1476
    %v1489 = vadd.f32 %v1487, %v1478
    %v1490 = vxor.u32 %v1488, 2147483648
    %v1491 = vmul.f32 %v1490, 1.442695
    %v1492 = vpow.pop %v1491
    %v1493 = vadd.f32 %v1492, 1.0
    %v1494 = vrcp.pop %v1493
    %v1495 = vmul.f32 1.0, %v1494
    %v1496 = vtanh.pop %v1489
    %v1497 = vxor.u32 %v1489, 2147483648
    %v1498 = vmul.f32 %v1497, 1.442695
    %v1499 = vpow.pop %v1498
    %v1500 = vadd.f32 %v1499, 1.0
    %v1501 = vrcp.pop %v1500
    %v1502 = vmul.f32 1.0, %v1501
    %v1503 = vmul.f32 %v1495, 0.0
    %v1504 = vmul.f32 %v1495, %v1496
    %1506 = vrot.lane.b32.xlu0 %v1504, 64
    %v1507 = vpop.permute.xlu0 %1506
    %v1509 = vadd.f32 %v1503, %v1507
    %v1510 = vtanh.pop %v1509
    %v1511 = vmul.f32 %v1502, %v1510
    %1513 = vrot.lane.b32.xlu0 %v1511, 64
    %v1514 = vpop.permute.xlu0 %1513
    %v1515 = vsel %vm346, %v1514, 0
    %1517 = vmatprep.subr.mxu0 0.0
    %1518 = vmatpush1.msra.mxu0 0.0
    %1519 = vmatprep.subr.mxu0 0.0
    %1520 = vmatpush1.msra.mxu0 0.0
    %1521 = vmatprep.subr.mxu0 0.0
    %1522 = vmatpush1.msra.mxu0 0.0
    %1523 = vmatprep.subr.mxu0 0.0
    %1524 = vmatpush1.msra.mxu0 0.0
    %1525 = vmatprep.subr.mxu0 0.0
    %1526 = vmatpush1.msra.mxu0 0.0
    %1527 = vmatprep.subr.mxu0 0.0
    %1528 = vmatpush1.msra.mxu0 0.0
    %1529 = vmatprep.subr.mxu0 0.0
    %1530 = vmatpush1.msra.mxu0 0.0
    %1531 = vmatprep.subr.mxu0 0.0
    %1532 = vmatpush1.msra.mxu0 0.0
    %1533 = vmatprep.subr.mxu0 %v1408
    %1534 = vmatpush1.msra.mxu0 %v1407
    %1535 = vmatprep.subr.mxu0 %v1406
    %1536 = vmatpush1.msra.mxu0 %v1405
    %1537 = vmatprep.subr.mxu0 %v1404
    %1538 = vmatpush1.msra.mxu0 %v1403
    %1539 = vmatprep.subr.mxu0 %v1402
    %1540 = vmatpush1.msra.mxu0 %v1401
    %1541 = vmatprep.subr.mxu0 %v1400
    %1542 = vmatpush1.msra.mxu0 %v1399
    %1543 = vmatprep.subr.mxu0 %v1398
    %1544 = vmatpush1.msra.mxu0 %v1397
    %1545 = vmatprep.subr.mxu0 %v1396
    %1546 = vmatpush1.msra.mxu0 %v1395
    %1547 = vmatprep.subr.mxu0 %v1394
    %1548 = vmatpush1.msra.mxu0 %v1393
    %1549 = vmatprep.subr.mxu0 0.0
    %1550 = vmatpush2.msra.mxu0 0.0
    %1551 = vmatprep.subr.mxu0 0.0
    %1552 = vmatpush2.msra.mxu0 0.0
    %1553 = vmatprep.subr.mxu0 0.0
    %1554 = vmatpush2.msra.mxu0 0.0
    %1555 = vmatprep.subr.mxu0 0.0
    %1556 = vmatpush2.msra.mxu0 0.0
    %1557 = vmatprep.subr.mxu0 0.0
    %1558 = vmatpush2.msra.mxu0 0.0
    %1559 = vmatprep.subr.mxu0 0.0
    %1560 = vmatpush2.msra.mxu0 0.0
    %1561 = vmatprep.subr.mxu0 0.0
    %1562 = vmatpush2.msra.mxu0 0.0
    %1563 = vmatprep.subr.mxu0 0.0
    %1564 = vmatpush2.msra.mxu0 0.0
    %1565 = vmatprep.subr.mxu0 0.0
    %1566 = vmatpush2.msra.mxu0 0.0
    %1567 = vmatprep.subr.mxu0 0.0
    %1568 = vmatpush2.msra.mxu0 0.0
    %1569 = vmatprep.subr.mxu0 0.0
    %1570 = vmatpush2.msra.mxu0 0.0
    %1571 = vmatprep.subr.mxu0 0.0
    %1572 = vmatpush2.msra.mxu0 0.0
    %1573 = vmatprep.subr.mxu0 0.0
    %1574 = vmatpush2.msra.mxu0 0.0
    %1575 = vmatprep.subr.mxu0 0.0
    %1576 = vmatpush2.msra.mxu0 0.0
    %1577 = vmatprep.subr.mxu0 0.0
    %1578 = vmatpush2.msra.mxu0 0.0
    %1579 = vmatprep.subr.mxu0 0.0
    %1580 = vmatpush2.msra.mxu0 0.0
    %1581 = vmatprep.mubr.f32.mxu0 0.0
    %1582 = vmatmul.mubr.f32.gmra.mxu0 %v1515
    %v1583 = vpop.f32.mrf.mxu0
    %v1584 = vadd.f32 0.0, %v1583
    %v1585 = vpop.f32.mrf.mxu0
    %v1586 = vadd.f32 0.0, %v1585
    %1587 = vdwg.mxu0
    %v1588 = vrot.slane %v1389, 2
    %v1589 = vrot.slane %v1391, 2
    %v1592 = vsel %vm343, %v1383, %v1588
    %v1593 = vsel %vm344, %v1385, %v1589
    %v1596 = vrot.slane %v1584, 6
    %v1597 = vrot.slane %v1586, 6
    %v1600 = vadd.f32 %v1592, %v1596
    %v1601 = vadd.f32 %v1593, %v1597
    %v1602 = vxor.u32 %v1600, 2147483648
    %v1603 = vmul.f32 %v1602, 1.442695
    %v1604 = vpow.pop %v1603
    %v1605 = vadd.f32 %v1604, 1.0
    %v1606 = vrcp.pop %v1605
    %v1607 = vmul.f32 1.0, %v1606
    %v1608 = vtanh.pop %v1601
    %v1609 = vxor.u32 %v1601, 2147483648
    %v1610 = vmul.f32 %v1609, 1.442695
    %v1611 = vpow.pop %v1610
    %v1612 = vadd.f32 %v1611, 1.0
    %v1613 = vrcp.pop %v1612
    %v1614 = vmul.f32 1.0, %v1613
    %v1616 = vrot.slane %v1509, 6
    %v1618 = vmul.f32 %v1607, %v1616
    %v1619 = vmul.f32 %v1607, %v1608
    %1621 = vrot.lane.b32.xlu0 %v1619, 64
    %v1622 = vpop.permute.xlu0 %1621
    %v1624 = vadd.f32 %v1618, %v1622
    %v1625 = vtanh.pop %v1624
    %v1626 = vmul.f32 %v1614, %v1625
    %v1628 = vrot.slane %v1626, 2
    %1629 = vrot.lane.b32.xlu0 %v1628, 64
    %v1630 = vpop.permute.xlu0 %1629
    %v1631 = vsel %vm346, %v1630, 0
    %1633 = vmatprep.subr.mxu0 0.0
    %1634 = vmatpush1.msra.mxu0 0.0
    %1635 = vmatprep.subr.mxu0 0.0
    %1636 = vmatpush1.msra.mxu0 0.0
    %1637 = vmatprep.subr.mxu0 0.0
    %1638 = vmatpush1.msra.mxu0 0.0
    %1639 = vmatprep.subr.mxu0 0.0
    %1640 = vmatpush1.msra.mxu0 0.0
    %1641 = vmatprep.subr.mxu0 0.0
    %1642 = vmatpush1.msra.mxu0 0.0
    %1643 = vmatprep.subr.mxu0 0.0
    %1644 = vmatpush1.msra.mxu0 0.0
    %1645 = vmatprep.subr.mxu0 0.0
    %1646 = vmatpush1.msra.mxu0 0.0
    %1647 = vmatprep.subr.mxu0 0.0
    %1648 = vmatpush1.msra.mxu0 0.0
    %1649 = vmatprep.subr.mxu0 %v1408
    %1650 = vmatpush1.msra.mxu0 %v1407
    %1651 = vmatprep.subr.mxu0 %v1406
    %1652 = vmatpush1.msra.mxu0 %v1405
    %1653 = vmatprep.subr.mxu0 %v1404
    %1654 = vmatpush1.msra.mxu0 %v1403
    %1655 = vmatprep.subr.mxu0 %v1402
    %1656 = vmatpush1.msra.mxu0 %v1401
    %1657 = vmatprep.subr.mxu0 %v1400
    %1658 = vmatpush1.msra.mxu0 %v1399
    %1659 = vmatprep.subr.mxu0 %v1398
    %1660 = vmatpush1.msra.mxu0 %v1397
    %1661 = vmatprep.subr.mxu0 %v1396
    %1662 = vmatpush1.msra.mxu0 %v1395
    %1663 = vmatprep.subr.mxu0 %v1394
    %1664 = vmatpush1.msra.mxu0 %v1393
    %1665 = vmatprep.subr.mxu0 0.0
    %1666 = vmatpush2.msra.mxu0 0.0
    %1667 = vmatprep.subr.mxu0 0.0
    %1668 = vmatpush2.msra.mxu0 0.0
    %1669 = vmatprep.subr.mxu0 0.0
    %1670 = vmatpush2.msra.mxu0 0.0
    %1671 = vmatprep.subr.mxu0 0.0
    %1672 = vmatpush2.msra.mxu0 0.0
    %1673 = vmatprep.subr.mxu0 0.0
    %1674 = vmatpush2.msra.mxu0 0.0
    %1675 = vmatprep.subr.mxu0 0.0
    %1676 = vmatpush2.msra.mxu0 0.0
    %1677 = vmatprep.subr.mxu0 0.0
    %1678 = vmatpush2.msra.mxu0 0.0
    %1679 = vmatprep.subr.mxu0 0.0
    %1680 = vmatpush2.msra.mxu0 0.0
    %1681 = vmatprep.subr.mxu0 0.0
    %1682 = vmatpush2.msra.mxu0 0.0
    %1683 = vmatprep.subr.mxu0 0.0
    %1684 = vmatpush2.msra.mxu0 0.0
    %1685 = vmatprep.subr.mxu0 0.0
    %1686 = vmatpush2.msra.mxu0 0.0
    %1687 = vmatprep.subr.mxu0 0.0
    %1688 = vmatpush2.msra.mxu0 0.0
    %1689 = vmatprep.subr.mxu0 0.0
    %1690 = vmatpush2.msra.mxu0 0.0
    %1691 = vmatprep.subr.mxu0 0.0
    %1692 = vmatpush2.msra.mxu0 0.0
    %1693 = vmatprep.subr.mxu0 0.0
    %1694 = vmatpush2.msra.mxu0 0.0
    %1695 = vmatprep.subr.mxu0 0.0
    %1696 = vmatpush2.msra.mxu0 0.0
    %1697 = vmatprep.mubr.f32.mxu0 0.0
    %1698 = vmatmul.mubr.f32.gmra.mxu0 %v1631
    %v1699 = vpop.f32.mrf.mxu0
    %v1700 = vadd.f32 0.0, %v1699
    %v1701 = vpop.f32.mrf.mxu0
    %v1702 = vadd.f32 0.0, %v1701
    %1703 = vdwg.mxu0
    %v1706 = vrot.slane %v1700, 4
    %v1707 = vrot.slane %v1702, 4
    %v1710 = vadd.f32 %v1486, %v1706
    %v1711 = vadd.f32 %v1487, %v1707
    %v1712 = vxor.u32 %v1710, 2147483648
    %v1713 = vmul.f32 %v1712, 1.442695
    %v1714 = vpow.pop %v1713
    %v1715 = vadd.f32 %v1714, 1.0
    %v1716 = vrcp.pop %v1715
    %v1717 = vmul.f32 1.0, %v1716
    %v1718 = vtanh.pop %v1711
    %v1719 = vxor.u32 %v1711, 2147483648
    %v1720 = vmul.f32 %v1719, 1.442695
    %v1721 = vpow.pop %v1720
    %v1722 = vadd.f32 %v1721, 1.0
    %v1723 = vrcp.pop %v1722
    %v1724 = vmul.f32 1.0, %v1723
    %v1726 = vrot.slane %v1624, 6
    %v1728 = vmul.f32 %v1717, %v1726
    %v1729 = vmul.f32 %v1717, %v1718
    %1731 = vrot.lane.b32.xlu0 %v1729, 64
    %v1732 = vpop.permute.xlu0 %1731
    %v1734 = vadd.f32 %v1728, %v1732
    %v1735 = vtanh.pop %v1734
    %v1736 = vmul.f32 %v1724, %v1735
    %v1738 = vrot.slane %v1736, 4
    %1739 = vrot.lane.b32.xlu0 %v1738, 64
    %v1740 = vpop.permute.xlu0 %1739
    %v1741 = vsel %vm346, %v1740, 0
    %1743 = vmatprep.subr.mxu0 0.0
    %1744 = vmatpush1.msra.mxu0 0.0
    %1745 = vmatprep.subr.mxu0 0.0
    %1746 = vmatpush1.msra.mxu0 0.0
    %1747 = vmatprep.subr.mxu0 0.0
    %1748 = vmatpush1.msra.mxu0 0.0
    %1749 = vmatprep.subr.mxu0 0.0
    %1750 = vmatpush1.msra.mxu0 0.0
    %1751 = vmatprep.subr.mxu0 0.0
    %1752 = vmatpush1.msra.mxu0 0.0
    %1753 = vmatprep.subr.mxu0 0.0
    %1754 = vmatpush1.msra.mxu0 0.0
    %1755 = vmatprep.subr.mxu0 0.0
    %1756 = vmatpush1.msra.mxu0 0.0
    %1757 = vmatprep.subr.mxu0 0.0
    %1758 = vmatpush1.msra.mxu0 0.0
    %1759 = vmatprep.subr.mxu0 %v1408
    %1760 = vmatpush1.msra.mxu0 %v1407
    %1761 = vmatprep.subr.mxu0 %v1406
    %1762 = vmatpush1.msra.mxu0 %v1405
    %1763 = vmatprep.subr.mxu0 %v1404
    %1764 = vmatpush1.msra.mxu0 %v1403
    %1765 = vmatprep.subr.mxu0 %v1402
    %1766 = vmatpush1.msra.mxu0 %v1401
    %1767 = vmatprep.subr.mxu0 %v1400
    %1768 = vmatpush1.msra.mxu0 %v1399
    %1769 = vmatprep.subr.mxu0 %v1398
    %1770 = vmatpush1.msra.mxu0 %v1397
    %1771 = vmatprep.subr.mxu0 %v1396
    %1772 = vmatpush1.msra.mxu0 %v1395
    %1773 = vmatprep.subr.mxu0 %v1394
    %1774 = vmatpush1.msra.mxu0 %v1393
    %1775 = vmatprep.subr.mxu0 0.0
    %1776 = vmatpush2.msra.mxu0 0.0
    %1777 = vmatprep.subr.mxu0 0.0
    %1778 = vmatpush2.msra.mxu0 0.0
    %1779 = vmatprep.subr.mxu0 0.0
    %1780 = vmatpush2.msra.mxu0 0.0
    %1781 = vmatprep.subr.mxu0 0.0
    %1782 = vmatpush2.msra.mxu0 0.0
    %1783 = vmatprep.subr.mxu0 0.0
    %1784 = vmatpush2.msra.mxu0 0.0
    %1785 = vmatprep.subr.mxu0 0.0
    %1786 = vmatpush2.msra.mxu0 0.0
    %1787 = vmatprep.subr.mxu0 0.0
    %1788 = vmatpush2.msra.mxu0 0.0
    %1789 = vmatprep.subr.mxu0 0.0
    %1790 = vmatpush2.msra.mxu0 0.0
    %1791 = vmatprep.subr.mxu0 0.0
    %1792 = vmatpush2.msra.mxu0 0.0
    %1793 = vmatprep.subr.mxu0 0.0
    %1794 = vmatpush2.msra.mxu0 0.0
    %1795 = vmatprep.subr.mxu0 0.0
    %1796 = vmatpush2.msra.mxu0 0.0
    %1797 = vmatprep.subr.mxu0 0.0
    %1798 = vmatpush2.msra.mxu0 0.0
    %1799 = vmatprep.subr.mxu0 0.0
    %1800 = vmatpush2.msra.mxu0 0.0
    %1801 = vmatprep.subr.mxu0 0.0
    %1802 = vmatpush2.msra.mxu0 0.0
    %1803 = vmatprep.subr.mxu0 0.0
    %1804 = vmatpush2.msra.mxu0 0.0
    %1805 = vmatprep.subr.mxu0 0.0
    %1806 = vmatpush2.msra.mxu0 0.0
    %1807 = vmatprep.mubr.f32.mxu0 0.0
    %1808 = vmatmul.mubr.f32.gmra.mxu0 %v1741
    %v1809 = vpop.f32.mrf.mxu0
    %v1810 = vadd.f32 0.0, %v1809
    %v1811 = vpop.f32.mrf.mxu0
    %v1812 = vadd.f32 0.0, %v1811
    %1813 = vdwg.mxu0
    %v1816 = vrot.slane %v1810, 2
    %v1817 = vrot.slane %v1812, 2
    %v1820 = vadd.f32 %v1592, %v1816
    %v1821 = vadd.f32 %v1593, %v1817
    %v1822 = vxor.u32 %v1820, 2147483648
    %v1823 = vmul.f32 %v1822, 1.442695
    %v1824 = vpow.pop %v1823
    %v1825 = vadd.f32 %v1824, 1.0
    %v1826 = vrcp.pop %v1825
    %v1827 = vmul.f32 1.0, %v1826
    %v1828 = vtanh.pop %v1821
    %v1829 = vxor.u32 %v1821, 2147483648
    %v1830 = vmul.f32 %v1829, 1.442695
    %v1831 = vpow.pop %v1830
    %v1832 = vadd.f32 %v1831, 1.0
    %v1833 = vrcp.pop %v1832
    %v1834 = vmul.f32 1.0, %v1833
    %v1836 = vrot.slane %v1734, 6
    %v1838 = vmul.f32 %v1827, %v1836
    %v1839 = vmul.f32 %v1827, %v1828
    %1841 = vrot.lane.b32.xlu0 %v1839, 64
    %v1842 = vpop.permute.xlu0 %1841
    %v1844 = vadd.f32 %v1838, %v1842
    %v1845 = vtanh.pop %v1844
    %v1846 = vmul.f32 %v1834, %v1845
    %v1848 = vrot.slane %v1846, 6
    %1849 = vrot.lane.b32.xlu0 %v1848, 64
    %v1850 = vpop.permute.xlu0 %1849
    %v1851 = vsel %vm346, %v1850, 0
    %1853 = vmatprep.subr.mxu0 0.0
    %1854 = vmatpush1.msra.mxu0 0.0
    %1855 = vmatprep.subr.mxu0 0.0
    %1856 = vmatpush1.msra.mxu0 0.0
    %1857 = vmatprep.subr.mxu0 0.0
    %1858 = vmatpush1.msra.mxu0 0.0
    %1859 = vmatprep.subr.mxu0 0.0
    %1860 = vmatpush1.msra.mxu0 0.0
    %1861 = vmatprep.subr.mxu0 0.0
    %1862 = vmatpush1.msra.mxu0 0.0
    %1863 = vmatprep.subr.mxu0 0.0
    %1864 = vmatpush1.msra.mxu0 0.0
    %1865 = vmatprep.subr.mxu0 0.0
    %1866 = vmatpush1.msra.mxu0 0.0
    %1867 = vmatprep.subr.mxu0 0.0
    %1868 = vmatpush1.msra.mxu0 0.0
    %1869 = vmatprep.subr.mxu0 %v1408
    %1870 = vmatpush1.msra.mxu0 %v1407
    %1871 = vmatprep.subr.mxu0 %v1406
    %1872 = vmatpush1.msra.mxu0 %v1405
    %1873 = vmatprep.subr.mxu0 %v1404
    %1874 = vmatpush1.msra.mxu0 %v1403
    %1875 = vmatprep.subr.mxu0 %v1402
    %1876 = vmatpush1.msra.mxu0 %v1401
    %1877 = vmatprep.subr.mxu0 %v1400
    %1878 = vmatpush1.msra.mxu0 %v1399
    %1879 = vmatprep.subr.mxu0 %v1398
    %1880 = vmatpush1.msra.mxu0 %v1397
    %1881 = vmatprep.subr.mxu0 %v1396
    %1882 = vmatpush1.msra.mxu0 %v1395
    %1883 = vmatprep.subr.mxu0 %v1394
    %1884 = vmatpush1.msra.mxu0 %v1393
    %1885 = vmatprep.subr.mxu0 0.0
    %1886 = vmatpush2.msra.mxu0 0.0
    %1887 = vmatprep.subr.mxu0 0.0
    %1888 = vmatpush2.msra.mxu0 0.0
    %1889 = vmatprep.subr.mxu0 0.0
    %1890 = vmatpush2.msra.mxu0 0.0
    %1891 = vmatprep.subr.mxu0 0.0
    %1892 = vmatpush2.msra.mxu0 0.0
    %1893 = vmatprep.subr.mxu0 0.0
    %1894 = vmatpush2.msra.mxu0 0.0
    %1895 = vmatprep.subr.mxu0 0.0
    %1896 = vmatpush2.msra.mxu0 0.0
    %1897 = vmatprep.subr.mxu0 0.0
    %1898 = vmatpush2.msra.mxu0 0.0
    %1899 = vmatprep.subr.mxu0 0.0
    %1900 = vmatpush2.msra.mxu0 0.0
    %1901 = vmatprep.subr.mxu0 0.0
    %1902 = vmatpush2.msra.mxu0 0.0
    %1903 = vmatprep.subr.mxu0 0.0
    %1904 = vmatpush2.msra.mxu0 0.0
    %1905 = vmatprep.subr.mxu0 0.0
    %1906 = vmatpush2.msra.mxu0 0.0
    %1907 = vmatprep.subr.mxu0 0.0
    %1908 = vmatpush2.msra.mxu0 0.0
    %1909 = vmatprep.subr.mxu0 0.0
    %1910 = vmatpush2.msra.mxu0 0.0
    %1911 = vmatprep.subr.mxu0 0.0
    %1912 = vmatpush2.msra.mxu0 0.0
    %1913 = vmatprep.subr.mxu0 0.0
    %1914 = vmatpush2.msra.mxu0 0.0
    %1915 = vmatprep.subr.mxu0 0.0
    %1916 = vmatpush2.msra.mxu0 0.0
    %1917 = vmatprep.mubr.f32.mxu0 0.0
    %1918 = vmatmul.mubr.f32.gmra.mxu0 %v1851
    %v1919 = vpop.f32.mrf.mxu0
    %v1920 = vadd.f32 0.0, %v1919
    %v1921 = vpop.f32.mrf.mxu0
    %v1922 = vadd.f32 0.0, %v1921
    %1923 = vdwg.mxu0
    %v1926 = vrot.slane %v1383, 6
    %v1927 = vrot.slane %v1385, 6
    %v1930 = vsel %vm343, %v1389, %v1926
    %v1931 = vsel %vm344, %v1391, %v1927
    %v1932 = vadd.f32 %v1930, %v1920
    %v1933 = vadd.f32 %v1931, %v1922
    %v1934 = vxor.u32 %v1932, 2147483648
    %v1935 = vmul.f32 %v1934, 1.442695
    %v1936 = vpow.pop %v1935
    %v1937 = vadd.f32 %v1936, 1.0
    %v1938 = vrcp.pop %v1937
    %v1939 = vmul.f32 1.0, %v1938
    %v1940 = vtanh.pop %v1933
    %v1941 = vxor.u32 %v1933, 2147483648
    %v1942 = vmul.f32 %v1941, 1.442695
    %v1943 = vpow.pop %v1942
    %v1944 = vadd.f32 %v1943, 1.0
    %v1945 = vrcp.pop %v1944
    %v1946 = vmul.f32 1.0, %v1945
    %v1948 = vrot.slane %v1844, 6
    %v1950 = vmul.f32 %v1939, %v1948
    %v1951 = vmul.f32 %v1939, %v1940
    %1953 = vrot.lane.b32.xlu0 %v1951, 64
    %v1954 = vpop.permute.xlu0 %1953
    %v1956 = vadd.f32 %v1950, %v1954
    %v1957 = vtanh.pop %v1956
    %v1958 = vmul.f32 %v1946, %v1957
    %1960 = vrot.lane.b32.xlu0 %v1958, 64
    %v1961 = vpop.permute.xlu0 %1960
    %v1962 = vsel %vm346, %v1961, 0
    %1964 = vmatprep.subr.mxu0 0.0
    %1965 = vmatpush1.msra.mxu0 0.0
    %1966 = vmatprep.subr.mxu0 0.0
    %1967 = vmatpush1.msra.mxu0 0.0
    %1968 = vmatprep.subr.mxu0 0.0
    %1969 = vmatpush1.msra.mxu0 0.0
    %1970 = vmatprep.subr.mxu0 0.0
    %1971 = vmatpush1.msra.mxu0 0.0
    %1972 = vmatprep.subr.mxu0 0.0
    %1973 = vmatpush1.msra.mxu0 0.0
    %1974 = vmatprep.subr.mxu0 0.0
    %1975 = vmatpush1.msra.mxu0 0.0
    %1976 = vmatprep.subr.mxu0 0.0
    %1977 = vmatpush1.msra.mxu0 0.0
    %1978 = vmatprep.subr.mxu0 0.0
    %1979 = vmatpush1.msra.mxu0 0.0
    %1980 = vmatprep.subr.mxu0 %v1408
    %1981 = vmatpush1.msra.mxu0 %v1407
    %1982 = vmatprep.subr.mxu0 %v1406
    %1983 = vmatpush1.msra.mxu0 %v1405
    %1984 = vmatprep.subr.mxu0 %v1404
    %1985 = vmatpush1.msra.mxu0 %v1403
    %1986 = vmatprep.subr.mxu0 %v1402
    %1987 = vmatpush1.msra.mxu0 %v1401
    %1988 = vmatprep.subr.mxu0 %v1400
    %1989 = vmatpush1.msra.mxu0 %v1399
    %1990 = vmatprep.subr.mxu0 %v1398
    %1991 = vmatpush1.msra.mxu0 %v1397
    %1992 = vmatprep.subr.mxu0 %v1396
    %1993 = vmatpush1.msra.mxu0 %v1395
    %1994 = vmatprep.subr.mxu0 %v1394
    %1995 = vmatpush1.msra.mxu0 %v1393
    %1996 = vmatprep.subr.mxu0 0.0
    %1997 = vmatpush2.msra.mxu0 0.0
    %1998 = vmatprep.subr.mxu0 0.0
    %1999 = vmatpush2.msra.mxu0 0.0
    %2000 = vmatprep.subr.mxu0 0.0
    %2001 = vmatpush2.msra.mxu0 0.0
    %2002 = vmatprep.subr.mxu0 0.0
    %2003 = vmatpush2.msra.mxu0 0.0
    %2004 = vmatprep.subr.mxu0 0.0
    %2005 = vmatpush2.msra.mxu0 0.0
    %2006 = vmatprep.subr.mxu0 0.0
    %2007 = vmatpush2.msra.mxu0 0.0
    %2008 = vmatprep.subr.mxu0 0.0
    %2009 = vmatpush2.msra.mxu0 0.0
    %2010 = vmatprep.subr.mxu0 0.0
    %2011 = vmatpush2.msra.mxu0 0.0
    %2012 = vmatprep.subr.mxu0 0.0
    %2013 = vmatpush2.msra.mxu0 0.0
    %2014 = vmatprep.subr.mxu0 0.0
    %2015 = vmatpush2.msra.mxu0 0.0
    %2016 = vmatprep.subr.mxu0 0.0
    %2017 = vmatpush2.msra.mxu0 0.0
    %2018 = vmatprep.subr.mxu0 0.0
    %2019 = vmatpush2.msra.mxu0 0.0
    %2020 = vmatprep.subr.mxu0 0.0
    %2021 = vmatpush2.msra.mxu0 0.0
    %2022 = vmatprep.subr.mxu0 0.0
    %2023 = vmatpush2.msra.mxu0 0.0
    %2024 = vmatprep.subr.mxu0 0.0
    %2025 = vmatpush2.msra.mxu0 0.0
    %2026 = vmatprep.subr.mxu0 0.0
    %2027 = vmatpush2.msra.mxu0 0.0
    %2028 = vmatprep.mubr.f32.mxu0 0.0
    %2029 = vmatmul.mubr.f32.gmra.mxu0 %v1962
    %v2030 = vpop.f32.mrf.mxu0
    %v2031 = vadd.f32 0.0, %v2030
    %v2032 = vpop.f32.mrf.mxu0
    %v2033 = vadd.f32 0.0, %v2032
    %2034 = vdwg.mxu0
    %v2035 = vrot.slane %v1383, 2
    %v2036 = vrot.slane %v1385, 2
    %v2039 = vsel %vm343, %v1389, %v2035
    %v2040 = vsel %vm344, %v1391, %v2036
    %v2043 = vrot.slane %v2031, 6
    %v2044 = vrot.slane %v2033, 6
    %v2047 = vadd.f32 %v2039, %v2043
    %v2048 = vadd.f32 %v2040, %v2044
    %v2049 = vxor.u32 %v2047, 2147483648
    %v2050 = vmul.f32 %v2049, 1.442695
    %v2051 = vpow.pop %v2050
    %v2052 = vadd.f32 %v2051, 1.0
    %v2053 = vrcp.pop %v2052
    %v2054 = vmul.f32 1.0, %v2053
    %v2055 = vtanh.pop %v2048
    %v2056 = vxor.u32 %v2048, 2147483648
    %v2057 = vmul.f32 %v2056, 1.442695
    %v2058 = vpow.pop %v2057
    %v2059 = vadd.f32 %v2058, 1.0
    %v2060 = vrcp.pop %v2059
    %v2061 = vmul.f32 1.0, %v2060
    %v2063 = vrot.slane %v1956, 6
    %v2065 = vmul.f32 %v2054, %v2063
    %v2066 = vmul.f32 %v2054, %v2055
    %2068 = vrot.lane.b32.xlu0 %v2066, 64
    %v2069 = vpop.permute.xlu0 %2068
    %v2071 = vadd.f32 %v2065, %v2069
    %v2072 = vtanh.pop %v2071
    %v2073 = vmul.f32 %v2061, %v2072
    %v2075 = vrot.slane %v2073, 2
    %2076 = vrot.lane.b32.xlu0 %v2075, 64
    %v2077 = vpop.permute.xlu0 %2076
    %v2078 = vsel %vm346, %v2077, 0
    %2080 = vmatprep.subr.mxu0 0.0
    %2081 = vmatpush1.msra.mxu0 0.0
    %2082 = vmatprep.subr.mxu0 0.0
    %2083 = vmatpush1.msra.mxu0 0.0
    %2084 = vmatprep.subr.mxu0 0.0
    %2085 = vmatpush1.msra.mxu0 0.0
    %2086 = vmatprep.subr.mxu0 0.0
    %2087 = vmatpush1.msra.mxu0 0.0
    %2088 = vmatprep.subr.mxu0 0.0
    %2089 = vmatpush1.msra.mxu0 0.0
    %2090 = vmatprep.subr.mxu0 0.0
    %2091 = vmatpush1.msra.mxu0 0.0
    %2092 = vmatprep.subr.mxu0 0.0
    %2093 = vmatpush1.msra.mxu0 0.0
    %2094 = vmatprep.subr.mxu0 0.0
    %2095 = vmatpush1.msra.mxu0 0.0
    %2096 = vmatprep.subr.mxu0 %v1408
    %2097 = vmatpush1.msra.mxu0 %v1407
    %2098 = vmatprep.subr.mxu0 %v1406
    %2099 = vmatpush1.msra.mxu0 %v1405
    %2100 = vmatprep.subr.mxu0 %v1404
    %2101 = vmatpush1.msra.mxu0 %v1403
    %2102 = vmatprep.subr.mxu0 %v1402
    %2103 = vmatpush1.msra.mxu0 %v1401
    %2104 = vmatprep.subr.mxu0 %v1400
    %2105 = vmatpush1.msra.mxu0 %v1399
    %2106 = vmatprep.subr.mxu0 %v1398
    %2107 = vmatpush1.msra.mxu0 %v1397
    %2108 = vmatprep.subr.mxu0 %v1396
    %2109 = vmatpush1.msra.mxu0 %v1395
    %2110 = vmatprep.subr.mxu0 %v1394
    %2111 = vmatpush1.msra.mxu0 %v1393
    %2112 = vmatprep.subr.mxu0 0.0
    %2113 = vmatpush2.msra.mxu0 0.0
    %2114 = vmatprep.subr.mxu0 0.0
    %2115 = vmatpush2.msra.mxu0 0.0
    %2116 = vmatprep.subr.mxu0 0.0
    %2117 = vmatpush2.msra.mxu0 0.0
    %2118 = vmatprep.subr.mxu0 0.0
    %2119 = vmatpush2.msra.mxu0 0.0
    %2120 = vmatprep.subr.mxu0 0.0
    %2121 = vmatpush2.msra.mxu0 0.0
    %2122 = vmatprep.subr.mxu0 0.0
    %2123 = vmatpush2.msra.mxu0 0.0
    %2124 = vmatprep.subr.mxu0 0.0
    %2125 = vmatpush2.msra.mxu0 0.0
    %2126 = vmatprep.subr.mxu0 0.0
    %2127 = vmatpush2.msra.mxu0 0.0
    %2128 = vmatprep.subr.mxu0 0.0
    %2129 = vmatpush2.msra.mxu0 0.0
    %2130 = vmatprep.subr.mxu0 0.0
    %2131 = vmatpush2.msra.mxu0 0.0
    %2132 = vmatprep.subr.mxu0 0.0
    %2133 = vmatpush2.msra.mxu0 0.0
    %2134 = vmatprep.subr.mxu0 0.0
    %2135 = vmatpush2.msra.mxu0 0.0
    %2136 = vmatprep.subr.mxu0 0.0
    %2137 = vmatpush2.msra.mxu0 0.0
    %2138 = vmatprep.subr.mxu0 0.0
    %2139 = vmatpush2.msra.mxu0 0.0
    %2140 = vmatprep.subr.mxu0 0.0
    %2141 = vmatpush2.msra.mxu0 0.0
    %2142 = vmatprep.subr.mxu0 0.0
    %2143 = vmatpush2.msra.mxu0 0.0
    %2144 = vmatprep.mubr.f32.mxu0 0.0
    %2145 = vmatmul.mubr.f32.gmra.mxu0 %v2078
    %v2146 = vpop.f32.mrf.mxu0
    %v2147 = vadd.f32 0.0, %v2146
    %v2148 = vpop.f32.mrf.mxu0
    %v2149 = vadd.f32 0.0, %v2148
    %2150 = vdwg.mxu0
    %v2153 = vrot.slane %v2147, 4
    %v2154 = vrot.slane %v2149, 4
    %v2157 = vadd.f32 %v1930, %v2153
    %v2158 = vadd.f32 %v1931, %v2154
    %v2159 = vxor.u32 %v2157, 2147483648
    %v2160 = vmul.f32 %v2159, 1.442695
    %v2161 = vpow.pop %v2160
    %v2162 = vadd.f32 %v2161, 1.0
    %v2163 = vrcp.pop %v2162
    %v2164 = vmul.f32 1.0, %v2163
    %v2165 = vtanh.pop %v2158
    %v2166 = vxor.u32 %v2158, 2147483648
    %v2167 = vmul.f32 %v2166, 1.442695
    %v2168 = vpow.pop %v2167
    %v2169 = vadd.f32 %v2168, 1.0
    %v2170 = vrcp.pop %v2169
    %v2171 = vmul.f32 1.0, %v2170
    %v2173 = vrot.slane %v2071, 6
    %v2175 = vmul.f32 %v2164, %v2173
    %v2176 = vmul.f32 %v2164, %v2165
    %2178 = vrot.lane.b32.xlu0 %v2176, 64
    %v2179 = vpop.permute.xlu0 %2178
    %v2181 = vadd.f32 %v2175, %v2179
    %v2182 = vtanh.pop %v2181
    %v2183 = vmul.f32 %v2171, %v2182
    %v2185 = vrot.slane %v2183, 4
    %2186 = vrot.lane.b32.xlu0 %v2185, 64
    %v2187 = vpop.permute.xlu0 %2186
    %v2188 = vsel %vm346, %v2187, 0
    %2190 = vmatprep.subr.mxu0 0.0
    %2191 = vmatpush1.msra.mxu0 0.0
    %2192 = vmatprep.subr.mxu0 0.0
    %2193 = vmatpush1.msra.mxu0 0.0
    %2194 = vmatprep.subr.mxu0 0.0
    %2195 = vmatpush1.msra.mxu0 0.0
    %2196 = vmatprep.subr.mxu0 0.0
    %2197 = vmatpush1.msra.mxu0 0.0
    %2198 = vmatprep.subr.mxu0 0.0
    %2199 = vmatpush1.msra.mxu0 0.0
    %2200 = vmatprep.subr.mxu0 0.0
    %2201 = vmatpush1.msra.mxu0 0.0
    %2202 = vmatprep.subr.mxu0 0.0
    %2203 = vmatpush1.msra.mxu0 0.0
    %2204 = vmatprep.subr.mxu0 0.0
    %2205 = vmatpush1.msra.mxu0 0.0
    %2206 = vmatprep.subr.mxu0 %v1408
    %2207 = vmatpush1.msra.mxu0 %v1407
    %2208 = vmatprep.subr.mxu0 %v1406
    %2209 = vmatpush1.msra.mxu0 %v1405
    %2210 = vmatprep.subr.mxu0 %v1404
    %2211 = vmatpush1.msra.mxu0 %v1403
    %2212 = vmatprep.subr.mxu0 %v1402
    %2213 = vmatpush1.msra.mxu0 %v1401
    %2214 = vmatprep.subr.mxu0 %v1400
    %2215 = vmatpush1.msra.mxu0 %v1399
    %2216 = vmatprep.subr.mxu0 %v1398
    %2217 = vmatpush1.msra.mxu0 %v1397
    %2218 = vmatprep.subr.mxu0 %v1396
    %2219 = vmatpush1.msra.mxu0 %v1395
    %2220 = vmatprep.subr.mxu0 %v1394
    %2221 = vmatpush1.msra.mxu0 %v1393
    %2222 = vmatprep.subr.mxu0 0.0
    %2223 = vmatpush2.msra.mxu0 0.0
    %2224 = vmatprep.subr.mxu0 0.0
    %2225 = vmatpush2.msra.mxu0 0.0
    %2226 = vmatprep.subr.mxu0 0.0
    %2227 = vmatpush2.msra.mxu0 0.0
    %2228 = vmatprep.subr.mxu0 0.0
    %2229 = vmatpush2.msra.mxu0 0.0
    %2230 = vmatprep.subr.mxu0 0.0
    %2231 = vmatpush2.msra.mxu0 0.0
    %2232 = vmatprep.subr.mxu0 0.0
    %2233 = vmatpush2.msra.mxu0 0.0
    %2234 = vmatprep.subr.mxu0 0.0
    %2235 = vmatpush2.msra.mxu0 0.0
    %2236 = vmatprep.subr.mxu0 0.0
    %2237 = vmatpush2.msra.mxu0 0.0
    %2238 = vmatprep.subr.mxu0 0.0
    %2239 = vmatpush2.msra.mxu0 0.0
    %2240 = vmatprep.subr.mxu0 0.0
    %2241 = vmatpush2.msra.mxu0 0.0
    %2242 = vmatprep.subr.mxu0 0.0
    %2243 = vmatpush2.msra.mxu0 0.0
    %2244 = vmatprep.subr.mxu0 0.0
    %2245 = vmatpush2.msra.mxu0 0.0
    %2246 = vmatprep.subr.mxu0 0.0
    %2247 = vmatpush2.msra.mxu0 0.0
    %2248 = vmatprep.subr.mxu0 0.0
    %2249 = vmatpush2.msra.mxu0 0.0
    %2250 = vmatprep.subr.mxu0 0.0
    %2251 = vmatpush2.msra.mxu0 0.0
    %2252 = vmatprep.subr.mxu0 0.0
    %2253 = vmatpush2.msra.mxu0 0.0
    %2254 = vmatprep.mubr.f32.mxu0 0.0
    %2255 = vmatmul.mubr.f32.gmra.mxu0 %v2188
    %v2256 = vpop.f32.mrf.mxu0
    %v2257 = vadd.f32 0.0, %v2256
    %v2258 = vpop.f32.mrf.mxu0
    %v2259 = vadd.f32 0.0, %v2258
    %2260 = vdwg.mxu0
    %v2263 = vrot.slane %v2257, 2
    %v2264 = vrot.slane %v2259, 2
    %v2267 = vadd.f32 %v2039, %v2263
    %v2268 = vadd.f32 %v2040, %v2264
    %v2269 = vxor.u32 %v2267, 2147483648
    %v2270 = vmul.f32 %v2269, 1.442695
    %v2271 = vpow.pop %v2270
    %v2272 = vadd.f32 %v2271, 1.0
    %v2273 = vrcp.pop %v2272
    %v2274 = vmul.f32 1.0, %v2273
    %v2275 = vtanh.pop %v2268
    %v2276 = vxor.u32 %v2268, 2147483648
    %v2277 = vmul.f32 %v2276, 1.442695
    %v2278 = vpow.pop %v2277
    %v2279 = vadd.f32 %v2278, 1.0
    %v2280 = vrcp.pop %v2279
    %v2281 = vmul.f32 1.0, %v2280
    %v2283 = vrot.slane %v2181, 6
    %v2285 = vmul.f32 %v2274, %v2283
    %v2286 = vmul.f32 %v2274, %v2275
    %2288 = vrot.lane.b32.xlu0 %v2286, 64
    %v2289 = vpop.permute.xlu0 %2288
    %v2291 = vadd.f32 %v2285, %v2289
    %v2292 = vtanh.pop %v2291
    %v2293 = vmul.f32 %v2281, %v2292
    %v2296 = vrot.slane %v2293, 6
    %2297 = vrot.lane.b32.xlu0 %v2296, 64
    %v2298 = vpop.permute.xlu0 %2297
    %v2300 = vsel %vm345, %v1514, %v2298
    %v2303 = vsel %vm345, %v1630, %v2187
    %v2306 = vsel %vm345, %v1740, %v2077
    %v2309 = vsel %vm345, %v1850, %v1961
    %v2310 = vsel %vm345, %v1961, %v1850
    %v2311 = vsel %vm345, %v2077, %v1740
    %v2312 = vsel %vm345, %v2187, %v1630
    %v2313 = vsel %vm345, %v2298, %v1514
    %v2315 = vrot.slane %v2303, 6
    %v2318 = vrot.slane %v2306, 4
    %v2321 = vrot.slane %v2309, 2
    %v2324 = vrot.slane %v2311, 6
    %v2327 = vrot.slane %v2312, 4
    %v2330 = vrot.slane %v2313, 2
    %v2332 = vsel %vm1273, %v2300, %v2315
    %v2333 = vsel %vm1275, %v2332, %v2318
    %v2334 = vsel %vm1277, %v2333, %v2321
    %v2335 = vsel %vm1273, %v2310, %v2324
    %v2336 = vsel %vm1275, %v2335, %v2327
    %v2337 = vsel %vm1277, %v2336, %v2330
    %v2338 = vld [vmem:[#allocation8] sm:$0xff]
    %v2339 = vld [vmem:[#allocation8 + $0x8] sm:$0xff]
    %v2340 = vld [vmem:[#allocation8 + $0x10] sm:$0xff]
    %v2341 = vld [vmem:[#allocation8 + $0x18] sm:$0xff]
    %v2342 = vld [vmem:[#allocation8 + $0x20] sm:$0xff]
    %v2343 = vld [vmem:[#allocation8 + $0x28] sm:$0xff]
    %v2344 = vld [vmem:[#allocation8 + $0x30] sm:$0xff]
    %v2345 = vld [vmem:[#allocation8 + $0x38] sm:$0xff]
    %v2346 = vld [vmem:[%s9] sm:$0x1]
    %v2348 = vlaneseq
    %v2349 = vshrl.u32 %v2348, 7
    %v2350 = vsub.s32 0, %v2349
    %v2351 = vrot.slane %v2346, %v2350
    %v2354 = vsel %vm346, %v2334, 0
    %v2357 = vsel %vm346, %v2337, 0
    %2359 = vmatprep.subr.mxu0 0.0
    %2360 = vmatpush1.msra.mxu0 0.0
    %2361 = vmatprep.subr.mxu0 0.0
    %2362 = vmatpush1.msra.mxu0 0.0
    %2363 = vmatprep.subr.mxu0 0.0
    %2364 = vmatpush1.msra.mxu0 0.0
    %2365 = vmatprep.subr.mxu0 0.0
    %2366 = vmatpush1.msra.mxu0 0.0
    %2367 = vmatprep.subr.mxu0 0.0
    %2368 = vmatpush1.msra.mxu0 0.0
    %2369 = vmatprep.subr.mxu0 0.0
    %2370 = vmatpush1.msra.mxu0 0.0
    %2371 = vmatprep.subr.mxu0 0.0
    %2372 = vmatpush1.msra.mxu0 0.0
    %2373 = vmatprep.subr.mxu0 0.0
    %2374 = vmatpush1.msra.mxu0 0.0
    %2375 = vmatprep.subr.mxu0 0.0
    %2376 = vmatpush1.msra.mxu0 %v2345
    %2377 = vmatprep.subr.mxu0 0.0
    %2378 = vmatpush1.msra.mxu0 %v2344
    %2379 = vmatprep.subr.mxu0 0.0
    %2380 = vmatpush1.msra.mxu0 %v2343
    %2381 = vmatprep.subr.mxu0 0.0
    %2382 = vmatpush1.msra.mxu0 %v2342
    %2383 = vmatprep.subr.mxu0 0.0
    %2384 = vmatpush1.msra.mxu0 %v2341
    %2385 = vmatprep.subr.mxu0 0.0
    %2386 = vmatpush1.msra.mxu0 %v2340
    %2387 = vmatprep.subr.mxu0 0.0
    %2388 = vmatpush1.msra.mxu0 %v2339
    %2389 = vmatprep.subr.mxu0 0.0
    %2390 = vmatpush1.msra.mxu0 %v2338
    %2391 = vmatprep.subr.mxu0 0.0
    %2392 = vmatpush2.msra.mxu0 0.0
    %2393 = vmatprep.subr.mxu0 0.0
    %2394 = vmatpush2.msra.mxu0 0.0
    %2395 = vmatprep.subr.mxu0 0.0
    %2396 = vmatpush2.msra.mxu0 0.0
    %2397 = vmatprep.subr.mxu0 0.0
    %2398 = vmatpush2.msra.mxu0 0.0
    %2399 = vmatprep.subr.mxu0 0.0
    %2400 = vmatpush2.msra.mxu0 0.0
    %2401 = vmatprep.subr.mxu0 0.0
    %2402 = vmatpush2.msra.mxu0 0.0
    %2403 = vmatprep.subr.mxu0 0.0
    %2404 = vmatpush2.msra.mxu0 0.0
    %2405 = vmatprep.subr.mxu0 0.0
    %2406 = vmatpush2.msra.mxu0 0.0
    %2407 = vmatprep.subr.mxu0 0.0
    %2408 = vmatpush2.msra.mxu0 0.0
    %2409 = vmatprep.subr.mxu0 0.0
    %2410 = vmatpush2.msra.mxu0 0.0
    %2411 = vmatprep.subr.mxu0 0.0
    %2412 = vmatpush2.msra.mxu0 0.0
    %2413 = vmatprep.subr.mxu0 0.0
    %2414 = vmatpush2.msra.mxu0 0.0
    %2415 = vmatprep.subr.mxu0 0.0
    %2416 = vmatpush2.msra.mxu0 0.0
    %2417 = vmatprep.subr.mxu0 0.0
    %2418 = vmatpush2.msra.mxu0 0.0
    %2419 = vmatprep.subr.mxu0 0.0
    %2420 = vmatpush2.msra.mxu0 0.0
    %2421 = vmatprep.subr.mxu0 0.0
    %2422 = vmatpush2.msra.mxu0 0.0
    %2423 = vmatprep.mubr.f32.mxu0 0.0
    %2424 = vmatmul.mubr.f32.gmra.mxu0 %v2354
    %v2425 = vpop.f32.mrf.mxu0
    %v2426 = vadd.f32 %v2351, %v2425
    %v2427 = vpop.f32.mrf.mxu0
    %2428 = vmatprep.mubr.f32.mxu0 0.0
    %2429 = vmatmul.mubr.f32.gmra.mxu0 %v2357
    %v2430 = vpop.f32.mrf.mxu0
    %v2431 = vadd.f32 %v2351, %v2430
    %v2432 = vpop.f32.mrf.mxu0
    %2433 = vdwg.mxu0
    %2434 = vst [vmem:[#allocation10] sm:$0xff] %v2426
    %2435 = vst [vmem:[#allocation10 + $0x8] sm:$0xff] %v2431
    // Predicated region
    $region58: #{tpu_custom_call.1} parent=1 // pred_check
      _
    $region59: #{tpu_custom_call.1} parent=1 // pred_check_branch
      %2437 = sbr.rel (0) target = $region61
    $region60: #{tpu_custom_call.1} parent=1 // pred_region
      %s2439 = ssub.s32 256, 256
      %2440 = vsyncadd [#allocation4], %s2439
      %s2441 = sshll.u32 [#allocation10], 4
      %s2442 = int_to_ptr.vmem [resolvable:$true] %s2441
      %2447 = dma.vmem_to_hbm [thread:$0]  %s2442, 256, %s10, [#allocation4], 128, 128, 8
    $region61: #{tpu_custom_call.1} parent=1 // pred_fallthru
      _
    // Predicated region
    $region62: #{tpu_custom_call.1} parent=1 // pred_check
      _
    $region63: #{tpu_custom_call.1} parent=1 // pred_check_branch
      %2449 = sbr.rel (0) target = $region65
    $region64: #{tpu_custom_call.1} parent=1 // pred_region
      %2450 = dma.done [#allocation4], 256
    $region65: #{tpu_custom_call.1} parent=1 // pred_fallthru
      _
    %2451 = vsyncpa [#allocation3], 1
    %2452 = vsyncpa [#allocation6], 1
    %2453 = vsyncpa [#allocation9], 1
    %2454 = vsyncpa [#allocation4], 1

</llo_original>
